<compile_context>
chip_gen: v6e
topology: v6e:2x2x1
jax: 0.10.0
libtpu: 0.0.40
codegen_flags: <defaults>
</compile_context>

<pallas_src>
import functools

import jax
import jax.numpy as jnp
from jax.experimental import pallas as pl
from jax.experimental.pallas import tpu as pltpu


def _self_attention_kernel(x_ref, wqkv_ref, bqkv_ref, wo_ref, bo_ref, o_ref, *,
                           num_heads, head_dim, embed_dim):
    E = embed_dim
    x = x_ref[0].astype(jnp.float32)                          # (S, E)
    S = x.shape[0]

    # ---- LayerNorm statistics (eps=1e-5, biased variance), fp32.
    # The affine (gamma, beta) is folded into wqkv/bqkv by the wrapper.
    mean = jnp.mean(x, axis=-1, keepdims=True)
    var = jnp.mean((x - mean) ** 2, axis=-1, keepdims=True)
    xh = (x - mean) * jax.lax.rsqrt(var + 1e-5)

    # ---- Fused Q/K/V projection: one matmul against (E, 3E) weight.
    # gamma, beta and the 1/sqrt(head_dim) scale are pre-folded into
    # wqkv_ref / bqkv_ref, so this is the whole pre-attention pipeline.
    w_dtype = wqkv_ref.dtype
    qkv = (jnp.dot(xh.astype(w_dtype), wqkv_ref[...],
                   preferred_element_type=jnp.float32)
           + bqkv_ref[0].astype(jnp.float32))                 # (S, 3E) fp32

    q = qkv[:, :E]
    k = qkv[:, E:2 * E]
    v = qkv[:, 2 * E:]

    # ---- Heads as a batch axis: single batched matmul per phase ----
    q3 = q.reshape(S, num_heads, head_dim)
    k3 = k.reshape(S, num_heads, head_dim)
    v3 = v.reshape(S, num_heads, head_dim)

    s = jnp.einsum('qhd,khd->hqk', q3, k3,
                   preferred_element_type=jnp.float32)        # (H, S, S)
    s = s - jnp.max(s, axis=-1, keepdims=True)
    p = jnp.exp(s)
    p = p * pl.reciprocal(jnp.sum(p, axis=-1, keepdims=True), approx=True)

    ctx = jnp.einsum('hqk,khd->qhd', p.astype(w_dtype), v3.astype(w_dtype),
                     preferred_element_type=jnp.float32)      # (S, H, D)
    attn = ctx.reshape(S, E)                                  # (S, E)

    # ---- Output projection (with bias) ----
    out = (jnp.dot(attn.astype(w_dtype), wo_ref[...],
                   preferred_element_type=jnp.float32)
           + bo_ref[0].astype(jnp.float32))
    o_ref[0] = out.astype(o_ref.dtype)


def _fold_params(params, *, embed_dim, head_dim, matmul_dtype):
    """Fold LayerNorm affine + head-dim scale into the fused QKV weight/bias.

    xn = x_hat * gamma + beta ; qkv = xn @ Wqkv^T
        = x_hat @ (gamma[:, None] * Wqkv^T) + beta @ Wqkv^T
    and the 1/sqrt(head_dim) softmax scale is applied to the Q columns only.
    All folding is done once in the wrapper (hoisted out of the kernel body).
    """
    E = embed_dim
    gamma = params["ln_gamma"].reshape(E, 1).astype(jnp.float32)
    beta = params["ln_beta"].reshape(1, E).astype(jnp.float32)
    # PyTorch Linear stores weight as (out, in): y = x @ W^T.
    wqkv_t = jnp.concatenate(
        [params["wq"].T, params["wk"].T, params["wv"].T], axis=1
    ).astype(jnp.float32)                                     # (E, 3E)

    scale = 1.0 / (head_dim ** 0.5)
    col_scale = jnp.concatenate(
        [jnp.full((1, E), scale, jnp.float32), jnp.ones((1, 2 * E), jnp.float32)],
        axis=1)                                               # (1, 3E)

    wqkv_folded = ((gamma * wqkv_t) * col_scale).astype(matmul_dtype)   # (E, 3E)
    bqkv = ((beta @ wqkv_t) * col_scale).astype(jnp.float32)            # (1, 3E)
    wo_t = params["wo"].T.astype(matmul_dtype)                           # (E, E)
    bo = params["bo"].reshape(1, E).astype(jnp.float32)                  # (1, E)
    return wqkv_folded, bqkv, wo_t, bo


def self_attention_tokens_pallas(x_tok, params, *, num_heads,
                                 matmul_dtype=jnp.float32):
    """x_tok: (B, S, E) tokens. Returns (B, S, E)."""
    B, S, E = x_tok.shape
    head_dim = E // num_heads
    assert head_dim * num_heads == E, "embed_dim must be divisible by num_heads"

    wqkv, bqkv, wo_t, bo = _fold_params(
        params, embed_dim=E, head_dim=head_dim, matmul_dtype=matmul_dtype)

    kernel = functools.partial(_self_attention_kernel,
                               num_heads=num_heads, head_dim=head_dim,
                               embed_dim=E)

    full2d = lambda shape: pl.BlockSpec(shape, lambda b: (0, 0))

    return pl.pallas_call(
        kernel,
        out_shape=jax.ShapeDtypeStruct((B, S, E), x_tok.dtype),
        grid_spec=pltpu.PrefetchScalarGridSpec(
            num_scalar_prefetch=0,
            grid=(B,),
            in_specs=[
                pl.BlockSpec((1, S, E), lambda b: (b, 0, 0)),   # x
                full2d((E, 3 * E)),                              # folded QKV weight
                full2d((1, 3 * E)),                              # folded QKV bias
                full2d((E, E)),                                  # Wo^T
                full2d((1, E)),                                  # bo
            ],
            out_specs=pl.BlockSpec((1, S, E), lambda b: (b, 0, 0)),
        ),
        compiler_params=pltpu.CompilerParams(
            dimension_semantics=("parallel",)),
    )(x_tok, wqkv, bqkv, wo_t, bo)


def self_attention_pallas(x, params, *, num_heads, matmul_dtype=jnp.float32):
    """Mirrors SelfAttention.forward (channels_last=False, custom=True path).

    x: (B, C, H, W) NCHW or (B, S, C) tokens.  Returns same layout.
    """
    if x.ndim == 4:
        B, C, H, W = x.shape
        # b c h w -> b (h w) c
        x_tok = jnp.transpose(x, (0, 2, 3, 1)).reshape(B, H * W, C)
        out_tok = self_attention_tokens_pallas(
            x_tok, params, num_heads=num_heads, matmul_dtype=matmul_dtype)
        # b (h w) c -> b c h w
        return jnp.transpose(out_tok.reshape(B, H, W, C), (0, 3, 1, 2))
    elif x.ndim == 3:
        return self_attention_tokens_pallas(
            x, params, num_heads=num_heads, matmul_dtype=matmul_dtype)
    else:
        raise ValueError("Input dimension not supported")


# ---------------------------------------------------------------------------
# Pure-JAX reference mirroring the PyTorch forward (custom=True path).
# ---------------------------------------------------------------------------
def _reference_tokens(x_tok, params, *, num_heads):
    B, S, E = x_tok.shape
    D = E // num_heads
    x = x_tok.astype(jnp.float32)

    mean = jnp.mean(x, axis=-1, keepdims=True)
    var = jnp.mean((x - mean) ** 2, axis=-1, keepdims=True)
    xn = (x - mean) / jnp.sqrt(var + 1e-5)
    xn = xn * params["ln_gamma"] + params["ln_beta"]

    q = xn @ params["wq"].T
    k = xn @ params["wk"].T
    v = xn @ params["wv"].T

    def split_heads(t):
        return jnp.transpose(t.reshape(B, S, num_heads, D), (0, 2, 1, 3))

    q, k, v = split_heads(q), split_heads(k), split_heads(v)
    scores = jnp.einsum("bhqd,bhkd->bhqk", q, k) / (D ** 0.5)
    w = jax.nn.softmax(scores, axis=-1)
    a = jnp.einsum("bhqk,bhkd->bhqd", w, v)
    a = jnp.transpose(a, (0, 2, 1, 3)).reshape(B, S, E)
    return a @ params["wo"].T + params["bo"]


def _reference_nchw(x_nchw, params, *, num_heads):
    B, C, H, W = x_nchw.shape
    x_tok = jnp.transpose(x_nchw, (0, 2, 3, 1)).reshape(B, H * W, C)
    out = _reference_tokens(x_tok, params, num_heads=num_heads)
    return jnp.transpose(out.reshape(B, H, W, C), (0, 3, 1, 2))


if __name__ == "__main__":
    # Small shapes: batch=2, embed_dim (channels)=32, spatial 8x8 -> seq=64, heads=4.
    B, E, Hs, Ws = 2, 32, 8, 8
    NUM_HEADS = 4

    key = jax.random.PRNGKey(0)
    kx, kq, kk, kv, ko, kb, kg, kbe, kx3 = jax.random.split(key, 9)

    x4 = jax.random.normal(kx, (B, E, Hs, Ws), dtype=jnp.float32)

    scale = 1.0 / (E ** 0.5)
    params = {
        # Non-trivial LayerNorm affine to exercise the weight/bias folding.
        "ln_gamma": 1.0 + 0.1 * jax.random.normal(kg, (E,), jnp.float32),
        "ln_beta": 0.05 * jax.random.normal(kbe, (E,), jnp.float32),
        "wq": jax.random.uniform(kq, (E, E), jnp.float32, -scale, scale),
        "wk": jax.random.uniform(kk, (E, E), jnp.float32, -scale, scale),
        "wv": jax.random.uniform(kv, (E, E), jnp.float32, -scale, scale),
        "wo": jax.random.uniform(ko, (E, E), jnp.float32, -scale, scale),
        "bo": jax.random.uniform(kb, (E,), jnp.float32, -scale, scale),
    }

    # 4-D (NCHW) path — matches the module's channels_last=False branch.
    out4 = self_attention_pallas(x4, params, num_heads=NUM_HEADS)
    out4 = jax.block_until_ready(out4)
    ref4 = _reference_nchw(x4, params, num_heads=NUM_HEADS)
    assert out4.shape == (B, E, Hs, Ws)
    # Tolerance covers the EUP approximate-reciprocal in the softmax denominator.
    assert jnp.allclose(out4, ref4, atol=2e-3, rtol=2e-3), "4D mismatch vs reference"

    # 3-D (tokens) path — matches the module's input_dim == 3 branch.
    S3 = 48
    x3 = jax.random.normal(kx3, (B, S3, E), dtype=jnp.float32)
    out3 = self_attention_pallas(x3, params, num_heads=NUM_HEADS)
    out3 = jax.block_until_ready(out3)
    ref3 = _reference_tokens(x3, params, num_heads=NUM_HEADS)
    assert out3.shape == (B, S3, E)
    assert jnp.allclose(out3, ref3, atol=2e-3, rtol=2e-3), "3D mismatch vs reference"

    print("KERNEL_OK")
</pallas_src>

<mosaic_0001>
module attributes {stable_mosaic.version = 11 : i64} {
  func.func @_self_attention_kernel(%arg0: i32, %arg1: memref<1x64x32xf32, #tpu.memory_space<vmem>>, %arg2: memref<32x96xf32, #tpu.memory_space<vmem>>, %arg3: memref<1x96xf32, #tpu.memory_space<vmem>>, %arg4: memref<32x32xf32, #tpu.memory_space<vmem>>, %arg5: memref<1x32xf32, #tpu.memory_space<vmem>>, %arg6: memref<1x64x32xf32, #tpu.memory_space<vmem>>) attributes {dimension_semantics = [#tpu.dimension_semantics<parallel>], iteration_bounds = array<i64: 2>, scalar_prefetch = 0 : i64, scratch_operands = 0 : i64, tpu.core_type = #tpu.core_type<tc>, window_params = [{transform_indices = @transform_0, window_bounds = array<i64: 1, 64, 32>}, {pipeline_mode = #tpu.pipeline_mode<synchronous>, transform_indices = @transform_1, window_bounds = array<i64: 32, 96>}, {pipeline_mode = #tpu.pipeline_mode<synchronous>, transform_indices = @transform_2, window_bounds = array<i64: 1, 96>}, {pipeline_mode = #tpu.pipeline_mode<synchronous>, transform_indices = @transform_3, window_bounds = array<i64: 32, 32>}, {pipeline_mode = #tpu.pipeline_mode<synchronous>, transform_indices = @transform_4, window_bounds = array<i64: 1, 32>}, {transform_indices = @transform_5, window_bounds = array<i64: 1, 64, 32>}]} {
    %c0 = arith.constant 0 : index
    %c0_0 = arith.constant 0 : index
    %c0_1 = arith.constant 0 : index
    %0 = vector.load %arg1[%c0, %c0_0, %c0_1] : memref<1x64x32xf32, #tpu.memory_space<vmem>>, vector<1x64x32xf32>
    %1 = vector.shape_cast %0 : vector<1x64x32xf32> to vector<64x32xf32>
    %cst = arith.constant dense<0.000000e+00> : vector<64xf32>
    %2 = vector.multi_reduction <add>, %1, %cst [1] : vector<64x32xf32> to vector<64xf32>
    %3 = vector.shape_cast %2 : vector<64xf32> to vector<64x1xf32>
    %cst_2 = arith.constant 3.200000e+01 : f32
    %4 = vector.broadcast %cst_2 : f32 to vector<64x1xf32>
    %5 = arith.divf %3, %4 : vector<64x1xf32>
    %6 = vector.broadcast %5 : vector<64x1xf32> to vector<64x32xf32>
    %7 = arith.subf %1, %6 : vector<64x32xf32>
    %8 = arith.mulf %7, %7 : vector<64x32xf32>
    %cst_3 = arith.constant dense<0.000000e+00> : vector<64xf32>
    %9 = vector.multi_reduction <add>, %8, %cst_3 [1] : vector<64x32xf32> to vector<64xf32>
    %10 = vector.shape_cast %9 : vector<64xf32> to vector<64x1xf32>
    %cst_4 = arith.constant 3.200000e+01 : f32
    %11 = vector.broadcast %cst_4 : f32 to vector<64x1xf32>
    %12 = arith.divf %10, %11 : vector<64x1xf32>
    %13 = vector.broadcast %5 : vector<64x1xf32> to vector<64x32xf32>
    %14 = arith.subf %1, %13 : vector<64x32xf32>
    %cst_5 = arith.constant 9.99999974E-6 : f32
    %15 = vector.broadcast %cst_5 : f32 to vector<64x1xf32>
    %16 = arith.addf %12, %15 : vector<64x1xf32>
    %17 = math.rsqrt %16 : vector<64x1xf32>
    %18 = vector.broadcast %17 : vector<64x1xf32> to vector<64x32xf32>
    %19 = arith.mulf %14, %18 : vector<64x32xf32>
    %c0_6 = arith.constant 0 : index
    %c0_7 = arith.constant 0 : index
    %20 = vector.load %arg2[%c0_6, %c0_7] : memref<32x96xf32, #tpu.memory_space<vmem>>, vector<32x96xf32>
    %cst_8 = arith.constant dense<0.000000e+00> : vector<64x96xf32>
    %21 = tpu.matmul %19, %20, %cst_8 {dimension_numbers = #tpu.dot_dimension_numbers<[1], [0], [0], [1], [0, 0, 1, 1], [], []>} : vector<64x32xf32>, vector<32x96xf32>, vector<64x96xf32> -> vector<64x96xf32>
    %c0_9 = arith.constant 0 : index
    %c0_10 = arith.constant 0 : index
    %22 = vector.load %arg3[%c0_9, %c0_10] : memref<1x96xf32, #tpu.memory_space<vmem>>, vector<1x96xf32>
    %23 = vector.shape_cast %22 : vector<1x96xf32> to vector<96xf32>
    %24 = vector.shape_cast %23 : vector<96xf32> to vector<1x96xf32>
    %25 = vector.broadcast %24 : vector<1x96xf32> to vector<64x96xf32>
    %26 = arith.addf %21, %25 : vector<64x96xf32>
    %27 = vector.extract_strided_slice %26 {offsets = [0, 0], sizes = [64, 32], strides = [1, 1]} : vector<64x96xf32> to vector<64x32xf32>
    %28 = vector.extract_strided_slice %26 {offsets = [0, 32], sizes = [64, 32], strides = [1, 1]} : vector<64x96xf32> to vector<64x32xf32>
    %29 = vector.extract_strided_slice %26 {offsets = [0, 64], sizes = [64, 32], strides = [1, 1]} : vector<64x96xf32> to vector<64x32xf32>
    %30 = vector.shape_cast %27 : vector<64x32xf32> to vector<64x4x8xf32>
    %31 = vector.shape_cast %28 : vector<64x32xf32> to vector<64x4x8xf32>
    %32 = vector.shape_cast %29 : vector<64x32xf32> to vector<64x4x8xf32>
    "tpu.trace_start"() <{level = 10 : i32, message = "qhd,khd->hqk"}> : () -> ()
    %cst_11 = arith.constant dense<0.000000e+00> : vector<4x64x64xf32>
    %33 = tpu.matmul %30, %31, %cst_11 {dimension_numbers = #tpu.dot_dimension_numbers<[2], [2], [0], [0], [0, 1, 0, 0, 1, 0], [1], [1]>} : vector<64x4x8xf32>, vector<64x4x8xf32>, vector<4x64x64xf32> -> vector<4x64x64xf32>
    "tpu.trace_stop"() : () -> ()
    %cst_12 = arith.constant dense<0xFF800000> : vector<4x64xf32>
    %34 = vector.multi_reduction <maximumf>, %33, %cst_12 [2] : vector<4x64x64xf32> to vector<4x64xf32>
    %35 = vector.shape_cast %34 : vector<4x64xf32> to vector<4x64x1xf32>
    %36 = vector.broadcast %35 : vector<4x64x1xf32> to vector<4x64x64xf32>
    %37 = arith.subf %33, %36 : vector<4x64x64xf32>
    %38 = math.exp %37 : vector<4x64x64xf32>
    %cst_13 = arith.constant dense<0.000000e+00> : vector<4x64xf32>
    %39 = vector.multi_reduction <add>, %38, %cst_13 [2] : vector<4x64x64xf32> to vector<4x64xf32>
    %40 = vector.shape_cast %39 : vector<4x64xf32> to vector<4x64x1xf32>
    %41 = tpu.reciprocal %40 {approx = true} : vector<4x64x1xf32> -> vector<4x64x1xf32>
    %42 = vector.broadcast %41 : vector<4x64x1xf32> to vector<4x64x64xf32>
    %43 = arith.mulf %38, %42 : vector<4x64x64xf32>
    "tpu.trace_start"() <{level = 10 : i32, message = "hqk,khd->qhd"}> : () -> ()
    %cst_14 = arith.constant dense<0.000000e+00> : vector<4x8x64xf32>
    %44 = tpu.matmul %32, %43, %cst_14 {dimension_numbers = #tpu.dot_dimension_numbers<[0], [2], [2], [1], [0, 1, 0, 2, 1, 1], [1], [0]>} : vector<64x4x8xf32>, vector<4x64x64xf32>, vector<4x8x64xf32> -> vector<4x8x64xf32>
    %45 = tpu.transpose %44, [2, 0, 1] : vector<4x8x64xf32> -> vector<64x4x8xf32>
    "tpu.trace_stop"() : () -> ()
    %46 = vector.shape_cast %45 : vector<64x4x8xf32> to vector<64x32xf32>
    %c0_15 = arith.constant 0 : index
    %c0_16 = arith.constant 0 : index
    %47 = vector.load %arg4[%c0_15, %c0_16] : memref<32x32xf32, #tpu.memory_space<vmem>>, vector<32x32xf32>
    %cst_17 = arith.constant dense<0.000000e+00> : vector<64x32xf32>
    %48 = tpu.matmul %46, %47, %cst_17 {dimension_numbers = #tpu.dot_dimension_numbers<[1], [0], [0], [1], [0, 0, 1, 1], [], []>} : vector<64x32xf32>, vector<32x32xf32>, vector<64x32xf32> -> vector<64x32xf32>
    %c0_18 = arith.constant 0 : index
    %c0_19 = arith.constant 0 : index
    %49 = vector.load %arg5[%c0_18, %c0_19] : memref<1x32xf32, #tpu.memory_space<vmem>>, vector<1x32xf32>
    %50 = vector.shape_cast %49 : vector<1x32xf32> to vector<32xf32>
    %51 = vector.shape_cast %50 : vector<32xf32> to vector<1x32xf32>
    %52 = vector.broadcast %51 : vector<1x32xf32> to vector<64x32xf32>
    %53 = arith.addf %48, %52 : vector<64x32xf32>
    %c0_20 = arith.constant 0 : index
    %c0_21 = arith.constant 0 : index
    %c0_22 = arith.constant 0 : index
    %54 = vector.load %arg6[%c0_20, %c0_21, %c0_22] : memref<1x64x32xf32, #tpu.memory_space<vmem>>, vector<1x64x32xf32>
    %55 = vector.shape_cast %54 : vector<1x64x32xf32> to vector<64x32xf32>
    %56 = vector.shape_cast %53 : vector<64x32xf32> to vector<1x64x32xf32>
    tpu.vector_store %arg6[%c0_20, %c0_21, %c0_22], %56 {strides = array<i32>} : memref<1x64x32xf32, #tpu.memory_space<vmem>>, vector<1x64x32xf32>,
    return
  }
  func.func @transform_0(%arg0: i32) -> (i32, i32, i32) {
    %c0_i32 = arith.constant 0 : i32
    %c0_i32_0 = arith.constant 0 : i32
    %c0_i32_1 = arith.constant 0 : i32
    return %arg0, %c0_i32, %c0_i32_0 : i32, i32, i32
  }
  func.func @transform_1(%arg0: i32) -> (i32, i32) {
    %c0_i32 = arith.constant 0 : i32
    %c0_i32_0 = arith.constant 0 : i32
    %c0_i32_1 = arith.constant 0 : i32
    return %c0_i32, %c0_i32_0 : i32, i32
  }
  func.func @transform_2(%arg0: i32) -> (i32, i32) {
    %c0_i32 = arith.constant 0 : i32
    %c0_i32_0 = arith.constant 0 : i32
    %c0_i32_1 = arith.constant 0 : i32
    return %c0_i32, %c0_i32_0 : i32, i32
  }
  func.func @transform_3(%arg0: i32) -> (i32, i32) {
    %c0_i32 = arith.constant 0 : i32
    %c0_i32_0 = arith.constant 0 : i32
    %c0_i32_1 = arith.constant 0 : i32
    return %c0_i32, %c0_i32_0 : i32, i32
  }
  func.func @transform_4(%arg0: i32) -> (i32, i32) {
    %c0_i32 = arith.constant 0 : i32
    %c0_i32_0 = arith.constant 0 : i32
    %c0_i32_1 = arith.constant 0 : i32
    return %c0_i32, %c0_i32_0 : i32, i32
  }
  func.func @transform_5(%arg0: i32) -> (i32, i32, i32) {
    %c0_i32 = arith.constant 0 : i32
    %c0_i32_0 = arith.constant 0 : i32
    %c0_i32_1 = arith.constant 0 : i32
    return %arg0, %c0_i32, %c0_i32_0 : i32, i32, i32
  }
}

</mosaic_0001>

<llo_original>
// kernel: tpu_custom_call.1
$region0: #{tpu_custom_call.1}
  #allocation0 [shape = 'u32[]', space=smem, size = 0x4, offset = 0x4, fixed_abs, tag = 'smem constant byte address 0x4 - core index']
  #allocation1 [shape = 'u32[144,128]{1,0:T(1,128)}', space=vmem, size = 0x12000, scoped, tag = 'internal scratch']
  %s0 = inlined_call_operand.vmem [shape: f32[2,64,32], index: 0, kind: input, shape index: {}]
  %s1 = inlined_call_operand.vmem [shape: f32[32,96], index: 1, kind: input, shape index: {}]
  %s2 = inlined_call_operand.vmem [shape: f32[1,96], index: 2, kind: input, shape index: {}]
  %s3 = inlined_call_operand.vmem [shape: f32[32,32], index: 3, kind: input, shape index: {}]
  %s4 = inlined_call_operand.vmem [shape: f32[1,32], index: 4, kind: input, shape index: {}]
  %s5 = inlined_call_operand.vmem [shape: f32[2,64,32], index: 5, kind: output, shape index: {}]
  %s6 = sld [smem:[#allocation0]]
  $region53: #{tpu_custom_call.1} parent=0
    _
  %s8 = ssub.s32 1, %s6
  %s9 = scalar_select 0, %s8, %s6
  loop: start=0, step=1, limit=4
  $region2: #{tpu_custom_call.1} parent=0 // loop_pre_header
    _
  $region3: #{tpu_custom_call.1} parent=0 // loop_header
    %s11 = sphi 0, %s15
    %p12 = scmp.ge.s32.totalorder %s11, 4
    %s21 = sphi 0, %s23
    %s24 = sphi 0, %s21
    %s25 = sphi 0, %s24
    %s41 = sphi 0, %s25
    %s45 = sphi 0, %s45
    %s47 = sphi 0, %s45
    %s48 = sphi 0, %s47
    %s62 = sphi 0, %s48
    %s66 = sphi 0, %s66
    %s68 = sphi 0, %s66
    %s69 = sphi 0, %s68
    %s83 = sphi 0, %s69
    %s87 = sphi 0, %s87
    %s89 = sphi 0, %s87
    %s90 = sphi 0, %s89
    %s104 = sphi 0, %s90
    %s108 = sphi 0, %s108
    %s110 = sphi 0, %s108
    %s111 = sphi 0, %s110
    %s125 = sphi 0, %s111
    %s131 = sphi 0, %s133
    %s134 = sphi 0, %s131
    %s135 = sphi 0, %s134
    %s151 = sphi 0, %s135
  $region4: #{tpu_custom_call.1} parent=0 // loop_header_branch
    %14 = sbr.rel (%p12) target = $region8
  $region5: #{tpu_custom_call.1} parent=0 // loop_body
    %s16 = ssub.s32 %s11, 1
    %s17 = ssub.s32 %s11, 2
    %s18 = sadd.s32 %s11, 1
    %s19 = ssub.s32 %s11, %s18
    %p20 = scmp.eq.s32.totalorder %s19, 0
    %s22 = sadd.s32 %s21, 1
    %s23 = scalar_select %p20, %s21, %s22
    %p26 = pneg %p20
    %p27 = scmp.eq.s32.totalorder %s11, 1
    %p28 = por %p26, %p27
    %p29 = scmp.ne.s32.totalorder %s21, %s24
    %p30 = scmp.eq.s32.totalorder %s11, 0
    %p31 = por %p29, %p30
    %p32 = scmp.ne.s32.totalorder %s21, %s24
    %p33 = scmp.eq.s32.totalorder %s16, 1
    %p34 = por %p32, %p33
    %p35 = scmp.ne.s32.totalorder %s24, %s25
    %p36 = scmp.eq.s32.totalorder %s16, 0
    %p37 = por %p35, %p36
    %p38 = scmp.ne.s32.totalorder %s24, %s25
    %p39 = scmp.eq.s32.totalorder %s17, 1
    %p40 = por %p38, %p39
    %p42 = scmp.ne.s32.totalorder %s25, %s41
    %p43 = scmp.eq.s32.totalorder %s17, 0
    %p44 = por %p42, %p43
    %s46 = sadd.s32 %s45, 1
    %p49 = scmp.eq.s32.totalorder %s11, 1
    %p50 = scmp.ne.s32.totalorder %s45, %s47
    %p51 = scmp.eq.s32.totalorder %s11, 0
    %p52 = por %p50, %p51
    %p53 = scmp.ne.s32.totalorder %s45, %s47
    %p54 = scmp.eq.s32.totalorder %s16, 1
    %p55 = por %p53, %p54
    %p56 = scmp.ne.s32.totalorder %s47, %s48
    %p57 = scmp.eq.s32.totalorder %s16, 0
    %p58 = por %p56, %p57
    %p59 = scmp.ne.s32.totalorder %s47, %s48
    %p60 = scmp.eq.s32.totalorder %s17, 1
    %p61 = por %p59, %p60
    %p63 = scmp.ne.s32.totalorder %s48, %s62
    %p64 = scmp.eq.s32.totalorder %s17, 0
    %p65 = por %p63, %p64
    %s67 = sadd.s32 %s66, 1
    %p70 = scmp.eq.s32.totalorder %s11, 1
    %p71 = scmp.ne.s32.totalorder %s66, %s68
    %p72 = scmp.eq.s32.totalorder %s11, 0
    %p73 = por %p71, %p72
    %p74 = scmp.ne.s32.totalorder %s66, %s68
    %p75 = scmp.eq.s32.totalorder %s16, 1
    %p76 = por %p74, %p75
    %p77 = scmp.ne.s32.totalorder %s68, %s69
    %p78 = scmp.eq.s32.totalorder %s16, 0
    %p79 = por %p77, %p78
    %p80 = scmp.ne.s32.totalorder %s68, %s69
    %p81 = scmp.eq.s32.totalorder %s17, 1
    %p82 = por %p80, %p81
    %p84 = scmp.ne.s32.totalorder %s69, %s83
    %p85 = scmp.eq.s32.totalorder %s17, 0
    %p86 = por %p84, %p85
    %s88 = sadd.s32 %s87, 1
    %p91 = scmp.eq.s32.totalorder %s11, 1
    %p92 = scmp.ne.s32.totalorder %s87, %s89
    %p93 = scmp.eq.s32.totalorder %s11, 0
    %p94 = por %p92, %p93
    %p95 = scmp.ne.s32.totalorder %s87, %s89
    %p96 = scmp.eq.s32.totalorder %s16, 1
    %p97 = por %p95, %p96
    %p98 = scmp.ne.s32.totalorder %s89, %s90
    %p99 = scmp.eq.s32.totalorder %s16, 0
    %p100 = por %p98, %p99
    %p101 = scmp.ne.s32.totalorder %s89, %s90
    %p102 = scmp.eq.s32.totalorder %s17, 1
    %p103 = por %p101, %p102
    %p105 = scmp.ne.s32.totalorder %s90, %s104
    %p106 = scmp.eq.s32.totalorder %s17, 0
    %p107 = por %p105, %p106
    %s109 = sadd.s32 %s108, 1
    %p112 = scmp.eq.s32.totalorder %s11, 1
    %p113 = scmp.ne.s32.totalorder %s108, %s110
    %p114 = scmp.eq.s32.totalorder %s11, 0
    %p115 = por %p113, %p114
    %p116 = scmp.ne.s32.totalorder %s108, %s110
    %p117 = scmp.eq.s32.totalorder %s16, 1
    %p118 = por %p116, %p117
    %p119 = scmp.ne.s32.totalorder %s110, %s111
    %p120 = scmp.eq.s32.totalorder %s16, 0
    %p121 = por %p119, %p120
    %p122 = scmp.ne.s32.totalorder %s110, %s111
    %p123 = scmp.eq.s32.totalorder %s17, 1
    %p124 = por %p122, %p123
    %p126 = scmp.ne.s32.totalorder %s111, %s125
    %p127 = scmp.eq.s32.totalorder %s17, 0
    %p128 = por %p126, %p127
    %s129 = ssub.s32 %s11, %s18
    %p130 = scmp.eq.s32.totalorder %s129, 0
    %s132 = sadd.s32 %s131, 1
    %s133 = scalar_select %p130, %s131, %s132
    %p136 = pneg %p130
    %p137 = scmp.eq.s32.totalorder %s11, 1
    %p138 = por %p136, %p137
    %p139 = scmp.ne.s32.totalorder %s131, %s134
    %p140 = scmp.eq.s32.totalorder %s11, 0
    %p141 = por %p139, %p140
    %p142 = scmp.ne.s32.totalorder %s131, %s134
    %p143 = scmp.eq.s32.totalorder %s16, 1
    %p144 = por %p142, %p143
    %p145 = scmp.ne.s32.totalorder %s134, %s135
    %p146 = scmp.eq.s32.totalorder %s16, 0
    %p147 = por %p145, %p146
    %p148 = scmp.ne.s32.totalorder %s134, %s135
    %p149 = scmp.eq.s32.totalorder %s17, 1
    %p150 = por %p148, %p149
    %p152 = scmp.ne.s32.totalorder %s135, %s151
    %p153 = scmp.eq.s32.totalorder %s17, 0
    %p154 = por %p152, %p153
    %p155 = scmp.le.s32.totalorder 1, %s11
    %p156 = scmp.lt.s32.totalorder %s11, 3
    %p157 = pnand %p155, %p156
    %p158 = pneg %p157
    // Predicated region
    $region9: #{tpu_custom_call.1} parent=5 // pred_check
      _
    $region10: #{tpu_custom_call.1} parent=5 // pred_check_branch
      %160 = sbr.rel (%p157) target = $region12
    $region11: #{tpu_custom_call.1} parent=5 // pred_region
      %s161 = ssub.s32 %s11, 1
      // Predicated region
      $region13: #{tpu_custom_call.1} parent=11 // pred_check
        %p162 = pneg %p58
      $region14: #{tpu_custom_call.1} parent=11 // pred_check_branch
        %164 = sbr.rel (%p162) target = $region16
      $region15: #{tpu_custom_call.1} parent=11 // pred_region
        _
      $region16: #{tpu_custom_call.1} parent=11 // pred_fallthru
        _
      // Predicated region
      $region17: #{tpu_custom_call.1} parent=11 // pred_check
        %p165 = pneg %p79
      $region18: #{tpu_custom_call.1} parent=11 // pred_check_branch
        %167 = sbr.rel (%p165) target = $region20
      $region19: #{tpu_custom_call.1} parent=11 // pred_region
        _
      $region20: #{tpu_custom_call.1} parent=11 // pred_fallthru
        _
      // Predicated region
      $region21: #{tpu_custom_call.1} parent=11 // pred_check
        %p168 = pneg %p100
      $region22: #{tpu_custom_call.1} parent=11 // pred_check_branch
        %170 = sbr.rel (%p168) target = $region24
      $region23: #{tpu_custom_call.1} parent=11 // pred_region
        _
      $region24: #{tpu_custom_call.1} parent=11 // pred_fallthru
        _
      // Predicated region
      $region25: #{tpu_custom_call.1} parent=11 // pred_check
        %p171 = pneg %p121
      $region26: #{tpu_custom_call.1} parent=11 // pred_check_branch
        %173 = sbr.rel (%p171) target = $region28
      $region27: #{tpu_custom_call.1} parent=11 // pred_region
        _
      $region28: #{tpu_custom_call.1} parent=11 // pred_fallthru
        _
    $region12: #{tpu_custom_call.1} parent=5 // pred_fallthru
      _
    %p174 = scmp.lt.s32.totalorder %s11, 2
    // Predicated region
    $region29: #{tpu_custom_call.1} parent=5 // pred_check
      %p175 = pneg %p174
    $region30: #{tpu_custom_call.1} parent=5 // pred_check_branch
      %177 = sbr.rel (%p175) target = $region32
    $region31: #{tpu_custom_call.1} parent=5 // pred_region
      // Predicated region
      $region33: #{tpu_custom_call.1} parent=31 // pred_check
        %p178 = pneg %p31
      $region34: #{tpu_custom_call.1} parent=31 // pred_check_branch
        %180 = sbr.rel (%p178) target = $region36
      $region35: #{tpu_custom_call.1} parent=31 // pred_region
        %p181 = scmp.lt.s32.totalorder %s11, 1
        %s182 = scalar_select %p181, %s11, 1
        %s183 = smul.addr %s182, 8
        %s184 = smul.addr %s183, 8
        %s185 = scalar_lea.vmem %s0, %s184
      $region36: #{tpu_custom_call.1} parent=31 // pred_fallthru
        _
    $region32: #{tpu_custom_call.1} parent=5 // pred_fallthru
      _
    %p186 = scmp.le.s32.totalorder 1, %s11
    %p187 = scmp.lt.s32.totalorder %s11, 3
    %p188 = pnand %p186, %p187
    %p189 = pneg %p188
    // Predicated region
    $region37: #{tpu_custom_call.1} parent=5 // pred_check
      _
    $region38: #{tpu_custom_call.1} parent=5 // pred_check_branch
      %191 = sbr.rel (%p188) target = $region40
    $region39: #{tpu_custom_call.1} parent=5 // pred_region
      %s192 = ssub.s32 %s11, 1
      %p193 = scmp.lt.s32.totalorder %s16, 1
      %s194 = scalar_select %p193, %s16, 1
      %s195 = smul.addr %s194, 8
      %s196 = smul.addr %s195, 8
      %s197 = scalar_lea.vmem %s0, %s196
      %p198 = pneg %p37
      %p199 = pneg %p34
      %p200 = pneg %p58
      %p201 = pneg %p55
      %p202 = pneg %p79
      %p203 = pneg %p76
      %p204 = pneg %p100
      %p205 = pneg %p97
      %p206 = pneg %p121
      %p207 = pneg %p118
      %p208 = pneg %p147
      %p209 = pneg %p144
      %p210 = scmp.lt.s32.totalorder %s16, 1
      %s211 = scalar_select %p210, %s16, 1
      %s212 = smul.addr %s211, 8
      %s213 = smul.addr %s212, 8
      %s214 = scalar_lea.vmem %s5, %s213
      %p215 = scmp.lt.s32.totalorder %s16, 1
      %s216 = scalar_select %p215, %s16, 1
      %s217 = smul.addr %s216, 8
      %s218 = smul.addr %s217, 8
      %s219 = scalar_lea.vmem %s0, %s218
      %p220 = scmp.lt.s32.totalorder %s16, 1
      %s221 = scalar_select %p220, %s16, 1
      %s222 = smul.addr %s221, 8
      %s223 = smul.addr %s222, 8
      %s224 = scalar_lea.vmem %s5, %s223
      %v225 = vld [vmem:[%s219] sm:$0xff]
      %v226 = vld [vmem:[%s219 + $0x8] sm:$0xff]
      %v227 = vld [vmem:[%s219 + $0x10] sm:$0xff]
      %v228 = vld [vmem:[%s219 + $0x18] sm:$0xff]
      %v229 = vld [vmem:[%s219 + $0x20] sm:$0xff]
      %v230 = vld [vmem:[%s219 + $0x28] sm:$0xff]
      %v231 = vld [vmem:[%s219 + $0x30] sm:$0xff]
      %v232 = vld [vmem:[%s219 + $0x38] sm:$0xff]
      %vm233 = vcmask 261120
      %v234 = vsel %vm233, %v225, 0.0
      %235 = vadd.xlane.f32.xlu0 %v234
      %v236 = vpop.xlane.xlu0 %235
      %v237 = vsel %vm233, %v226, 0.0
      %238 = vadd.xlane.f32.xlu0 %v237
      %v239 = vpop.xlane.xlu0 %238
      %v240 = vsel %vm233, %v227, 0.0
      %241 = vadd.xlane.f32.xlu0 %v240
      %v242 = vpop.xlane.xlu0 %241
      %v243 = vsel %vm233, %v228, 0.0
      %244 = vadd.xlane.f32.xlu0 %v243
      %v245 = vpop.xlane.xlu0 %244
      %v246 = vsel %vm233, %v229, 0.0
      %247 = vadd.xlane.f32.xlu0 %v246
      %v248 = vpop.xlane.xlu0 %247
      %v249 = vsel %vm233, %v230, 0.0
      %250 = vadd.xlane.f32.xlu0 %v249
      %v251 = vpop.xlane.xlu0 %250
      %v252 = vsel %vm233, %v231, 0.0
      %253 = vadd.xlane.f32.xlu0 %v252
      %v254 = vpop.xlane.xlu0 %253
      %v255 = vsel %vm233, %v232, 0.0
      %256 = vadd.xlane.f32.xlu0 %v255
      %v257 = vpop.xlane.xlu0 %256
      %v258 = vrcp.pop 32.0
      %v259 = vmul.f32 %v236, %v258
      %v260 = vmul.f32 %v239, %v258
      %v261 = vmul.f32 %v242, %v258
      %v262 = vmul.f32 %v245, %v258
      %v263 = vmul.f32 %v248, %v258
      %v264 = vmul.f32 %v251, %v258
      %v265 = vmul.f32 %v254, %v258
      %v266 = vmul.f32 %v257, %v258
      %v267 = vsub.f32 %v225, %v259
      %v268 = vsub.f32 %v226, %v260
      %v269 = vsub.f32 %v227, %v261
      %v270 = vsub.f32 %v228, %v262
      %v271 = vsub.f32 %v229, %v263
      %v272 = vsub.f32 %v230, %v264
      %v273 = vsub.f32 %v231, %v265
      %v274 = vsub.f32 %v232, %v266
      %v275 = vmul.f32 %v267, %v267
      %v276 = vmul.f32 %v268, %v268
      %v277 = vmul.f32 %v269, %v269
      %v278 = vmul.f32 %v270, %v270
      %v279 = vmul.f32 %v271, %v271
      %v280 = vmul.f32 %v272, %v272
      %v281 = vmul.f32 %v273, %v273
      %v282 = vmul.f32 %v274, %v274
      %v283 = vsel %vm233, %v275, 0.0
      %284 = vadd.xlane.f32.xlu0 %v283
      %v285 = vpop.xlane.xlu0 %284
      %v286 = vsel %vm233, %v276, 0.0
      %287 = vadd.xlane.f32.xlu0 %v286
      %v288 = vpop.xlane.xlu0 %287
      %v289 = vsel %vm233, %v277, 0.0
      %290 = vadd.xlane.f32.xlu0 %v289
      %v291 = vpop.xlane.xlu0 %290
      %v292 = vsel %vm233, %v278, 0.0
      %293 = vadd.xlane.f32.xlu0 %v292
      %v294 = vpop.xlane.xlu0 %293
      %v295 = vsel %vm233, %v279, 0.0
      %296 = vadd.xlane.f32.xlu0 %v295
      %v297 = vpop.xlane.xlu0 %296
      %v298 = vsel %vm233, %v280, 0.0
      %299 = vadd.xlane.f32.xlu0 %v298
      %v300 = vpop.xlane.xlu0 %299
      %v301 = vsel %vm233, %v281, 0.0
      %302 = vadd.xlane.f32.xlu0 %v301
      %v303 = vpop.xlane.xlu0 %302
      %v304 = vsel %vm233, %v282, 0.0
      %305 = vadd.xlane.f32.xlu0 %v304
      %v306 = vpop.xlane.xlu0 %305
      %v307 = vmul.f32 %v285, %v258
      %v308 = vmul.f32 %v288, %v258
      %v309 = vmul.f32 %v291, %v258
      %v310 = vmul.f32 %v294, %v258
      %v311 = vmul.f32 %v297, %v258
      %v312 = vmul.f32 %v300, %v258
      %v313 = vmul.f32 %v303, %v258
      %v314 = vmul.f32 %v306, %v258
      %v315 = vadd.f32 %v307, 1e-05
      %v316 = vadd.f32 %v308, 1e-05
      %v317 = vadd.f32 %v309, 1e-05
      %v318 = vadd.f32 %v310, 1e-05
      %v319 = vadd.f32 %v311, 1e-05
      %v320 = vadd.f32 %v312, 1e-05
      %v321 = vadd.f32 %v313, 1e-05
      %v322 = vadd.f32 %v314, 1e-05
      %v323 = vrsqrt.pop %v315
      %v324 = vrsqrt.pop %v316
      %v325 = vrsqrt.pop %v317
      %v326 = vrsqrt.pop %v318
      %v327 = vrsqrt.pop %v319
      %v328 = vrsqrt.pop %v320
      %v329 = vrsqrt.pop %v321
      %v330 = vrsqrt.pop %v322
      %v331 = vmul.f32 %v267, %v323
      %v332 = vmul.f32 %v268, %v324
      %v333 = vmul.f32 %v269, %v325
      %v334 = vmul.f32 %v270, %v326
      %v335 = vmul.f32 %v271, %v327
      %v336 = vmul.f32 %v272, %v328
      %v337 = vmul.f32 %v273, %v329
      %v338 = vmul.f32 %v274, %v330
      %v339 = vld [vmem:[%s1] sm:$0xff]
      %v340 = vld [vmem:[%s1 + $0x8] sm:$0xff]
      %v341 = vld [vmem:[%s1 + $0x10] sm:$0xff]
      %v342 = vld [vmem:[%s1 + $0x18] sm:$0xff]
      %v343 = vld [vmem:[%s2] sm:$0x1]
      %v345 = vlaneseq
      %v346 = vshrl.u32 %v345, 7
      %v347 = vsub.s32 0, %v346
      %v348 = vrot.slane %v343, %v347
      %v351 = vsel %vm233, %v331, 0
      %v354 = vsel %vm233, %v332, 0
      %v357 = vsel %vm233, %v333, 0
      %v360 = vsel %vm233, %v334, 0
      %v363 = vsel %vm233, %v335, 0
      %v366 = vsel %vm233, %v336, 0
      %v369 = vsel %vm233, %v337, 0
      %v372 = vsel %vm233, %v338, 0
      %374 = vmatprep.subr.mxu0 0.0
      %375 = vmatpush1.msra.mxu0 0.0
      %376 = vmatprep.subr.mxu0 0.0
      %377 = vmatpush1.msra.mxu0 0.0
      %378 = vmatprep.subr.mxu0 0.0
      %379 = vmatpush1.msra.mxu0 0.0
      %380 = vmatprep.subr.mxu0 0.0
      %381 = vmatpush1.msra.mxu0 0.0
      %382 = vmatprep.subr.mxu0 0.0
      %383 = vmatpush1.msra.mxu0 0.0
      %384 = vmatprep.subr.mxu0 0.0
      %385 = vmatpush1.msra.mxu0 0.0
      %386 = vmatprep.subr.mxu0 0.0
      %387 = vmatpush1.msra.mxu0 0.0
      %388 = vmatprep.subr.mxu0 0.0
      %389 = vmatpush1.msra.mxu0 0.0
      %390 = vmatprep.subr.mxu0 0.0
      %391 = vmatpush1.msra.mxu0 0.0
      %392 = vmatprep.subr.mxu0 0.0
      %393 = vmatpush1.msra.mxu0 0.0
      %394 = vmatprep.subr.mxu0 0.0
      %395 = vmatpush1.msra.mxu0 0.0
      %396 = vmatprep.subr.mxu0 0.0
      %397 = vmatpush1.msra.mxu0 0.0
      %398 = vmatprep.subr.mxu0 0.0
      %399 = vmatpush1.msra.mxu0 %v342
      %400 = vmatprep.subr.mxu0 0.0
      %401 = vmatpush1.msra.mxu0 %v341
      %402 = vmatprep.subr.mxu0 0.0
      %403 = vmatpush1.msra.mxu0 %v340
      %404 = vmatprep.subr.mxu0 0.0
      %405 = vmatpush1.msra.mxu0 %v339
      %406 = vmatprep.subr.mxu0 0.0
      %407 = vmatpush2.msra.mxu0 0.0
      %408 = vmatprep.subr.mxu0 0.0
      %409 = vmatpush2.msra.mxu0 0.0
      %410 = vmatprep.subr.mxu0 0.0
      %411 = vmatpush2.msra.mxu0 0.0
      %412 = vmatprep.subr.mxu0 0.0
      %413 = vmatpush2.msra.mxu0 0.0
      %414 = vmatprep.subr.mxu0 0.0
      %415 = vmatpush2.msra.mxu0 0.0
      %416 = vmatprep.subr.mxu0 0.0
      %417 = vmatpush2.msra.mxu0 0.0
      %418 = vmatprep.subr.mxu0 0.0
      %419 = vmatpush2.msra.mxu0 0.0
      %420 = vmatprep.subr.mxu0 0.0
      %421 = vmatpush2.msra.mxu0 0.0
      %422 = vmatprep.subr.mxu0 0.0
      %423 = vmatpush2.msra.mxu0 0.0
      %424 = vmatprep.subr.mxu0 0.0
      %425 = vmatpush2.msra.mxu0 0.0
      %426 = vmatprep.subr.mxu0 0.0
      %427 = vmatpush2.msra.mxu0 0.0
      %428 = vmatprep.subr.mxu0 0.0
      %429 = vmatpush2.msra.mxu0 0.0
      %430 = vmatprep.subr.mxu0 0.0
      %431 = vmatpush2.msra.mxu0 0.0
      %432 = vmatprep.subr.mxu0 0.0
      %433 = vmatpush2.msra.mxu0 0.0
      %434 = vmatprep.subr.mxu0 0.0
      %435 = vmatpush2.msra.mxu0 0.0
      %436 = vmatprep.subr.mxu0 0.0
      %437 = vmatpush2.msra.mxu0 0.0
      %438 = vmatprep.mubr.f32.mxu0 0.0
      %439 = vmatmul.mubr.f32.gmra.mxu0 %v351
      %v440 = vpop.f32.mrf.mxu0
      %v441 = vadd.f32 %v348, %v440
      %v442 = vpop.f32.mrf.mxu0
      %443 = vmatprep.mubr.f32.mxu0 0.0
      %444 = vmatmul.mubr.f32.gmra.mxu0 %v354
      %v445 = vpop.f32.mrf.mxu0
      %v446 = vadd.f32 %v348, %v445
      %v447 = vpop.f32.mrf.mxu0
      %448 = vmatprep.mubr.f32.mxu0 0.0
      %449 = vmatmul.mubr.f32.gmra.mxu0 %v357
      %v450 = vpop.f32.mrf.mxu0
      %v451 = vadd.f32 %v348, %v450
      %v452 = vpop.f32.mrf.mxu0
      %453 = vmatprep.mubr.f32.mxu0 0.0
      %454 = vmatmul.mubr.f32.gmra.mxu0 %v360
      %v455 = vpop.f32.mrf.mxu0
      %v456 = vadd.f32 %v348, %v455
      %v457 = vpop.f32.mrf.mxu0
      %458 = vmatprep.mubr.f32.mxu0 0.0
      %459 = vmatmul.mubr.f32.gmra.mxu0 %v363
      %v460 = vpop.f32.mrf.mxu0
      %v461 = vadd.f32 %v348, %v460
      %v462 = vpop.f32.mrf.mxu0
      %463 = vmatprep.mubr.f32.mxu0 0.0
      %464 = vmatmul.mubr.f32.gmra.mxu0 %v366
      %v465 = vpop.f32.mrf.mxu0
      %v466 = vadd.f32 %v348, %v465
      %v467 = vpop.f32.mrf.mxu0
      %468 = vmatprep.mubr.f32.mxu0 0.0
      %469 = vmatmul.mubr.f32.gmra.mxu0 %v369
      %v470 = vpop.f32.mrf.mxu0
      %v471 = vadd.f32 %v348, %v470
      %v472 = vpop.f32.mrf.mxu0
      %473 = vmatprep.mubr.f32.mxu0 0.0
      %474 = vmatmul.mubr.f32.gmra.mxu0 %v372
      %v475 = vpop.f32.mrf.mxu0
      %v476 = vadd.f32 %v348, %v475
      %v477 = vpop.f32.mrf.mxu0
      %478 = vdwg.mxu0
      %487 = vrot.lane.b32.xlu0 %v441, 120
      %v488 = vpop.permute.xlu0 %487
      %489 = vrot.lane.b32.xlu0 %v446, 120
      %v490 = vpop.permute.xlu0 %489
      %491 = vrot.lane.b32.xlu0 %v451, 120
      %v492 = vpop.permute.xlu0 %491
      %493 = vrot.lane.b32.xlu0 %v456, 120
      %v494 = vpop.permute.xlu0 %493
      %495 = vrot.lane.b32.xlu0 %v461, 120
      %v496 = vpop.permute.xlu0 %495
      %497 = vrot.lane.b32.xlu0 %v466, 120
      %v498 = vpop.permute.xlu0 %497
      %499 = vrot.lane.b32.xlu0 %v471, 120
      %v500 = vpop.permute.xlu0 %499
      %501 = vrot.lane.b32.xlu0 %v476, 120
      %v502 = vpop.permute.xlu0 %501
      %503 = vrot.lane.b32.xlu0 %v441, 112
      %v504 = vpop.permute.xlu0 %503
      %505 = vrot.lane.b32.xlu0 %v446, 112
      %v506 = vpop.permute.xlu0 %505
      %507 = vrot.lane.b32.xlu0 %v451, 112
      %v508 = vpop.permute.xlu0 %507
      %509 = vrot.lane.b32.xlu0 %v456, 112
      %v510 = vpop.permute.xlu0 %509
      %511 = vrot.lane.b32.xlu0 %v461, 112
      %v512 = vpop.permute.xlu0 %511
      %513 = vrot.lane.b32.xlu0 %v466, 112
      %v514 = vpop.permute.xlu0 %513
      %515 = vrot.lane.b32.xlu0 %v471, 112
      %v516 = vpop.permute.xlu0 %515
      %517 = vrot.lane.b32.xlu0 %v476, 112
      %v518 = vpop.permute.xlu0 %517
      %519 = vrot.lane.b32.xlu0 %v441, 104
      %v520 = vpop.permute.xlu0 %519
      %521 = vrot.lane.b32.xlu0 %v446, 104
      %v522 = vpop.permute.xlu0 %521
      %523 = vrot.lane.b32.xlu0 %v451, 104
      %v524 = vpop.permute.xlu0 %523
      %525 = vrot.lane.b32.xlu0 %v456, 104
      %v526 = vpop.permute.xlu0 %525
      %527 = vrot.lane.b32.xlu0 %v461, 104
      %v528 = vpop.permute.xlu0 %527
      %529 = vrot.lane.b32.xlu0 %v466, 104
      %v530 = vpop.permute.xlu0 %529
      %531 = vrot.lane.b32.xlu0 %v471, 104
      %v532 = vpop.permute.xlu0 %531
      %533 = vrot.lane.b32.xlu0 %v476, 104
      %v534 = vpop.permute.xlu0 %533
      %535 = vrot.lane.b32.xlu0 %v441, 96
      %v536 = vpop.permute.xlu0 %535
      %537 = vrot.lane.b32.xlu0 %v446, 96
      %v538 = vpop.permute.xlu0 %537
      %539 = vrot.lane.b32.xlu0 %v451, 96
      %v540 = vpop.permute.xlu0 %539
      %541 = vrot.lane.b32.xlu0 %v456, 96
      %v542 = vpop.permute.xlu0 %541
      %543 = vrot.lane.b32.xlu0 %v461, 96
      %v544 = vpop.permute.xlu0 %543
      %545 = vrot.lane.b32.xlu0 %v466, 96
      %v546 = vpop.permute.xlu0 %545
      %547 = vrot.lane.b32.xlu0 %v471, 96
      %v548 = vpop.permute.xlu0 %547
      %549 = vrot.lane.b32.xlu0 %v476, 96
      %v550 = vpop.permute.xlu0 %549
      %551 = vrot.lane.b32.xlu0 %v488, 96
      %v552 = vpop.permute.xlu0 %551
      %553 = vrot.lane.b32.xlu0 %v490, 96
      %v554 = vpop.permute.xlu0 %553
      %555 = vrot.lane.b32.xlu0 %v492, 96
      %v556 = vpop.permute.xlu0 %555
      %557 = vrot.lane.b32.xlu0 %v494, 96
      %v558 = vpop.permute.xlu0 %557
      %559 = vrot.lane.b32.xlu0 %v496, 96
      %v560 = vpop.permute.xlu0 %559
      %561 = vrot.lane.b32.xlu0 %v498, 96
      %v562 = vpop.permute.xlu0 %561
      %563 = vrot.lane.b32.xlu0 %v500, 96
      %v564 = vpop.permute.xlu0 %563
      %565 = vrot.lane.b32.xlu0 %v502, 96
      %v566 = vpop.permute.xlu0 %565
      %567 = vrot.lane.b32.xlu0 %v504, 96
      %v568 = vpop.permute.xlu0 %567
      %569 = vrot.lane.b32.xlu0 %v506, 96
      %v570 = vpop.permute.xlu0 %569
      %571 = vrot.lane.b32.xlu0 %v508, 96
      %v572 = vpop.permute.xlu0 %571
      %573 = vrot.lane.b32.xlu0 %v510, 96
      %v574 = vpop.permute.xlu0 %573
      %575 = vrot.lane.b32.xlu0 %v512, 96
      %v576 = vpop.permute.xlu0 %575
      %577 = vrot.lane.b32.xlu0 %v514, 96
      %v578 = vpop.permute.xlu0 %577
      %579 = vrot.lane.b32.xlu0 %v516, 96
      %v580 = vpop.permute.xlu0 %579
      %581 = vrot.lane.b32.xlu0 %v518, 96
      %v582 = vpop.permute.xlu0 %581
      %583 = vrot.lane.b32.xlu0 %v520, 96
      %v584 = vpop.permute.xlu0 %583
      %585 = vrot.lane.b32.xlu0 %v522, 96
      %v586 = vpop.permute.xlu0 %585
      %587 = vrot.lane.b32.xlu0 %v524, 96
      %v588 = vpop.permute.xlu0 %587
      %589 = vrot.lane.b32.xlu0 %v526, 96
      %v590 = vpop.permute.xlu0 %589
      %591 = vrot.lane.b32.xlu0 %v528, 96
      %v592 = vpop.permute.xlu0 %591
      %593 = vrot.lane.b32.xlu0 %v530, 96
      %v594 = vpop.permute.xlu0 %593
      %595 = vrot.lane.b32.xlu0 %v532, 96
      %v596 = vpop.permute.xlu0 %595
      %597 = vrot.lane.b32.xlu0 %v534, 96
      %v598 = vpop.permute.xlu0 %597
      %631 = vxpose.xlu0.b32.start [1/16] %v536, 128
      %632 = vxpose.xlu0.b32.cont [2/16] %v538, 128
      %633 = vxpose.xlu0.b32.cont [3/16] %v540, 128
      %634 = vxpose.xlu0.b32.cont [4/16] %v542, 128
      %635 = vxpose.xlu0.b32.cont [5/16] %v544, 128
      %636 = vxpose.xlu0.b32.cont [6/16] %v546, 128
      %637 = vxpose.xlu0.b32.cont [7/16] %v548, 128
      %638 = vxpose.xlu0.b32.cont [8/16] %v550, 128
      %639 = vxpose.xlu0.b32.cont [9/16] 0.0, 128
      %640 = vxpose.xlu0.b32.cont [10/16] 0.0, 128
      %641 = vxpose.xlu0.b32.cont [11/16] 0.0, 128
      %642 = vxpose.xlu0.b32.cont [12/16] 0.0, 128
      %643 = vxpose.xlu0.b32.cont [13/16] 0.0, 128
      %644 = vxpose.xlu0.b32.cont [14/16] 0.0, 128
      %645 = vxpose.xlu0.b32.cont [15/16] 0.0, 128
      %646 = vxpose.xlu0.b32.end [16/16] 0.0, 128
      %v647 = vpop.trf.xlu0
      %v648 = vpop.trf.xlu0
      %v649 = vpop.trf.xlu0
      %v650 = vpop.trf.xlu0
      %v651 = vpop.trf.xlu0
      %v652 = vpop.trf.xlu0
      %v653 = vpop.trf.xlu0
      %v654 = vpop.trf.xlu0
      %v655 = vpop.trf.xlu0
      %v656 = vpop.trf.xlu0
      %v657 = vpop.trf.xlu0
      %v658 = vpop.trf.xlu0
      %v659 = vpop.trf.xlu0
      %v660 = vpop.trf.xlu0
      %v661 = vpop.trf.xlu0
      %v662 = vpop.trf.xlu0
      %663 = vxpose.xlu0.b32.start [1/16] %v552, 128
      %664 = vxpose.xlu0.b32.cont [2/16] %v554, 128
      %665 = vxpose.xlu0.b32.cont [3/16] %v556, 128
      %666 = vxpose.xlu0.b32.cont [4/16] %v558, 128
      %667 = vxpose.xlu0.b32.cont [5/16] %v560, 128
      %668 = vxpose.xlu0.b32.cont [6/16] %v562, 128
      %669 = vxpose.xlu0.b32.cont [7/16] %v564, 128
      %670 = vxpose.xlu0.b32.cont [8/16] %v566, 128
      %671 = vxpose.xlu0.b32.cont [9/16] 0.0, 128
      %672 = vxpose.xlu0.b32.cont [10/16] 0.0, 128
      %673 = vxpose.xlu0.b32.cont [11/16] 0.0, 128
      %674 = vxpose.xlu0.b32.cont [12/16] 0.0, 128
      %675 = vxpose.xlu0.b32.cont [13/16] 0.0, 128
      %676 = vxpose.xlu0.b32.cont [14/16] 0.0, 128
      %677 = vxpose.xlu0.b32.cont [15/16] 0.0, 128
      %678 = vxpose.xlu0.b32.end [16/16] 0.0, 128
      %v679 = vpop.trf.xlu0
      %v680 = vpop.trf.xlu0
      %v681 = vpop.trf.xlu0
      %v682 = vpop.trf.xlu0
      %v683 = vpop.trf.xlu0
      %v684 = vpop.trf.xlu0
      %v685 = vpop.trf.xlu0
      %v686 = vpop.trf.xlu0
      %v687 = vpop.trf.xlu0
      %v688 = vpop.trf.xlu0
      %v689 = vpop.trf.xlu0
      %v690 = vpop.trf.xlu0
      %v691 = vpop.trf.xlu0
      %v692 = vpop.trf.xlu0
      %v693 = vpop.trf.xlu0
      %v694 = vpop.trf.xlu0
      %695 = vxpose.xlu0.b32.start [1/16] %v568, 128
      %696 = vxpose.xlu0.b32.cont [2/16] %v570, 128
      %697 = vxpose.xlu0.b32.cont [3/16] %v572, 128
      %698 = vxpose.xlu0.b32.cont [4/16] %v574, 128
      %699 = vxpose.xlu0.b32.cont [5/16] %v576, 128
      %700 = vxpose.xlu0.b32.cont [6/16] %v578, 128
      %701 = vxpose.xlu0.b32.cont [7/16] %v580, 128
      %702 = vxpose.xlu0.b32.cont [8/16] %v582, 128
      %703 = vxpose.xlu0.b32.cont [9/16] 0.0, 128
      %704 = vxpose.xlu0.b32.cont [10/16] 0.0, 128
      %705 = vxpose.xlu0.b32.cont [11/16] 0.0, 128
      %706 = vxpose.xlu0.b32.cont [12/16] 0.0, 128
      %707 = vxpose.xlu0.b32.cont [13/16] 0.0, 128
      %708 = vxpose.xlu0.b32.cont [14/16] 0.0, 128
      %709 = vxpose.xlu0.b32.cont [15/16] 0.0, 128
      %710 = vxpose.xlu0.b32.end [16/16] 0.0, 128
      %v711 = vpop.trf.xlu0
      %v712 = vpop.trf.xlu0
      %v713 = vpop.trf.xlu0
      %v714 = vpop.trf.xlu0
      %v715 = vpop.trf.xlu0
      %v716 = vpop.trf.xlu0
      %v717 = vpop.trf.xlu0
      %v718 = vpop.trf.xlu0
      %v719 = vpop.trf.xlu0
      %v720 = vpop.trf.xlu0
      %v721 = vpop.trf.xlu0
      %v722 = vpop.trf.xlu0
      %v723 = vpop.trf.xlu0
      %v724 = vpop.trf.xlu0
      %v725 = vpop.trf.xlu0
      %v726 = vpop.trf.xlu0
      %727 = vxpose.xlu0.b32.start [1/16] %v584, 128
      %728 = vxpose.xlu0.b32.cont [2/16] %v586, 128
      %729 = vxpose.xlu0.b32.cont [3/16] %v588, 128
      %730 = vxpose.xlu0.b32.cont [4/16] %v590, 128
      %731 = vxpose.xlu0.b32.cont [5/16] %v592, 128
      %732 = vxpose.xlu0.b32.cont [6/16] %v594, 128
      %733 = vxpose.xlu0.b32.cont [7/16] %v596, 128
      %734 = vxpose.xlu0.b32.cont [8/16] %v598, 128
      %735 = vxpose.xlu0.b32.cont [9/16] 0.0, 128
      %736 = vxpose.xlu0.b32.cont [10/16] 0.0, 128
      %737 = vxpose.xlu0.b32.cont [11/16] 0.0, 128
      %738 = vxpose.xlu0.b32.cont [12/16] 0.0, 128
      %739 = vxpose.xlu0.b32.cont [13/16] 0.0, 128
      %740 = vxpose.xlu0.b32.cont [14/16] 0.0, 128
      %741 = vxpose.xlu0.b32.cont [15/16] 0.0, 128
      %742 = vxpose.xlu0.b32.end [16/16] 0.0, 128
      %v743 = vpop.trf.xlu0
      %v744 = vpop.trf.xlu0
      %v745 = vpop.trf.xlu0
      %v746 = vpop.trf.xlu0
      %v747 = vpop.trf.xlu0
      %v748 = vpop.trf.xlu0
      %v749 = vpop.trf.xlu0
      %v750 = vpop.trf.xlu0
      %v751 = vpop.trf.xlu0
      %v752 = vpop.trf.xlu0
      %v753 = vpop.trf.xlu0
      %v754 = vpop.trf.xlu0
      %v755 = vpop.trf.xlu0
      %v756 = vpop.trf.xlu0
      %v757 = vpop.trf.xlu0
      %v758 = vpop.trf.xlu0
      %vm759 = vcmask 64512
      %v760 = vsel %vm759, %v441, 0
      %v762 = vsel %vm759, %v446, 0
      %v764 = vsel %vm759, %v451, 0
      %v766 = vsel %vm759, %v456, 0
      %v768 = vsel %vm759, %v461, 0
      %v770 = vsel %vm759, %v466, 0
      %v772 = vsel %vm759, %v471, 0
      %v774 = vsel %vm759, %v476, 0
      %776 = vmatprep.subr.mxu0 0.0
      %777 = vmatpush1.msra.mxu0 0.0
      %778 = vmatprep.subr.mxu0 0.0
      %779 = vmatpush1.msra.mxu0 0.0
      %780 = vmatprep.subr.mxu0 0.0
      %781 = vmatpush1.msra.mxu0 0.0
      %782 = vmatprep.subr.mxu0 0.0
      %783 = vmatpush1.msra.mxu0 0.0
      %784 = vmatprep.subr.mxu0 0.0
      %785 = vmatpush1.msra.mxu0 0.0
      %786 = vmatprep.subr.mxu0 0.0
      %787 = vmatpush1.msra.mxu0 0.0
      %788 = vmatprep.subr.mxu0 0.0
      %789 = vmatpush1.msra.mxu0 0.0
      %790 = vmatprep.subr.mxu0 0.0
      %791 = vmatpush1.msra.mxu0 0.0
      %792 = vmatprep.subr.mxu0 0.0
      %793 = vmatpush1.msra.mxu0 0.0
      %794 = vmatprep.subr.mxu0 0.0
      %795 = vmatpush1.msra.mxu0 0.0
      %796 = vmatprep.subr.mxu0 0.0
      %797 = vmatpush1.msra.mxu0 0.0
      %798 = vmatprep.subr.mxu0 0.0
      %799 = vmatpush1.msra.mxu0 0.0
      %800 = vmatprep.subr.mxu0 0.0
      %801 = vmatpush1.msra.mxu0 0.0
      %802 = vmatprep.subr.mxu0 0.0
      %803 = vmatpush1.msra.mxu0 0.0
      %804 = vmatprep.subr.mxu0 0.0
      %805 = vmatpush1.msra.mxu0 0.0
      %806 = vmatprep.subr.mxu0 0.0
      %807 = vmatpush1.msra.mxu0 %v647
      %808 = vmatprep.subr.mxu0 0.0
      %809 = vmatpush2.msra.mxu0 0.0
      %810 = vmatprep.subr.mxu0 0.0
      %811 = vmatpush2.msra.mxu0 0.0
      %812 = vmatprep.subr.mxu0 0.0
      %813 = vmatpush2.msra.mxu0 0.0
      %814 = vmatprep.subr.mxu0 0.0
      %815 = vmatpush2.msra.mxu0 0.0
      %816 = vmatprep.subr.mxu0 0.0
      %817 = vmatpush2.msra.mxu0 0.0
      %818 = vmatprep.subr.mxu0 0.0
      %819 = vmatpush2.msra.mxu0 0.0
      %820 = vmatprep.subr.mxu0 0.0
      %821 = vmatpush2.msra.mxu0 0.0
      %822 = vmatprep.subr.mxu0 0.0
      %823 = vmatpush2.msra.mxu0 0.0
      %824 = vmatprep.subr.mxu0 0.0
      %825 = vmatpush2.msra.mxu0 0.0
      %826 = vmatprep.subr.mxu0 0.0
      %827 = vmatpush2.msra.mxu0 0.0
      %828 = vmatprep.subr.mxu0 0.0
      %829 = vmatpush2.msra.mxu0 0.0
      %830 = vmatprep.subr.mxu0 0.0
      %831 = vmatpush2.msra.mxu0 0.0
      %832 = vmatprep.subr.mxu0 0.0
      %833 = vmatpush2.msra.mxu0 0.0
      %834 = vmatprep.subr.mxu0 0.0
      %835 = vmatpush2.msra.mxu0 0.0
      %836 = vmatprep.subr.mxu0 0.0
      %837 = vmatpush2.msra.mxu0 0.0
      %838 = vmatprep.subr.mxu0 0.0
      %839 = vmatpush2.msra.mxu0 0.0
      %840 = vmatprep.mubr.f32.mxu0 0.0
      %841 = vmatmul.mubr.f32.gmra.mxu0 %v760
      %v842 = vpop.f32.mrf.mxu0
      %v843 = vadd.f32 0.0, %v842
      %v844 = vpop.f32.mrf.mxu0
      %845 = vmatprep.mubr.f32.mxu0 0.0
      %846 = vmatmul.mubr.f32.gmra.mxu0 %v762
      %v847 = vpop.f32.mrf.mxu0
      %v848 = vadd.f32 0.0, %v847
      %v849 = vpop.f32.mrf.mxu0
      %850 = vmatprep.mubr.f32.mxu0 0.0
      %851 = vmatmul.mubr.f32.gmra.mxu0 %v764
      %v852 = vpop.f32.mrf.mxu0
      %v853 = vadd.f32 0.0, %v852
      %v854 = vpop.f32.mrf.mxu0
      %855 = vmatprep.mubr.f32.mxu0 0.0
      %856 = vmatmul.mubr.f32.gmra.mxu0 %v766
      %v857 = vpop.f32.mrf.mxu0
      %v858 = vadd.f32 0.0, %v857
      %v859 = vpop.f32.mrf.mxu0
      %860 = vmatprep.mubr.f32.mxu0 0.0
      %861 = vmatmul.mubr.f32.gmra.mxu0 %v768
      %v862 = vpop.f32.mrf.mxu0
      %v863 = vadd.f32 0.0, %v862
      %v864 = vpop.f32.mrf.mxu0
      %865 = vmatprep.mubr.f32.mxu0 0.0
      %866 = vmatmul.mubr.f32.gmra.mxu0 %v770
      %v867 = vpop.f32.mrf.mxu0
      %v868 = vadd.f32 0.0, %v867
      %v869 = vpop.f32.mrf.mxu0
      %870 = vmatprep.mubr.f32.mxu0 0.0
      %871 = vmatmul.mubr.f32.gmra.mxu0 %v772
      %v872 = vpop.f32.mrf.mxu0
      %v873 = vadd.f32 0.0, %v872
      %v874 = vpop.f32.mrf.mxu0
      %875 = vmatprep.mubr.f32.mxu0 0.0
      %876 = vmatmul.mubr.f32.gmra.mxu0 %v774
      %v877 = vpop.f32.mrf.mxu0
      %v878 = vadd.f32 0.0, %v877
      %v879 = vpop.f32.mrf.mxu0
      %880 = vdwg.mxu0
      %v881 = vsel %vm759, %v488, 0
      %v883 = vsel %vm759, %v490, 0
      %v885 = vsel %vm759, %v492, 0
      %v887 = vsel %vm759, %v494, 0
      %v889 = vsel %vm759, %v496, 0
      %v891 = vsel %vm759, %v498, 0
      %v893 = vsel %vm759, %v500, 0
      %v895 = vsel %vm759, %v502, 0
      %897 = vmatprep.subr.mxu0 0.0
      %898 = vmatpush1.msra.mxu0 0.0
      %899 = vmatprep.subr.mxu0 0.0
      %900 = vmatpush1.msra.mxu0 0.0
      %901 = vmatprep.subr.mxu0 0.0
      %902 = vmatpush1.msra.mxu0 0.0
      %903 = vmatprep.subr.mxu0 0.0
      %904 = vmatpush1.msra.mxu0 0.0
      %905 = vmatprep.subr.mxu0 0.0
      %906 = vmatpush1.msra.mxu0 0.0
      %907 = vmatprep.subr.mxu0 0.0
      %908 = vmatpush1.msra.mxu0 0.0
      %909 = vmatprep.subr.mxu0 0.0
      %910 = vmatpush1.msra.mxu0 0.0
      %911 = vmatprep.subr.mxu0 0.0
      %912 = vmatpush1.msra.mxu0 0.0
      %913 = vmatprep.subr.mxu0 0.0
      %914 = vmatpush1.msra.mxu0 0.0
      %915 = vmatprep.subr.mxu0 0.0
      %916 = vmatpush1.msra.mxu0 0.0
      %917 = vmatprep.subr.mxu0 0.0
      %918 = vmatpush1.msra.mxu0 0.0
      %919 = vmatprep.subr.mxu0 0.0
      %920 = vmatpush1.msra.mxu0 0.0
      %921 = vmatprep.subr.mxu0 0.0
      %922 = vmatpush1.msra.mxu0 0.0
      %923 = vmatprep.subr.mxu0 0.0
      %924 = vmatpush1.msra.mxu0 0.0
      %925 = vmatprep.subr.mxu0 0.0
      %926 = vmatpush1.msra.mxu0 0.0
      %927 = vmatprep.subr.mxu0 0.0
      %928 = vmatpush1.msra.mxu0 %v679
      %929 = vmatprep.subr.mxu0 0.0
      %930 = vmatpush2.msra.mxu0 0.0
      %931 = vmatprep.subr.mxu0 0.0
      %932 = vmatpush2.msra.mxu0 0.0
      %933 = vmatprep.subr.mxu0 0.0
      %934 = vmatpush2.msra.mxu0 0.0
      %935 = vmatprep.subr.mxu0 0.0
      %936 = vmatpush2.msra.mxu0 0.0
      %937 = vmatprep.subr.mxu0 0.0
      %938 = vmatpush2.msra.mxu0 0.0
      %939 = vmatprep.subr.mxu0 0.0
      %940 = vmatpush2.msra.mxu0 0.0
      %941 = vmatprep.subr.mxu0 0.0
      %942 = vmatpush2.msra.mxu0 0.0
      %943 = vmatprep.subr.mxu0 0.0
      %944 = vmatpush2.msra.mxu0 0.0
      %945 = vmatprep.subr.mxu0 0.0
      %946 = vmatpush2.msra.mxu0 0.0
      %947 = vmatprep.subr.mxu0 0.0
      %948 = vmatpush2.msra.mxu0 0.0
      %949 = vmatprep.subr.mxu0 0.0
      %950 = vmatpush2.msra.mxu0 0.0
      %951 = vmatprep.subr.mxu0 0.0
      %952 = vmatpush2.msra.mxu0 0.0
      %953 = vmatprep.subr.mxu0 0.0
      %954 = vmatpush2.msra.mxu0 0.0
      %955 = vmatprep.subr.mxu0 0.0
      %956 = vmatpush2.msra.mxu0 0.0
      %957 = vmatprep.subr.mxu0 0.0
      %958 = vmatpush2.msra.mxu0 0.0
      %959 = vmatprep.subr.mxu0 0.0
      %960 = vmatpush2.msra.mxu0 0.0
      %961 = vmatprep.mubr.f32.mxu0 0.0
      %962 = vmatmul.mubr.f32.gmra.mxu0 %v881
      %v963 = vpop.f32.mrf.mxu0
      %v964 = vadd.f32 0.0, %v963
      %v965 = vpop.f32.mrf.mxu0
      %966 = vmatprep.mubr.f32.mxu0 0.0
      %967 = vmatmul.mubr.f32.gmra.mxu0 %v883
      %v968 = vpop.f32.mrf.mxu0
      %v969 = vadd.f32 0.0, %v968
      %v970 = vpop.f32.mrf.mxu0
      %971 = vmatprep.mubr.f32.mxu0 0.0
      %972 = vmatmul.mubr.f32.gmra.mxu0 %v885
      %v973 = vpop.f32.mrf.mxu0
      %v974 = vadd.f32 0.0, %v973
      %v975 = vpop.f32.mrf.mxu0
      %976 = vmatprep.mubr.f32.mxu0 0.0
      %977 = vmatmul.mubr.f32.gmra.mxu0 %v887
      %v978 = vpop.f32.mrf.mxu0
      %v979 = vadd.f32 0.0, %v978
      %v980 = vpop.f32.mrf.mxu0
      %981 = vmatprep.mubr.f32.mxu0 0.0
      %982 = vmatmul.mubr.f32.gmra.mxu0 %v889
      %v983 = vpop.f32.mrf.mxu0
      %v984 = vadd.f32 0.0, %v983
      %v985 = vpop.f32.mrf.mxu0
      %986 = vmatprep.mubr.f32.mxu0 0.0
      %987 = vmatmul.mubr.f32.gmra.mxu0 %v891
      %v988 = vpop.f32.mrf.mxu0
      %v989 = vadd.f32 0.0, %v988
      %v990 = vpop.f32.mrf.mxu0
      %991 = vmatprep.mubr.f32.mxu0 0.0
      %992 = vmatmul.mubr.f32.gmra.mxu0 %v893
      %v993 = vpop.f32.mrf.mxu0
      %v994 = vadd.f32 0.0, %v993
      %v995 = vpop.f32.mrf.mxu0
      %996 = vmatprep.mubr.f32.mxu0 0.0
      %997 = vmatmul.mubr.f32.gmra.mxu0 %v895
      %v998 = vpop.f32.mrf.mxu0
      %v999 = vadd.f32 0.0, %v998
      %v1000 = vpop.f32.mrf.mxu0
      %1001 = vdwg.mxu0
      %v1002 = vsel %vm759, %v504, 0
      %v1004 = vsel %vm759, %v506, 0
      %v1006 = vsel %vm759, %v508, 0
      %v1008 = vsel %vm759, %v510, 0
      %v1010 = vsel %vm759, %v512, 0
      %v1012 = vsel %vm759, %v514, 0
      %v1014 = vsel %vm759, %v516, 0
      %v1016 = vsel %vm759, %v518, 0
      %1018 = vmatprep.subr.mxu0 0.0
      %1019 = vmatpush1.msra.mxu0 0.0
      %1020 = vmatprep.subr.mxu0 0.0
      %1021 = vmatpush1.msra.mxu0 0.0
      %1022 = vmatprep.subr.mxu0 0.0
      %1023 = vmatpush1.msra.mxu0 0.0
      %1024 = vmatprep.subr.mxu0 0.0
      %1025 = vmatpush1.msra.mxu0 0.0
      %1026 = vmatprep.subr.mxu0 0.0
      %1027 = vmatpush1.msra.mxu0 0.0
      %1028 = vmatprep.subr.mxu0 0.0
      %1029 = vmatpush1.msra.mxu0 0.0
      %1030 = vmatprep.subr.mxu0 0.0
      %1031 = vmatpush1.msra.mxu0 0.0
      %1032 = vmatprep.subr.mxu0 0.0
      %1033 = vmatpush1.msra.mxu0 0.0
      %1034 = vmatprep.subr.mxu0 0.0
      %1035 = vmatpush1.msra.mxu0 0.0
      %1036 = vmatprep.subr.mxu0 0.0
      %1037 = vmatpush1.msra.mxu0 0.0
      %1038 = vmatprep.subr.mxu0 0.0
      %1039 = vmatpush1.msra.mxu0 0.0
      %1040 = vmatprep.subr.mxu0 0.0
      %1041 = vmatpush1.msra.mxu0 0.0
      %1042 = vmatprep.subr.mxu0 0.0
      %1043 = vmatpush1.msra.mxu0 0.0
      %1044 = vmatprep.subr.mxu0 0.0
      %1045 = vmatpush1.msra.mxu0 0.0
      %1046 = vmatprep.subr.mxu0 0.0
      %1047 = vmatpush1.msra.mxu0 0.0
      %1048 = vmatprep.subr.mxu0 0.0
      %1049 = vmatpush1.msra.mxu0 %v711
      %1050 = vmatprep.subr.mxu0 0.0
      %1051 = vmatpush2.msra.mxu0 0.0
      %1052 = vmatprep.subr.mxu0 0.0
      %1053 = vmatpush2.msra.mxu0 0.0
      %1054 = vmatprep.subr.mxu0 0.0
      %1055 = vmatpush2.msra.mxu0 0.0
      %1056 = vmatprep.subr.mxu0 0.0
      %1057 = vmatpush2.msra.mxu0 0.0
      %1058 = vmatprep.subr.mxu0 0.0
      %1059 = vmatpush2.msra.mxu0 0.0
      %1060 = vmatprep.subr.mxu0 0.0
      %1061 = vmatpush2.msra.mxu0 0.0
      %1062 = vmatprep.subr.mxu0 0.0
      %1063 = vmatpush2.msra.mxu0 0.0
      %1064 = vmatprep.subr.mxu0 0.0
      %1065 = vmatpush2.msra.mxu0 0.0
      %1066 = vmatprep.subr.mxu0 0.0
      %1067 = vmatpush2.msra.mxu0 0.0
      %1068 = vmatprep.subr.mxu0 0.0
      %1069 = vmatpush2.msra.mxu0 0.0
      %1070 = vmatprep.subr.mxu0 0.0
      %1071 = vmatpush2.msra.mxu0 0.0
      %1072 = vmatprep.subr.mxu0 0.0
      %1073 = vmatpush2.msra.mxu0 0.0
      %1074 = vmatprep.subr.mxu0 0.0
      %1075 = vmatpush2.msra.mxu0 0.0
      %1076 = vmatprep.subr.mxu0 0.0
      %1077 = vmatpush2.msra.mxu0 0.0
      %1078 = vmatprep.subr.mxu0 0.0
      %1079 = vmatpush2.msra.mxu0 0.0
      %1080 = vmatprep.subr.mxu0 0.0
      %1081 = vmatpush2.msra.mxu0 0.0
      %1082 = vmatprep.mubr.f32.mxu0 0.0
      %1083 = vmatmul.mubr.f32.gmra.mxu0 %v1002
      %v1084 = vpop.f32.mrf.mxu0
      %v1085 = vadd.f32 0.0, %v1084
      %v1086 = vpop.f32.mrf.mxu0
      %1087 = vmatprep.mubr.f32.mxu0 0.0
      %1088 = vmatmul.mubr.f32.gmra.mxu0 %v1004
      %v1089 = vpop.f32.mrf.mxu0
      %v1090 = vadd.f32 0.0, %v1089
      %v1091 = vpop.f32.mrf.mxu0
      %1092 = vmatprep.mubr.f32.mxu0 0.0
      %1093 = vmatmul.mubr.f32.gmra.mxu0 %v1006
      %v1094 = vpop.f32.mrf.mxu0
      %v1095 = vadd.f32 0.0, %v1094
      %v1096 = vpop.f32.mrf.mxu0
      %1097 = vmatprep.mubr.f32.mxu0 0.0
      %1098 = vmatmul.mubr.f32.gmra.mxu0 %v1008
      %v1099 = vpop.f32.mrf.mxu0
      %v1100 = vadd.f32 0.0, %v1099
      %v1101 = vpop.f32.mrf.mxu0
      %1102 = vmatprep.mubr.f32.mxu0 0.0
      %1103 = vmatmul.mubr.f32.gmra.mxu0 %v1010
      %v1104 = vpop.f32.mrf.mxu0
      %v1105 = vadd.f32 0.0, %v1104
      %v1106 = vpop.f32.mrf.mxu0
      %1107 = vmatprep.mubr.f32.mxu0 0.0
      %1108 = vmatmul.mubr.f32.gmra.mxu0 %v1012
      %v1109 = vpop.f32.mrf.mxu0
      %v1110 = vadd.f32 0.0, %v1109
      %v1111 = vpop.f32.mrf.mxu0
      %1112 = vmatprep.mubr.f32.mxu0 0.0
      %1113 = vmatmul.mubr.f32.gmra.mxu0 %v1014
      %v1114 = vpop.f32.mrf.mxu0
      %v1115 = vadd.f32 0.0, %v1114
      %v1116 = vpop.f32.mrf.mxu0
      %1117 = vmatprep.mubr.f32.mxu0 0.0
      %1118 = vmatmul.mubr.f32.gmra.mxu0 %v1016
      %v1119 = vpop.f32.mrf.mxu0
      %v1120 = vadd.f32 0.0, %v1119
      %v1121 = vpop.f32.mrf.mxu0
      %1122 = vdwg.mxu0
      %v1123 = vsel %vm759, %v520, 0
      %v1125 = vsel %vm759, %v522, 0
      %v1127 = vsel %vm759, %v524, 0
      %v1129 = vsel %vm759, %v526, 0
      %v1131 = vsel %vm759, %v528, 0
      %v1133 = vsel %vm759, %v530, 0
      %v1135 = vsel %vm759, %v532, 0
      %v1137 = vsel %vm759, %v534, 0
      %1139 = vmatprep.subr.mxu0 0.0
      %1140 = vmatpush1.msra.mxu0 0.0
      %1141 = vmatprep.subr.mxu0 0.0
      %1142 = vmatpush1.msra.mxu0 0.0
      %1143 = vmatprep.subr.mxu0 0.0
      %1144 = vmatpush1.msra.mxu0 0.0
      %1145 = vmatprep.subr.mxu0 0.0
      %1146 = vmatpush1.msra.mxu0 0.0
      %1147 = vmatprep.subr.mxu0 0.0
      %1148 = vmatpush1.msra.mxu0 0.0
      %1149 = vmatprep.subr.mxu0 0.0
      %1150 = vmatpush1.msra.mxu0 0.0
      %1151 = vmatprep.subr.mxu0 0.0
      %1152 = vmatpush1.msra.mxu0 0.0
      %1153 = vmatprep.subr.mxu0 0.0
      %1154 = vmatpush1.msra.mxu0 0.0
      %1155 = vmatprep.subr.mxu0 0.0
      %1156 = vmatpush1.msra.mxu0 0.0
      %1157 = vmatprep.subr.mxu0 0.0
      %1158 = vmatpush1.msra.mxu0 0.0
      %1159 = vmatprep.subr.mxu0 0.0
      %1160 = vmatpush1.msra.mxu0 0.0
      %1161 = vmatprep.subr.mxu0 0.0
      %1162 = vmatpush1.msra.mxu0 0.0
      %1163 = vmatprep.subr.mxu0 0.0
      %1164 = vmatpush1.msra.mxu0 0.0
      %1165 = vmatprep.subr.mxu0 0.0
      %1166 = vmatpush1.msra.mxu0 0.0
      %1167 = vmatprep.subr.mxu0 0.0
      %1168 = vmatpush1.msra.mxu0 0.0
      %1169 = vmatprep.subr.mxu0 0.0
      %1170 = vmatpush1.msra.mxu0 %v743
      %1171 = vmatprep.subr.mxu0 0.0
      %1172 = vmatpush2.msra.mxu0 0.0
      %1173 = vmatprep.subr.mxu0 0.0
      %1174 = vmatpush2.msra.mxu0 0.0
      %1175 = vmatprep.subr.mxu0 0.0
      %1176 = vmatpush2.msra.mxu0 0.0
      %1177 = vmatprep.subr.mxu0 0.0
      %1178 = vmatpush2.msra.mxu0 0.0
      %1179 = vmatprep.subr.mxu0 0.0
      %1180 = vmatpush2.msra.mxu0 0.0
      %1181 = vmatprep.subr.mxu0 0.0
      %1182 = vmatpush2.msra.mxu0 0.0
      %1183 = vmatprep.subr.mxu0 0.0
      %1184 = vmatpush2.msra.mxu0 0.0
      %1185 = vmatprep.subr.mxu0 0.0
      %1186 = vmatpush2.msra.mxu0 0.0
      %1187 = vmatprep.subr.mxu0 0.0
      %1188 = vmatpush2.msra.mxu0 0.0
      %1189 = vmatprep.subr.mxu0 0.0
      %1190 = vmatpush2.msra.mxu0 0.0
      %1191 = vmatprep.subr.mxu0 0.0
      %1192 = vmatpush2.msra.mxu0 0.0
      %1193 = vmatprep.subr.mxu0 0.0
      %1194 = vmatpush2.msra.mxu0 0.0
      %1195 = vmatprep.subr.mxu0 0.0
      %1196 = vmatpush2.msra.mxu0 0.0
      %1197 = vmatprep.subr.mxu0 0.0
      %1198 = vmatpush2.msra.mxu0 0.0
      %1199 = vmatprep.subr.mxu0 0.0
      %1200 = vmatpush2.msra.mxu0 0.0
      %1201 = vmatprep.subr.mxu0 0.0
      %1202 = vmatpush2.msra.mxu0 0.0
      %1203 = vmatprep.mubr.f32.mxu0 0.0
      %1204 = vmatmul.mubr.f32.gmra.mxu0 %v1123
      %v1205 = vpop.f32.mrf.mxu0
      %v1206 = vadd.f32 0.0, %v1205
      %v1207 = vpop.f32.mrf.mxu0
      %1208 = vmatprep.mubr.f32.mxu0 0.0
      %1209 = vmatmul.mubr.f32.gmra.mxu0 %v1125
      %v1210 = vpop.f32.mrf.mxu0
      %v1211 = vadd.f32 0.0, %v1210
      %v1212 = vpop.f32.mrf.mxu0
      %1213 = vmatprep.mubr.f32.mxu0 0.0
      %1214 = vmatmul.mubr.f32.gmra.mxu0 %v1127
      %v1215 = vpop.f32.mrf.mxu0
      %v1216 = vadd.f32 0.0, %v1215
      %v1217 = vpop.f32.mrf.mxu0
      %1218 = vmatprep.mubr.f32.mxu0 0.0
      %1219 = vmatmul.mubr.f32.gmra.mxu0 %v1129
      %v1220 = vpop.f32.mrf.mxu0
      %v1221 = vadd.f32 0.0, %v1220
      %v1222 = vpop.f32.mrf.mxu0
      %1223 = vmatprep.mubr.f32.mxu0 0.0
      %1224 = vmatmul.mubr.f32.gmra.mxu0 %v1131
      %v1225 = vpop.f32.mrf.mxu0
      %v1226 = vadd.f32 0.0, %v1225
      %v1227 = vpop.f32.mrf.mxu0
      %1228 = vmatprep.mubr.f32.mxu0 0.0
      %1229 = vmatmul.mubr.f32.gmra.mxu0 %v1133
      %v1230 = vpop.f32.mrf.mxu0
      %v1231 = vadd.f32 0.0, %v1230
      %v1232 = vpop.f32.mrf.mxu0
      %1233 = vmatprep.mubr.f32.mxu0 0.0
      %1234 = vmatmul.mubr.f32.gmra.mxu0 %v1135
      %v1235 = vpop.f32.mrf.mxu0
      %v1236 = vadd.f32 0.0, %v1235
      %v1237 = vpop.f32.mrf.mxu0
      %1238 = vmatprep.mubr.f32.mxu0 0.0
      %1239 = vmatmul.mubr.f32.gmra.mxu0 %v1137
      %v1240 = vpop.f32.mrf.mxu0
      %v1241 = vadd.f32 0.0, %v1240
      %v1242 = vpop.f32.mrf.mxu0
      %1243 = vdwg.mxu0
      %vm1244 = vcmask 523264
      %v1245 = vsel %vm1244, %v843, -inf
      %1246 = vmax.xlane.f32.xlu0 %v1245
      %v1247 = vpop.xlane.xlu0 %1246
      %v1248 = vsel %vm1244, %v848, -inf
      %1249 = vmax.xlane.f32.xlu0 %v1248
      %v1250 = vpop.xlane.xlu0 %1249
      %v1251 = vsel %vm1244, %v853, -inf
      %1252 = vmax.xlane.f32.xlu0 %v1251
      %v1253 = vpop.xlane.xlu0 %1252
      %v1254 = vsel %vm1244, %v858, -inf
      %1255 = vmax.xlane.f32.xlu0 %v1254
      %v1256 = vpop.xlane.xlu0 %1255
      %v1257 = vsel %vm1244, %v863, -inf
      %1258 = vmax.xlane.f32.xlu0 %v1257
      %v1259 = vpop.xlane.xlu0 %1258
      %v1260 = vsel %vm1244, %v868, -inf
      %1261 = vmax.xlane.f32.xlu0 %v1260
      %v1262 = vpop.xlane.xlu0 %1261
      %v1263 = vsel %vm1244, %v873, -inf
      %1264 = vmax.xlane.f32.xlu0 %v1263
      %v1265 = vpop.xlane.xlu0 %1264
      %v1266 = vsel %vm1244, %v878, -inf
      %1267 = vmax.xlane.f32.xlu0 %v1266
      %v1268 = vpop.xlane.xlu0 %1267
      %v1269 = vsel %vm1244, %v964, -inf
      %1270 = vmax.xlane.f32.xlu0 %v1269
      %v1271 = vpop.xlane.xlu0 %1270
      %v1272 = vsel %vm1244, %v969, -inf
      %1273 = vmax.xlane.f32.xlu0 %v1272
      %v1274 = vpop.xlane.xlu0 %1273
      %v1275 = vsel %vm1244, %v974, -inf
      %1276 = vmax.xlane.f32.xlu0 %v1275
      %v1277 = vpop.xlane.xlu0 %1276
      %v1278 = vsel %vm1244, %v979, -inf
      %1279 = vmax.xlane.f32.xlu0 %v1278
      %v1280 = vpop.xlane.xlu0 %1279
      %v1281 = vsel %vm1244, %v984, -inf
      %1282 = vmax.xlane.f32.xlu0 %v1281
      %v1283 = vpop.xlane.xlu0 %1282
      %v1284 = vsel %vm1244, %v989, -inf
      %1285 = vmax.xlane.f32.xlu0 %v1284
      %v1286 = vpop.xlane.xlu0 %1285
      %v1287 = vsel %vm1244, %v994, -inf
      %1288 = vmax.xlane.f32.xlu0 %v1287
      %v1289 = vpop.xlane.xlu0 %1288
      %v1290 = vsel %vm1244, %v999, -inf
      %1291 = vmax.xlane.f32.xlu0 %v1290
      %v1292 = vpop.xlane.xlu0 %1291
      %v1293 = vsel %vm1244, %v1085, -inf
      %1294 = vmax.xlane.f32.xlu0 %v1293
      %v1295 = vpop.xlane.xlu0 %1294
      %v1296 = vsel %vm1244, %v1090, -inf
      %1297 = vmax.xlane.f32.xlu0 %v1296
      %v1298 = vpop.xlane.xlu0 %1297
      %v1299 = vsel %vm1244, %v1095, -inf
      %1300 = vmax.xlane.f32.xlu0 %v1299
      %v1301 = vpop.xlane.xlu0 %1300
      %v1302 = vsel %vm1244, %v1100, -inf
      %1303 = vmax.xlane.f32.xlu0 %v1302
      %v1304 = vpop.xlane.xlu0 %1303
      %v1305 = vsel %vm1244, %v1105, -inf
      %1306 = vmax.xlane.f32.xlu0 %v1305
      %v1307 = vpop.xlane.xlu0 %1306
      %v1308 = vsel %vm1244, %v1110, -inf
      %1309 = vmax.xlane.f32.xlu0 %v1308
      %v1310 = vpop.xlane.xlu0 %1309
      %v1311 = vsel %vm1244, %v1115, -inf
      %1312 = vmax.xlane.f32.xlu0 %v1311
      %v1313 = vpop.xlane.xlu0 %1312
      %v1314 = vsel %vm1244, %v1120, -inf
      %1315 = vmax.xlane.f32.xlu0 %v1314
      %v1316 = vpop.xlane.xlu0 %1315
      %v1317 = vsel %vm1244, %v1206, -inf
      %1318 = vmax.xlane.f32.xlu0 %v1317
      %v1319 = vpop.xlane.xlu0 %1318
      %v1320 = vsel %vm1244, %v1211, -inf
      %1321 = vmax.xlane.f32.xlu0 %v1320
      %v1322 = vpop.xlane.xlu0 %1321
      %v1323 = vsel %vm1244, %v1216, -inf
      %1324 = vmax.xlane.f32.xlu0 %v1323
      %v1325 = vpop.xlane.xlu0 %1324
      %v1326 = vsel %vm1244, %v1221, -inf
      %1327 = vmax.xlane.f32.xlu0 %v1326
      %v1328 = vpop.xlane.xlu0 %1327
      %v1329 = vsel %vm1244, %v1226, -inf
      %1330 = vmax.xlane.f32.xlu0 %v1329
      %v1331 = vpop.xlane.xlu0 %1330
      %v1332 = vsel %vm1244, %v1231, -inf
      %1333 = vmax.xlane.f32.xlu0 %v1332
      %v1334 = vpop.xlane.xlu0 %1333
      %v1335 = vsel %vm1244, %v1236, -inf
      %1336 = vmax.xlane.f32.xlu0 %v1335
      %v1337 = vpop.xlane.xlu0 %1336
      %v1338 = vsel %vm1244, %v1241, -inf
      %1339 = vmax.xlane.f32.xlu0 %v1338
      %v1340 = vpop.xlane.xlu0 %1339
      %v1341 = vsub.f32 %v843, %v1247
      %v1342 = vsub.f32 %v848, %v1250
      %v1343 = vsub.f32 %v853, %v1253
      %v1344 = vsub.f32 %v858, %v1256
      %v1345 = vsub.f32 %v863, %v1259
      %v1346 = vsub.f32 %v868, %v1262
      %v1347 = vsub.f32 %v873, %v1265
      %v1348 = vsub.f32 %v878, %v1268
      %v1349 = vsub.f32 %v964, %v1271
      %v1350 = vsub.f32 %v969, %v1274
      %v1351 = vsub.f32 %v974, %v1277
      %v1352 = vsub.f32 %v979, %v1280
      %v1353 = vsub.f32 %v984, %v1283
      %v1354 = vsub.f32 %v989, %v1286
      %v1355 = vsub.f32 %v994, %v1289
      %v1356 = vsub.f32 %v999, %v1292
      %v1357 = vsub.f32 %v1085, %v1295
      %v1358 = vsub.f32 %v1090, %v1298
      %v1359 = vsub.f32 %v1095, %v1301
      %v1360 = vsub.f32 %v1100, %v1304
      %v1361 = vsub.f32 %v1105, %v1307
      %v1362 = vsub.f32 %v1110, %v1310
      %v1363 = vsub.f32 %v1115, %v1313
      %v1364 = vsub.f32 %v1120, %v1316
      %v1365 = vsub.f32 %v1206, %v1319
      %v1366 = vsub.f32 %v1211, %v1322
      %v1367 = vsub.f32 %v1216, %v1325
      %v1368 = vsub.f32 %v1221, %v1328
      %v1369 = vsub.f32 %v1226, %v1331
      %v1370 = vsub.f32 %v1231, %v1334
      %v1371 = vsub.f32 %v1236, %v1337
      %v1372 = vsub.f32 %v1241, %v1340
      %v1373 = vmul.f32 %v1341, 1.442695
      %v1374 = vpow.pop %v1373
      %v1375 = vmul.f32 %v1342, 1.442695
      %v1376 = vpow.pop %v1375
      %v1377 = vmul.f32 %v1343, 1.442695
      %v1378 = vpow.pop %v1377
      %v1379 = vmul.f32 %v1344, 1.442695
      %v1380 = vpow.pop %v1379
      %v1381 = vmul.f32 %v1345, 1.442695
      %v1382 = vpow.pop %v1381
      %v1383 = vmul.f32 %v1346, 1.442695
      %v1384 = vpow.pop %v1383
      %v1385 = vmul.f32 %v1347, 1.442695
      %v1386 = vpow.pop %v1385
      %v1387 = vmul.f32 %v1348, 1.442695
      %v1388 = vpow.pop %v1387
      %v1389 = vmul.f32 %v1349, 1.442695
      %v1390 = vpow.pop %v1389
      %v1391 = vmul.f32 %v1350, 1.442695
      %v1392 = vpow.pop %v1391
      %v1393 = vmul.f32 %v1351, 1.442695
      %v1394 = vpow.pop %v1393
      %v1395 = vmul.f32 %v1352, 1.442695
      %v1396 = vpow.pop %v1395
      %v1397 = vmul.f32 %v1353, 1.442695
      %v1398 = vpow.pop %v1397
      %v1399 = vmul.f32 %v1354, 1.442695
      %v1400 = vpow.pop %v1399
      %v1401 = vmul.f32 %v1355, 1.442695
      %v1402 = vpow.pop %v1401
      %v1403 = vmul.f32 %v1356, 1.442695
      %v1404 = vpow.pop %v1403
      %v1405 = vmul.f32 %v1357, 1.442695
      %v1406 = vpow.pop %v1405
      %v1407 = vmul.f32 %v1358, 1.442695
      %v1408 = vpow.pop %v1407
      %v1409 = vmul.f32 %v1359, 1.442695
      %v1410 = vpow.pop %v1409
      %v1411 = vmul.f32 %v1360, 1.442695
      %v1412 = vpow.pop %v1411
      %v1413 = vmul.f32 %v1361, 1.442695
      %v1414 = vpow.pop %v1413
      %v1415 = vmul.f32 %v1362, 1.442695
      %v1416 = vpow.pop %v1415
      %v1417 = vmul.f32 %v1363, 1.442695
      %v1418 = vpow.pop %v1417
      %v1419 = vmul.f32 %v1364, 1.442695
      %v1420 = vpow.pop %v1419
      %v1421 = vmul.f32 %v1365, 1.442695
      %v1422 = vpow.pop %v1421
      %v1423 = vmul.f32 %v1366, 1.442695
      %v1424 = vpow.pop %v1423
      %v1425 = vmul.f32 %v1367, 1.442695
      %v1426 = vpow.pop %v1425
      %v1427 = vmul.f32 %v1368, 1.442695
      %v1428 = vpow.pop %v1427
      %v1429 = vmul.f32 %v1369, 1.442695
      %v1430 = vpow.pop %v1429
      %v1431 = vmul.f32 %v1370, 1.442695
      %v1432 = vpow.pop %v1431
      %v1433 = vmul.f32 %v1371, 1.442695
      %v1434 = vpow.pop %v1433
      %v1435 = vmul.f32 %v1372, 1.442695
      %v1436 = vpow.pop %v1435
      %v1437 = vsel %vm1244, %v1374, 0.0
      %1438 = vadd.xlane.f32.xlu0 %v1437
      %v1439 = vpop.xlane.xlu0 %1438
      %v1440 = vsel %vm1244, %v1376, 0.0
      %1441 = vadd.xlane.f32.xlu0 %v1440
      %v1442 = vpop.xlane.xlu0 %1441
      %v1443 = vsel %vm1244, %v1378, 0.0
      %1444 = vadd.xlane.f32.xlu0 %v1443
      %v1445 = vpop.xlane.xlu0 %1444
      %v1446 = vsel %vm1244, %v1380, 0.0
      %1447 = vadd.xlane.f32.xlu0 %v1446
      %v1448 = vpop.xlane.xlu0 %1447
      %v1449 = vsel %vm1244, %v1382, 0.0
      %1450 = vadd.xlane.f32.xlu0 %v1449
      %v1451 = vpop.xlane.xlu0 %1450
      %v1452 = vsel %vm1244, %v1384, 0.0
      %1453 = vadd.xlane.f32.xlu0 %v1452
      %v1454 = vpop.xlane.xlu0 %1453
      %v1455 = vsel %vm1244, %v1386, 0.0
      %1456 = vadd.xlane.f32.xlu0 %v1455
      %v1457 = vpop.xlane.xlu0 %1456
      %v1458 = vsel %vm1244, %v1388, 0.0
      %1459 = vadd.xlane.f32.xlu0 %v1458
      %v1460 = vpop.xlane.xlu0 %1459
      %v1461 = vsel %vm1244, %v1390, 0.0
      %1462 = vadd.xlane.f32.xlu0 %v1461
      %v1463 = vpop.xlane.xlu0 %1462
      %v1464 = vsel %vm1244, %v1392, 0.0
      %1465 = vadd.xlane.f32.xlu0 %v1464
      %v1466 = vpop.xlane.xlu0 %1465
      %v1467 = vsel %vm1244, %v1394, 0.0
      %1468 = vadd.xlane.f32.xlu0 %v1467
      %v1469 = vpop.xlane.xlu0 %1468
      %v1470 = vsel %vm1244, %v1396, 0.0
      %1471 = vadd.xlane.f32.xlu0 %v1470
      %v1472 = vpop.xlane.xlu0 %1471
      %v1473 = vsel %vm1244, %v1398, 0.0
      %1474 = vadd.xlane.f32.xlu0 %v1473
      %v1475 = vpop.xlane.xlu0 %1474
      %v1476 = vsel %vm1244, %v1400, 0.0
      %1477 = vadd.xlane.f32.xlu0 %v1476
      %v1478 = vpop.xlane.xlu0 %1477
      %v1479 = vsel %vm1244, %v1402, 0.0
      %1480 = vadd.xlane.f32.xlu0 %v1479
      %v1481 = vpop.xlane.xlu0 %1480
      %v1482 = vsel %vm1244, %v1404, 0.0
      %1483 = vadd.xlane.f32.xlu0 %v1482
      %v1484 = vpop.xlane.xlu0 %1483
      %v1485 = vsel %vm1244, %v1406, 0.0
      %1486 = vadd.xlane.f32.xlu0 %v1485
      %v1487 = vpop.xlane.xlu0 %1486
      %v1488 = vsel %vm1244, %v1408, 0.0
      %1489 = vadd.xlane.f32.xlu0 %v1488
      %v1490 = vpop.xlane.xlu0 %1489
      %v1491 = vsel %vm1244, %v1410, 0.0
      %1492 = vadd.xlane.f32.xlu0 %v1491
      %v1493 = vpop.xlane.xlu0 %1492
      %v1494 = vsel %vm1244, %v1412, 0.0
      %1495 = vadd.xlane.f32.xlu0 %v1494
      %v1496 = vpop.xlane.xlu0 %1495
      %v1497 = vsel %vm1244, %v1414, 0.0
      %1498 = vadd.xlane.f32.xlu0 %v1497
      %v1499 = vpop.xlane.xlu0 %1498
      %v1500 = vsel %vm1244, %v1416, 0.0
      %1501 = vadd.xlane.f32.xlu0 %v1500
      %v1502 = vpop.xlane.xlu0 %1501
      %v1503 = vsel %vm1244, %v1418, 0.0
      %1504 = vadd.xlane.f32.xlu0 %v1503
      %v1505 = vpop.xlane.xlu0 %1504
      %v1506 = vsel %vm1244, %v1420, 0.0
      %1507 = vadd.xlane.f32.xlu0 %v1506
      %v1508 = vpop.xlane.xlu0 %1507
      %v1509 = vsel %vm1244, %v1422, 0.0
      %1510 = vadd.xlane.f32.xlu0 %v1509
      %v1511 = vpop.xlane.xlu0 %1510
      %v1512 = vsel %vm1244, %v1424, 0.0
      %1513 = vadd.xlane.f32.xlu0 %v1512
      %v1514 = vpop.xlane.xlu0 %1513
      %v1515 = vsel %vm1244, %v1426, 0.0
      %1516 = vadd.xlane.f32.xlu0 %v1515
      %v1517 = vpop.xlane.xlu0 %1516
      %v1518 = vsel %vm1244, %v1428, 0.0
      %1519 = vadd.xlane.f32.xlu0 %v1518
      %v1520 = vpop.xlane.xlu0 %1519
      %v1521 = vsel %vm1244, %v1430, 0.0
      %1522 = vadd.xlane.f32.xlu0 %v1521
      %v1523 = vpop.xlane.xlu0 %1522
      %v1524 = vsel %vm1244, %v1432, 0.0
      %1525 = vadd.xlane.f32.xlu0 %v1524
      %v1526 = vpop.xlane.xlu0 %1525
      %v1527 = vsel %vm1244, %v1434, 0.0
      %1528 = vadd.xlane.f32.xlu0 %v1527
      %v1529 = vpop.xlane.xlu0 %1528
      %v1530 = vsel %vm1244, %v1436, 0.0
      %1531 = vadd.xlane.f32.xlu0 %v1530
      %v1532 = vpop.xlane.xlu0 %1531
      %v1533 = vrcp.pop %v1439
      %v1534 = vrcp.pop %v1442
      %v1535 = vrcp.pop %v1445
      %v1536 = vrcp.pop %v1448
      %v1537 = vrcp.pop %v1451
      %v1538 = vrcp.pop %v1454
      %v1539 = vrcp.pop %v1457
      %v1540 = vrcp.pop %v1460
      %v1541 = vrcp.pop %v1463
      %v1542 = vrcp.pop %v1466
      %v1543 = vrcp.pop %v1469
      %v1544 = vrcp.pop %v1472
      %v1545 = vrcp.pop %v1475
      %v1546 = vrcp.pop %v1478
      %v1547 = vrcp.pop %v1481
      %v1548 = vrcp.pop %v1484
      %v1549 = vrcp.pop %v1487
      %v1550 = vrcp.pop %v1490
      %v1551 = vrcp.pop %v1493
      %v1552 = vrcp.pop %v1496
      %v1553 = vrcp.pop %v1499
      %v1554 = vrcp.pop %v1502
      %v1555 = vrcp.pop %v1505
      %v1556 = vrcp.pop %v1508
      %v1557 = vrcp.pop %v1511
      %v1558 = vrcp.pop %v1514
      %v1559 = vrcp.pop %v1517
      %v1560 = vrcp.pop %v1520
      %v1561 = vrcp.pop %v1523
      %v1562 = vrcp.pop %v1526
      %v1563 = vrcp.pop %v1529
      %v1564 = vrcp.pop %v1532
      %v1565 = vmul.f32 %v1374, %v1533
      %v1566 = vmul.f32 %v1376, %v1534
      %v1567 = vmul.f32 %v1378, %v1535
      %v1568 = vmul.f32 %v1380, %v1536
      %v1569 = vmul.f32 %v1382, %v1537
      %v1570 = vmul.f32 %v1384, %v1538
      %v1571 = vmul.f32 %v1386, %v1539
      %v1572 = vmul.f32 %v1388, %v1540
      %v1573 = vmul.f32 %v1390, %v1541
      %v1574 = vmul.f32 %v1392, %v1542
      %v1575 = vmul.f32 %v1394, %v1543
      %v1576 = vmul.f32 %v1396, %v1544
      %v1577 = vmul.f32 %v1398, %v1545
      %v1578 = vmul.f32 %v1400, %v1546
      %v1579 = vmul.f32 %v1402, %v1547
      %v1580 = vmul.f32 %v1404, %v1548
      %v1581 = vmul.f32 %v1406, %v1549
      %v1582 = vmul.f32 %v1408, %v1550
      %v1583 = vmul.f32 %v1410, %v1551
      %v1584 = vmul.f32 %v1412, %v1552
      %v1585 = vmul.f32 %v1414, %v1553
      %v1586 = vmul.f32 %v1416, %v1554
      %v1587 = vmul.f32 %v1418, %v1555
      %v1588 = vmul.f32 %v1420, %v1556
      %v1589 = vmul.f32 %v1422, %v1557
      %v1590 = vmul.f32 %v1424, %v1558
      %v1591 = vmul.f32 %v1426, %v1559
      %v1592 = vmul.f32 %v1428, %v1560
      %v1593 = vmul.f32 %v1430, %v1561
      %v1594 = vmul.f32 %v1432, %v1562
      %v1595 = vmul.f32 %v1434, %v1563
      %v1596 = vmul.f32 %v1436, %v1564
      %1597 = vrot.lane.b32.xlu0 %v441, 64
      %v1598 = vpop.permute.xlu0 %1597
      %1599 = vrot.lane.b32.xlu0 %v446, 64
      %v1600 = vpop.permute.xlu0 %1599
      %1601 = vrot.lane.b32.xlu0 %v451, 64
      %v1602 = vpop.permute.xlu0 %1601
      %1603 = vrot.lane.b32.xlu0 %v456, 64
      %v1604 = vpop.permute.xlu0 %1603
      %1605 = vrot.lane.b32.xlu0 %v461, 64
      %v1606 = vpop.permute.xlu0 %1605
      %1607 = vrot.lane.b32.xlu0 %v466, 64
      %v1608 = vpop.permute.xlu0 %1607
      %1609 = vrot.lane.b32.xlu0 %v471, 64
      %v1610 = vpop.permute.xlu0 %1609
      %1611 = vrot.lane.b32.xlu0 %v476, 64
      %v1612 = vpop.permute.xlu0 %1611
      %1613 = vrot.lane.b32.xlu0 %v488, 64
      %v1614 = vpop.permute.xlu0 %1613
      %1615 = vrot.lane.b32.xlu0 %v490, 64
      %v1616 = vpop.permute.xlu0 %1615
      %1617 = vrot.lane.b32.xlu0 %v492, 64
      %v1618 = vpop.permute.xlu0 %1617
      %1619 = vrot.lane.b32.xlu0 %v494, 64
      %v1620 = vpop.permute.xlu0 %1619
      %1621 = vrot.lane.b32.xlu0 %v496, 64
      %v1622 = vpop.permute.xlu0 %1621
      %1623 = vrot.lane.b32.xlu0 %v498, 64
      %v1624 = vpop.permute.xlu0 %1623
      %1625 = vrot.lane.b32.xlu0 %v500, 64
      %v1626 = vpop.permute.xlu0 %1625
      %1627 = vrot.lane.b32.xlu0 %v502, 64
      %v1628 = vpop.permute.xlu0 %1627
      %1629 = vrot.lane.b32.xlu0 %v504, 64
      %v1630 = vpop.permute.xlu0 %1629
      %1631 = vrot.lane.b32.xlu0 %v506, 64
      %v1632 = vpop.permute.xlu0 %1631
      %1633 = vrot.lane.b32.xlu0 %v508, 64
      %v1634 = vpop.permute.xlu0 %1633
      %1635 = vrot.lane.b32.xlu0 %v510, 64
      %v1636 = vpop.permute.xlu0 %1635
      %1637 = vrot.lane.b32.xlu0 %v512, 64
      %v1638 = vpop.permute.xlu0 %1637
      %1639 = vrot.lane.b32.xlu0 %v514, 64
      %v1640 = vpop.permute.xlu0 %1639
      %1641 = vrot.lane.b32.xlu0 %v516, 64
      %v1642 = vpop.permute.xlu0 %1641
      %1643 = vrot.lane.b32.xlu0 %v518, 64
      %v1644 = vpop.permute.xlu0 %1643
      %1645 = vrot.lane.b32.xlu0 %v520, 64
      %v1646 = vpop.permute.xlu0 %1645
      %1647 = vrot.lane.b32.xlu0 %v522, 64
      %v1648 = vpop.permute.xlu0 %1647
      %1649 = vrot.lane.b32.xlu0 %v524, 64
      %v1650 = vpop.permute.xlu0 %1649
      %1651 = vrot.lane.b32.xlu0 %v526, 64
      %v1652 = vpop.permute.xlu0 %1651
      %1653 = vrot.lane.b32.xlu0 %v528, 64
      %v1654 = vpop.permute.xlu0 %1653
      %1655 = vrot.lane.b32.xlu0 %v530, 64
      %v1656 = vpop.permute.xlu0 %1655
      %1657 = vrot.lane.b32.xlu0 %v532, 64
      %v1658 = vpop.permute.xlu0 %1657
      %1659 = vrot.lane.b32.xlu0 %v534, 64
      %v1660 = vpop.permute.xlu0 %1659
      %1693 = vxpose.xlu0.b32.start [1/16] %v1598, 128
      %1694 = vxpose.xlu0.b32.cont [2/16] %v1600, 128
      %1695 = vxpose.xlu0.b32.cont [3/16] %v1602, 128
      %1696 = vxpose.xlu0.b32.cont [4/16] %v1604, 128
      %1697 = vxpose.xlu0.b32.cont [5/16] %v1606, 128
      %1698 = vxpose.xlu0.b32.cont [6/16] %v1608, 128
      %1699 = vxpose.xlu0.b32.cont [7/16] %v1610, 128
      %1700 = vxpose.xlu0.b32.cont [8/16] %v1612, 128
      %1701 = vxpose.xlu0.b32.cont [9/16] 0.0, 128
      %1702 = vxpose.xlu0.b32.cont [10/16] 0.0, 128
      %1703 = vxpose.xlu0.b32.cont [11/16] 0.0, 128
      %1704 = vxpose.xlu0.b32.cont [12/16] 0.0, 128
      %1705 = vxpose.xlu0.b32.cont [13/16] 0.0, 128
      %1706 = vxpose.xlu0.b32.cont [14/16] 0.0, 128
      %1707 = vxpose.xlu0.b32.cont [15/16] 0.0, 128
      %1708 = vxpose.xlu0.b32.end [16/16] 0.0, 128
      %v1709 = vpop.trf.xlu0
      %v1710 = vpop.trf.xlu0
      %v1711 = vpop.trf.xlu0
      %v1712 = vpop.trf.xlu0
      %v1713 = vpop.trf.xlu0
      %v1714 = vpop.trf.xlu0
      %v1715 = vpop.trf.xlu0
      %v1716 = vpop.trf.xlu0
      %v1717 = vpop.trf.xlu0
      %v1718 = vpop.trf.xlu0
      %v1719 = vpop.trf.xlu0
      %v1720 = vpop.trf.xlu0
      %v1721 = vpop.trf.xlu0
      %v1722 = vpop.trf.xlu0
      %v1723 = vpop.trf.xlu0
      %v1724 = vpop.trf.xlu0
      %1725 = vxpose.xlu0.b32.start [1/16] %v1614, 128
      %1726 = vxpose.xlu0.b32.cont [2/16] %v1616, 128
      %1727 = vxpose.xlu0.b32.cont [3/16] %v1618, 128
      %1728 = vxpose.xlu0.b32.cont [4/16] %v1620, 128
      %1729 = vxpose.xlu0.b32.cont [5/16] %v1622, 128
      %1730 = vxpose.xlu0.b32.cont [6/16] %v1624, 128
      %1731 = vxpose.xlu0.b32.cont [7/16] %v1626, 128
      %1732 = vxpose.xlu0.b32.cont [8/16] %v1628, 128
      %1733 = vxpose.xlu0.b32.cont [9/16] 0.0, 128
      %1734 = vxpose.xlu0.b32.cont [10/16] 0.0, 128
      %1735 = vxpose.xlu0.b32.cont [11/16] 0.0, 128
      %1736 = vxpose.xlu0.b32.cont [12/16] 0.0, 128
      %1737 = vxpose.xlu0.b32.cont [13/16] 0.0, 128
      %1738 = vxpose.xlu0.b32.cont [14/16] 0.0, 128
      %1739 = vxpose.xlu0.b32.cont [15/16] 0.0, 128
      %1740 = vxpose.xlu0.b32.end [16/16] 0.0, 128
      %v1741 = vpop.trf.xlu0
      %v1742 = vpop.trf.xlu0
      %v1743 = vpop.trf.xlu0
      %v1744 = vpop.trf.xlu0
      %v1745 = vpop.trf.xlu0
      %v1746 = vpop.trf.xlu0
      %v1747 = vpop.trf.xlu0
      %v1748 = vpop.trf.xlu0
      %v1749 = vpop.trf.xlu0
      %v1750 = vpop.trf.xlu0
      %v1751 = vpop.trf.xlu0
      %v1752 = vpop.trf.xlu0
      %v1753 = vpop.trf.xlu0
      %v1754 = vpop.trf.xlu0
      %v1755 = vpop.trf.xlu0
      %v1756 = vpop.trf.xlu0
      %1757 = vxpose.xlu0.b32.start [1/16] %v1630, 128
      %1758 = vxpose.xlu0.b32.cont [2/16] %v1632, 128
      %1759 = vxpose.xlu0.b32.cont [3/16] %v1634, 128
      %1760 = vxpose.xlu0.b32.cont [4/16] %v1636, 128
      %1761 = vxpose.xlu0.b32.cont [5/16] %v1638, 128
      %1762 = vxpose.xlu0.b32.cont [6/16] %v1640, 128
      %1763 = vxpose.xlu0.b32.cont [7/16] %v1642, 128
      %1764 = vxpose.xlu0.b32.cont [8/16] %v1644, 128
      %1765 = vxpose.xlu0.b32.cont [9/16] 0.0, 128
      %1766 = vxpose.xlu0.b32.cont [10/16] 0.0, 128
      %1767 = vxpose.xlu0.b32.cont [11/16] 0.0, 128
      %1768 = vxpose.xlu0.b32.cont [12/16] 0.0, 128
      %1769 = vxpose.xlu0.b32.cont [13/16] 0.0, 128
      %1770 = vxpose.xlu0.b32.cont [14/16] 0.0, 128
      %1771 = vxpose.xlu0.b32.cont [15/16] 0.0, 128
      %1772 = vxpose.xlu0.b32.end [16/16] 0.0, 128
      %v1773 = vpop.trf.xlu0
      %v1774 = vpop.trf.xlu0
      %v1775 = vpop.trf.xlu0
      %v1776 = vpop.trf.xlu0
      %v1777 = vpop.trf.xlu0
      %v1778 = vpop.trf.xlu0
      %v1779 = vpop.trf.xlu0
      %v1780 = vpop.trf.xlu0
      %v1781 = vpop.trf.xlu0
      %v1782 = vpop.trf.xlu0
      %v1783 = vpop.trf.xlu0
      %v1784 = vpop.trf.xlu0
      %v1785 = vpop.trf.xlu0
      %v1786 = vpop.trf.xlu0
      %v1787 = vpop.trf.xlu0
      %v1788 = vpop.trf.xlu0
      %1789 = vxpose.xlu0.b32.start [1/16] %v1646, 128
      %1790 = vxpose.xlu0.b32.cont [2/16] %v1648, 128
      %1791 = vxpose.xlu0.b32.cont [3/16] %v1650, 128
      %1792 = vxpose.xlu0.b32.cont [4/16] %v1652, 128
      %1793 = vxpose.xlu0.b32.cont [5/16] %v1654, 128
      %1794 = vxpose.xlu0.b32.cont [6/16] %v1656, 128
      %1795 = vxpose.xlu0.b32.cont [7/16] %v1658, 128
      %1796 = vxpose.xlu0.b32.cont [8/16] %v1660, 128
      %1797 = vxpose.xlu0.b32.cont [9/16] 0.0, 128
      %1798 = vxpose.xlu0.b32.cont [10/16] 0.0, 128
      %1799 = vxpose.xlu0.b32.cont [11/16] 0.0, 128
      %1800 = vxpose.xlu0.b32.cont [12/16] 0.0, 128
      %1801 = vxpose.xlu0.b32.cont [13/16] 0.0, 128
      %1802 = vxpose.xlu0.b32.cont [14/16] 0.0, 128
      %1803 = vxpose.xlu0.b32.cont [15/16] 0.0, 128
      %1804 = vxpose.xlu0.b32.end [16/16] 0.0, 128
      %v1805 = vpop.trf.xlu0
      %v1806 = vpop.trf.xlu0
      %v1807 = vpop.trf.xlu0
      %v1808 = vpop.trf.xlu0
      %v1809 = vpop.trf.xlu0
      %v1810 = vpop.trf.xlu0
      %v1811 = vpop.trf.xlu0
      %v1812 = vpop.trf.xlu0
      %v1813 = vpop.trf.xlu0
      %v1814 = vpop.trf.xlu0
      %v1815 = vpop.trf.xlu0
      %v1816 = vpop.trf.xlu0
      %v1817 = vpop.trf.xlu0
      %v1818 = vpop.trf.xlu0
      %v1819 = vpop.trf.xlu0
      %v1820 = vpop.trf.xlu0
      %v1822 = vsel %vm1244, %v1709, 0
      %v1825 = vsel %vm1244, %v1565, 0
      %v1828 = vsel %vm1244, %v1566, 0
      %v1831 = vsel %vm1244, %v1567, 0
      %v1834 = vsel %vm1244, %v1568, 0
      %v1837 = vsel %vm1244, %v1569, 0
      %v1840 = vsel %vm1244, %v1570, 0
      %v1843 = vsel %vm1244, %v1571, 0
      %v1846 = vsel %vm1244, %v1572, 0
      %1848 = vmatprep.subr.mxu0 0.0
      %1849 = vmatpush1.xpose.msra.mxu0 0.0
      %1850 = vmatprep.subr.mxu0 0.0
      %1851 = vmatpush1.xpose.msra.mxu0 0.0
      %1852 = vmatprep.subr.mxu0 0.0
      %1853 = vmatpush1.xpose.msra.mxu0 0.0
      %1854 = vmatprep.subr.mxu0 0.0
      %1855 = vmatpush1.xpose.msra.mxu0 0.0
      %1856 = vmatprep.subr.mxu0 0.0
      %1857 = vmatpush1.xpose.msra.mxu0 0.0
      %1858 = vmatprep.subr.mxu0 0.0
      %1859 = vmatpush1.xpose.msra.mxu0 0.0
      %1860 = vmatprep.subr.mxu0 0.0
      %1861 = vmatpush1.xpose.msra.mxu0 0.0
      %1862 = vmatprep.subr.mxu0 0.0
      %1863 = vmatpush1.xpose.msra.mxu0 0.0
      %1864 = vmatprep.subr.mxu0 0.0
      %1865 = vmatpush1.xpose.msra.mxu0 %v1846
      %1866 = vmatprep.subr.mxu0 0.0
      %1867 = vmatpush1.xpose.msra.mxu0 %v1843
      %1868 = vmatprep.subr.mxu0 0.0
      %1869 = vmatpush1.xpose.msra.mxu0 %v1840
      %1870 = vmatprep.subr.mxu0 0.0
      %1871 = vmatpush1.xpose.msra.mxu0 %v1837
      %1872 = vmatprep.subr.mxu0 0.0
      %1873 = vmatpush1.xpose.msra.mxu0 %v1834
      %1874 = vmatprep.subr.mxu0 0.0
      %1875 = vmatpush1.xpose.msra.mxu0 %v1831
      %1876 = vmatprep.subr.mxu0 0.0
      %1877 = vmatpush1.xpose.msra.mxu0 %v1828
      %1878 = vmatprep.subr.mxu0 0.0
      %1879 = vmatpush1.xpose.msra.mxu0 %v1825
      %1880 = vmatprep.subr.mxu0 0.0
      %1881 = vmatpush2.xpose.msra.mxu0 0.0
      %1882 = vmatprep.subr.mxu0 0.0
      %1883 = vmatpush2.xpose.msra.mxu0 0.0
      %1884 = vmatprep.subr.mxu0 0.0
      %1885 = vmatpush2.xpose.msra.mxu0 0.0
      %1886 = vmatprep.subr.mxu0 0.0
      %1887 = vmatpush2.xpose.msra.mxu0 0.0
      %1888 = vmatprep.subr.mxu0 0.0
      %1889 = vmatpush2.xpose.msra.mxu0 0.0
      %1890 = vmatprep.subr.mxu0 0.0
      %1891 = vmatpush2.xpose.msra.mxu0 0.0
      %1892 = vmatprep.subr.mxu0 0.0
      %1893 = vmatpush2.xpose.msra.mxu0 0.0
      %1894 = vmatprep.subr.mxu0 0.0
      %1895 = vmatpush2.xpose.msra.mxu0 0.0
      %1896 = vmatprep.subr.mxu0 0.0
      %1897 = vmatpush2.xpose.msra.mxu0 0.0
      %1898 = vmatprep.subr.mxu0 0.0
      %1899 = vmatpush2.xpose.msra.mxu0 0.0
      %1900 = vmatprep.subr.mxu0 0.0
      %1901 = vmatpush2.xpose.msra.mxu0 0.0
      %1902 = vmatprep.subr.mxu0 0.0
      %1903 = vmatpush2.xpose.msra.mxu0 0.0
      %1904 = vmatprep.subr.mxu0 0.0
      %1905 = vmatpush2.xpose.msra.mxu0 0.0
      %1906 = vmatprep.subr.mxu0 0.0
      %1907 = vmatpush2.xpose.msra.mxu0 0.0
      %1908 = vmatprep.subr.mxu0 0.0
      %1909 = vmatpush2.xpose.msra.mxu0 0.0
      %1910 = vmatprep.subr.mxu0 0.0
      %1911 = vmatpush2.xpose.msra.mxu0 0.0
      %1912 = vmatprep.mubr.f32.mxu0 0.0
      %1913 = vmatmul.mubr.f32.gmra.mxu0 %v1822
      %v1914 = vpop.f32.mrf.mxu0
      %v1915 = vadd.f32 0.0, %v1914
      %v1916 = vpop.f32.mrf.mxu0
      %1917 = vdwg.mxu0
      %v1919 = vsel %vm1244, %v1741, 0
      %v1922 = vsel %vm1244, %v1573, 0
      %v1925 = vsel %vm1244, %v1574, 0
      %v1928 = vsel %vm1244, %v1575, 0
      %v1931 = vsel %vm1244, %v1576, 0
      %v1934 = vsel %vm1244, %v1577, 0
      %v1937 = vsel %vm1244, %v1578, 0
      %v1940 = vsel %vm1244, %v1579, 0
      %v1943 = vsel %vm1244, %v1580, 0
      %1945 = vmatprep.subr.mxu0 0.0
      %1946 = vmatpush1.xpose.msra.mxu0 0.0
      %1947 = vmatprep.subr.mxu0 0.0
      %1948 = vmatpush1.xpose.msra.mxu0 0.0
      %1949 = vmatprep.subr.mxu0 0.0
      %1950 = vmatpush1.xpose.msra.mxu0 0.0
      %1951 = vmatprep.subr.mxu0 0.0
      %1952 = vmatpush1.xpose.msra.mxu0 0.0
      %1953 = vmatprep.subr.mxu0 0.0
      %1954 = vmatpush1.xpose.msra.mxu0 0.0
      %1955 = vmatprep.subr.mxu0 0.0
      %1956 = vmatpush1.xpose.msra.mxu0 0.0
      %1957 = vmatprep.subr.mxu0 0.0
      %1958 = vmatpush1.xpose.msra.mxu0 0.0
      %1959 = vmatprep.subr.mxu0 0.0
      %1960 = vmatpush1.xpose.msra.mxu0 0.0
      %1961 = vmatprep.subr.mxu0 0.0
      %1962 = vmatpush1.xpose.msra.mxu0 %v1943
      %1963 = vmatprep.subr.mxu0 0.0
      %1964 = vmatpush1.xpose.msra.mxu0 %v1940
      %1965 = vmatprep.subr.mxu0 0.0
      %1966 = vmatpush1.xpose.msra.mxu0 %v1937
      %1967 = vmatprep.subr.mxu0 0.0
      %1968 = vmatpush1.xpose.msra.mxu0 %v1934
      %1969 = vmatprep.subr.mxu0 0.0
      %1970 = vmatpush1.xpose.msra.mxu0 %v1931
      %1971 = vmatprep.subr.mxu0 0.0
      %1972 = vmatpush1.xpose.msra.mxu0 %v1928
      %1973 = vmatprep.subr.mxu0 0.0
      %1974 = vmatpush1.xpose.msra.mxu0 %v1925
      %1975 = vmatprep.subr.mxu0 0.0
      %1976 = vmatpush1.xpose.msra.mxu0 %v1922
      %1977 = vmatprep.subr.mxu0 0.0
      %1978 = vmatpush2.xpose.msra.mxu0 0.0
      %1979 = vmatprep.subr.mxu0 0.0
      %1980 = vmatpush2.xpose.msra.mxu0 0.0
      %1981 = vmatprep.subr.mxu0 0.0
      %1982 = vmatpush2.xpose.msra.mxu0 0.0
      %1983 = vmatprep.subr.mxu0 0.0
      %1984 = vmatpush2.xpose.msra.mxu0 0.0
      %1985 = vmatprep.subr.mxu0 0.0
      %1986 = vmatpush2.xpose.msra.mxu0 0.0
      %1987 = vmatprep.subr.mxu0 0.0
      %1988 = vmatpush2.xpose.msra.mxu0 0.0
      %1989 = vmatprep.subr.mxu0 0.0
      %1990 = vmatpush2.xpose.msra.mxu0 0.0
      %1991 = vmatprep.subr.mxu0 0.0
      %1992 = vmatpush2.xpose.msra.mxu0 0.0
      %1993 = vmatprep.subr.mxu0 0.0
      %1994 = vmatpush2.xpose.msra.mxu0 0.0
      %1995 = vmatprep.subr.mxu0 0.0
      %1996 = vmatpush2.xpose.msra.mxu0 0.0
      %1997 = vmatprep.subr.mxu0 0.0
      %1998 = vmatpush2.xpose.msra.mxu0 0.0
      %1999 = vmatprep.subr.mxu0 0.0
      %2000 = vmatpush2.xpose.msra.mxu0 0.0
      %2001 = vmatprep.subr.mxu0 0.0
      %2002 = vmatpush2.xpose.msra.mxu0 0.0
      %2003 = vmatprep.subr.mxu0 0.0
      %2004 = vmatpush2.xpose.msra.mxu0 0.0
      %2005 = vmatprep.subr.mxu0 0.0
      %2006 = vmatpush2.xpose.msra.mxu0 0.0
      %2007 = vmatprep.subr.mxu0 0.0
      %2008 = vmatpush2.xpose.msra.mxu0 0.0
      %2009 = vmatprep.mubr.f32.mxu0 0.0
      %2010 = vmatmul.mubr.f32.gmra.mxu0 %v1919
      %v2011 = vpop.f32.mrf.mxu0
      %v2012 = vadd.f32 0.0, %v2011
      %v2013 = vpop.f32.mrf.mxu0
      %2014 = vdwg.mxu0
      %v2016 = vsel %vm1244, %v1773, 0
      %v2019 = vsel %vm1244, %v1581, 0
      %v2022 = vsel %vm1244, %v1582, 0
      %v2025 = vsel %vm1244, %v1583, 0
      %v2028 = vsel %vm1244, %v1584, 0
      %v2031 = vsel %vm1244, %v1585, 0
      %v2034 = vsel %vm1244, %v1586, 0
      %v2037 = vsel %vm1244, %v1587, 0
      %v2040 = vsel %vm1244, %v1588, 0
      %2042 = vmatprep.subr.mxu0 0.0
      %2043 = vmatpush1.xpose.msra.mxu0 0.0
      %2044 = vmatprep.subr.mxu0 0.0
      %2045 = vmatpush1.xpose.msra.mxu0 0.0
      %2046 = vmatprep.subr.mxu0 0.0
      %2047 = vmatpush1.xpose.msra.mxu0 0.0
      %2048 = vmatprep.subr.mxu0 0.0
      %2049 = vmatpush1.xpose.msra.mxu0 0.0
      %2050 = vmatprep.subr.mxu0 0.0
      %2051 = vmatpush1.xpose.msra.mxu0 0.0
      %2052 = vmatprep.subr.mxu0 0.0
      %2053 = vmatpush1.xpose.msra.mxu0 0.0
      %2054 = vmatprep.subr.mxu0 0.0
      %2055 = vmatpush1.xpose.msra.mxu0 0.0
      %2056 = vmatprep.subr.mxu0 0.0
      %2057 = vmatpush1.xpose.msra.mxu0 0.0
      %2058 = vmatprep.subr.mxu0 0.0
      %2059 = vmatpush1.xpose.msra.mxu0 %v2040
      %2060 = vmatprep.subr.mxu0 0.0
      %2061 = vmatpush1.xpose.msra.mxu0 %v2037
      %2062 = vmatprep.subr.mxu0 0.0
      %2063 = vmatpush1.xpose.msra.mxu0 %v2034
      %2064 = vmatprep.subr.mxu0 0.0
      %2065 = vmatpush1.xpose.msra.mxu0 %v2031
      %2066 = vmatprep.subr.mxu0 0.0
      %2067 = vmatpush1.xpose.msra.mxu0 %v2028
      %2068 = vmatprep.subr.mxu0 0.0
      %2069 = vmatpush1.xpose.msra.mxu0 %v2025
      %2070 = vmatprep.subr.mxu0 0.0
      %2071 = vmatpush1.xpose.msra.mxu0 %v2022
      %2072 = vmatprep.subr.mxu0 0.0
      %2073 = vmatpush1.xpose.msra.mxu0 %v2019
      %2074 = vmatprep.subr.mxu0 0.0
      %2075 = vmatpush2.xpose.msra.mxu0 0.0
      %2076 = vmatprep.subr.mxu0 0.0
      %2077 = vmatpush2.xpose.msra.mxu0 0.0
      %2078 = vmatprep.subr.mxu0 0.0
      %2079 = vmatpush2.xpose.msra.mxu0 0.0
      %2080 = vmatprep.subr.mxu0 0.0
      %2081 = vmatpush2.xpose.msra.mxu0 0.0
      %2082 = vmatprep.subr.mxu0 0.0
      %2083 = vmatpush2.xpose.msra.mxu0 0.0
      %2084 = vmatprep.subr.mxu0 0.0
      %2085 = vmatpush2.xpose.msra.mxu0 0.0
      %2086 = vmatprep.subr.mxu0 0.0
      %2087 = vmatpush2.xpose.msra.mxu0 0.0
      %2088 = vmatprep.subr.mxu0 0.0
      %2089 = vmatpush2.xpose.msra.mxu0 0.0
      %2090 = vmatprep.subr.mxu0 0.0
      %2091 = vmatpush2.xpose.msra.mxu0 0.0
      %2092 = vmatprep.subr.mxu0 0.0
      %2093 = vmatpush2.xpose.msra.mxu0 0.0
      %2094 = vmatprep.subr.mxu0 0.0
      %2095 = vmatpush2.xpose.msra.mxu0 0.0
      %2096 = vmatprep.subr.mxu0 0.0
      %2097 = vmatpush2.xpose.msra.mxu0 0.0
      %2098 = vmatprep.subr.mxu0 0.0
      %2099 = vmatpush2.xpose.msra.mxu0 0.0
      %2100 = vmatprep.subr.mxu0 0.0
      %2101 = vmatpush2.xpose.msra.mxu0 0.0
      %2102 = vmatprep.subr.mxu0 0.0
      %2103 = vmatpush2.xpose.msra.mxu0 0.0
      %2104 = vmatprep.subr.mxu0 0.0
      %2105 = vmatpush2.xpose.msra.mxu0 0.0
      %2106 = vmatprep.mubr.f32.mxu0 0.0
      %2107 = vmatmul.mubr.f32.gmra.mxu0 %v2016
      %v2108 = vpop.f32.mrf.mxu0
      %v2109 = vadd.f32 0.0, %v2108
      %v2110 = vpop.f32.mrf.mxu0
      %2111 = vdwg.mxu0
      %v2113 = vsel %vm1244, %v1805, 0
      %v2116 = vsel %vm1244, %v1589, 0
      %v2119 = vsel %vm1244, %v1590, 0
      %v2122 = vsel %vm1244, %v1591, 0
      %v2125 = vsel %vm1244, %v1592, 0
      %v2128 = vsel %vm1244, %v1593, 0
      %v2131 = vsel %vm1244, %v1594, 0
      %v2134 = vsel %vm1244, %v1595, 0
      %v2137 = vsel %vm1244, %v1596, 0
      %2139 = vmatprep.subr.mxu0 0.0
      %2140 = vmatpush1.xpose.msra.mxu0 0.0
      %2141 = vmatprep.subr.mxu0 0.0
      %2142 = vmatpush1.xpose.msra.mxu0 0.0
      %2143 = vmatprep.subr.mxu0 0.0
      %2144 = vmatpush1.xpose.msra.mxu0 0.0
      %2145 = vmatprep.subr.mxu0 0.0
      %2146 = vmatpush1.xpose.msra.mxu0 0.0
      %2147 = vmatprep.subr.mxu0 0.0
      %2148 = vmatpush1.xpose.msra.mxu0 0.0
      %2149 = vmatprep.subr.mxu0 0.0
      %2150 = vmatpush1.xpose.msra.mxu0 0.0
      %2151 = vmatprep.subr.mxu0 0.0
      %2152 = vmatpush1.xpose.msra.mxu0 0.0
      %2153 = vmatprep.subr.mxu0 0.0
      %2154 = vmatpush1.xpose.msra.mxu0 0.0
      %2155 = vmatprep.subr.mxu0 0.0
      %2156 = vmatpush1.xpose.msra.mxu0 %v2137
      %2157 = vmatprep.subr.mxu0 0.0
      %2158 = vmatpush1.xpose.msra.mxu0 %v2134
      %2159 = vmatprep.subr.mxu0 0.0
      %2160 = vmatpush1.xpose.msra.mxu0 %v2131
      %2161 = vmatprep.subr.mxu0 0.0
      %2162 = vmatpush1.xpose.msra.mxu0 %v2128
      %2163 = vmatprep.subr.mxu0 0.0
      %2164 = vmatpush1.xpose.msra.mxu0 %v2125
      %2165 = vmatprep.subr.mxu0 0.0
      %2166 = vmatpush1.xpose.msra.mxu0 %v2122
      %2167 = vmatprep.subr.mxu0 0.0
      %2168 = vmatpush1.xpose.msra.mxu0 %v2119
      %2169 = vmatprep.subr.mxu0 0.0
      %2170 = vmatpush1.xpose.msra.mxu0 %v2116
      %2171 = vmatprep.subr.mxu0 0.0
      %2172 = vmatpush2.xpose.msra.mxu0 0.0
      %2173 = vmatprep.subr.mxu0 0.0
      %2174 = vmatpush2.xpose.msra.mxu0 0.0
      %2175 = vmatprep.subr.mxu0 0.0
      %2176 = vmatpush2.xpose.msra.mxu0 0.0
      %2177 = vmatprep.subr.mxu0 0.0
      %2178 = vmatpush2.xpose.msra.mxu0 0.0
      %2179 = vmatprep.subr.mxu0 0.0
      %2180 = vmatpush2.xpose.msra.mxu0 0.0
      %2181 = vmatprep.subr.mxu0 0.0
      %2182 = vmatpush2.xpose.msra.mxu0 0.0
      %2183 = vmatprep.subr.mxu0 0.0
      %2184 = vmatpush2.xpose.msra.mxu0 0.0
      %2185 = vmatprep.subr.mxu0 0.0
      %2186 = vmatpush2.xpose.msra.mxu0 0.0
      %2187 = vmatprep.subr.mxu0 0.0
      %2188 = vmatpush2.xpose.msra.mxu0 0.0
      %2189 = vmatprep.subr.mxu0 0.0
      %2190 = vmatpush2.xpose.msra.mxu0 0.0
      %2191 = vmatprep.subr.mxu0 0.0
      %2192 = vmatpush2.xpose.msra.mxu0 0.0
      %2193 = vmatprep.subr.mxu0 0.0
      %2194 = vmatpush2.xpose.msra.mxu0 0.0
      %2195 = vmatprep.subr.mxu0 0.0
      %2196 = vmatpush2.xpose.msra.mxu0 0.0
      %2197 = vmatprep.subr.mxu0 0.0
      %2198 = vmatpush2.xpose.msra.mxu0 0.0
      %2199 = vmatprep.subr.mxu0 0.0
      %2200 = vmatpush2.xpose.msra.mxu0 0.0
      %2201 = vmatprep.subr.mxu0 0.0
      %2202 = vmatpush2.xpose.msra.mxu0 0.0
      %2203 = vmatprep.mubr.f32.mxu0 0.0
      %2204 = vmatmul.mubr.f32.gmra.mxu0 %v2113
      %v2205 = vpop.f32.mrf.mxu0
      %v2206 = vadd.f32 0.0, %v2205
      %v2207 = vpop.f32.mrf.mxu0
      %2208 = vdwg.mxu0
      %2209 = vxpose.xlu0.b32.start [1/16] %v1915, 128
      %2210 = vxpose.xlu0.b32.cont [2/16] 0.0, 128
      %2211 = vxpose.xlu0.b32.cont [3/16] 0.0, 128
      %2212 = vxpose.xlu0.b32.cont [4/16] 0.0, 128
      %2213 = vxpose.xlu0.b32.cont [5/16] 0.0, 128
      %2214 = vxpose.xlu0.b32.cont [6/16] 0.0, 128
      %2215 = vxpose.xlu0.b32.cont [7/16] 0.0, 128
      %2216 = vxpose.xlu0.b32.cont [8/16] 0.0, 128
      %2217 = vxpose.xlu0.b32.cont [9/16] 0.0, 128
      %2218 = vxpose.xlu0.b32.cont [10/16] 0.0, 128
      %2219 = vxpose.xlu0.b32.cont [11/16] 0.0, 128
      %2220 = vxpose.xlu0.b32.cont [12/16] 0.0, 128
      %2221 = vxpose.xlu0.b32.cont [13/16] 0.0, 128
      %2222 = vxpose.xlu0.b32.cont [14/16] 0.0, 128
      %2223 = vxpose.xlu0.b32.cont [15/16] 0.0, 128
      %2224 = vxpose.xlu0.b32.end [16/16] 0.0, 128
      %v2225 = vpop.trf.xlu0
      %v2226 = vpop.trf.xlu0
      %v2227 = vpop.trf.xlu0
      %v2228 = vpop.trf.xlu0
      %v2229 = vpop.trf.xlu0
      %v2230 = vpop.trf.xlu0
      %v2231 = vpop.trf.xlu0
      %v2232 = vpop.trf.xlu0
      %v2233 = vpop.trf.xlu0
      %v2234 = vpop.trf.xlu0
      %v2235 = vpop.trf.xlu0
      %v2236 = vpop.trf.xlu0
      %v2237 = vpop.trf.xlu0
      %v2238 = vpop.trf.xlu0
      %v2239 = vpop.trf.xlu0
      %v2240 = vpop.trf.xlu0
      %2241 = vxpose.xlu0.b32.start [1/16] %v2012, 128
      %2242 = vxpose.xlu0.b32.cont [2/16] 0.0, 128
      %2243 = vxpose.xlu0.b32.cont [3/16] 0.0, 128
      %2244 = vxpose.xlu0.b32.cont [4/16] 0.0, 128
      %2245 = vxpose.xlu0.b32.cont [5/16] 0.0, 128
      %2246 = vxpose.xlu0.b32.cont [6/16] 0.0, 128
      %2247 = vxpose.xlu0.b32.cont [7/16] 0.0, 128
      %2248 = vxpose.xlu0.b32.cont [8/16] 0.0, 128
      %2249 = vxpose.xlu0.b32.cont [9/16] 0.0, 128
      %2250 = vxpose.xlu0.b32.cont [10/16] 0.0, 128
      %2251 = vxpose.xlu0.b32.cont [11/16] 0.0, 128
      %2252 = vxpose.xlu0.b32.cont [12/16] 0.0, 128
      %2253 = vxpose.xlu0.b32.cont [13/16] 0.0, 128
      %2254 = vxpose.xlu0.b32.cont [14/16] 0.0, 128
      %2255 = vxpose.xlu0.b32.cont [15/16] 0.0, 128
      %2256 = vxpose.xlu0.b32.end [16/16] 0.0, 128
      %v2257 = vpop.trf.xlu0
      %v2258 = vpop.trf.xlu0
      %v2259 = vpop.trf.xlu0
      %v2260 = vpop.trf.xlu0
      %v2261 = vpop.trf.xlu0
      %v2262 = vpop.trf.xlu0
      %v2263 = vpop.trf.xlu0
      %v2264 = vpop.trf.xlu0
      %v2265 = vpop.trf.xlu0
      %v2266 = vpop.trf.xlu0
      %v2267 = vpop.trf.xlu0
      %v2268 = vpop.trf.xlu0
      %v2269 = vpop.trf.xlu0
      %v2270 = vpop.trf.xlu0
      %v2271 = vpop.trf.xlu0
      %v2272 = vpop.trf.xlu0
      %2273 = vxpose.xlu0.b32.start [1/16] %v2109, 128
      %2274 = vxpose.xlu0.b32.cont [2/16] 0.0, 128
      %2275 = vxpose.xlu0.b32.cont [3/16] 0.0, 128
      %2276 = vxpose.xlu0.b32.cont [4/16] 0.0, 128
      %2277 = vxpose.xlu0.b32.cont [5/16] 0.0, 128
      %2278 = vxpose.xlu0.b32.cont [6/16] 0.0, 128
      %2279 = vxpose.xlu0.b32.cont [7/16] 0.0, 128
      %2280 = vxpose.xlu0.b32.cont [8/16] 0.0, 128
      %2281 = vxpose.xlu0.b32.cont [9/16] 0.0, 128
      %2282 = vxpose.xlu0.b32.cont [10/16] 0.0, 128
      %2283 = vxpose.xlu0.b32.cont [11/16] 0.0, 128
      %2284 = vxpose.xlu0.b32.cont [12/16] 0.0, 128
      %2285 = vxpose.xlu0.b32.cont [13/16] 0.0, 128
      %2286 = vxpose.xlu0.b32.cont [14/16] 0.0, 128
      %2287 = vxpose.xlu0.b32.cont [15/16] 0.0, 128
      %2288 = vxpose.xlu0.b32.end [16/16] 0.0, 128
      %v2289 = vpop.trf.xlu0
      %v2290 = vpop.trf.xlu0
      %v2291 = vpop.trf.xlu0
      %v2292 = vpop.trf.xlu0
      %v2293 = vpop.trf.xlu0
      %v2294 = vpop.trf.xlu0
      %v2295 = vpop.trf.xlu0
      %v2296 = vpop.trf.xlu0
      %v2297 = vpop.trf.xlu0
      %v2298 = vpop.trf.xlu0
      %v2299 = vpop.trf.xlu0
      %v2300 = vpop.trf.xlu0
      %v2301 = vpop.trf.xlu0
      %v2302 = vpop.trf.xlu0
      %v2303 = vpop.trf.xlu0
      %v2304 = vpop.trf.xlu0
      %2305 = vxpose.xlu0.b32.start [1/16] %v2206, 128
      %2306 = vxpose.xlu0.b32.cont [2/16] 0.0, 128
      %2307 = vxpose.xlu0.b32.cont [3/16] 0.0, 128
      %2308 = vxpose.xlu0.b32.cont [4/16] 0.0, 128
      %2309 = vxpose.xlu0.b32.cont [5/16] 0.0, 128
      %2310 = vxpose.xlu0.b32.cont [6/16] 0.0, 128
      %2311 = vxpose.xlu0.b32.cont [7/16] 0.0, 128
      %2312 = vxpose.xlu0.b32.cont [8/16] 0.0, 128
      %2313 = vxpose.xlu0.b32.cont [9/16] 0.0, 128
      %2314 = vxpose.xlu0.b32.cont [10/16] 0.0, 128
      %2315 = vxpose.xlu0.b32.cont [11/16] 0.0, 128
      %2316 = vxpose.xlu0.b32.cont [12/16] 0.0, 128
      %2317 = vxpose.xlu0.b32.cont [13/16] 0.0, 128
      %2318 = vxpose.xlu0.b32.cont [14/16] 0.0, 128
      %2319 = vxpose.xlu0.b32.cont [15/16] 0.0, 128
      %2320 = vxpose.xlu0.b32.end [16/16] 0.0, 128
      %v2321 = vpop.trf.xlu0
      %v2322 = vpop.trf.xlu0
      %v2323 = vpop.trf.xlu0
      %v2324 = vpop.trf.xlu0
      %v2325 = vpop.trf.xlu0
      %v2326 = vpop.trf.xlu0
      %v2327 = vpop.trf.xlu0
      %v2328 = vpop.trf.xlu0
      %v2329 = vpop.trf.xlu0
      %v2330 = vpop.trf.xlu0
      %v2331 = vpop.trf.xlu0
      %v2332 = vpop.trf.xlu0
      %v2333 = vpop.trf.xlu0
      %v2334 = vpop.trf.xlu0
      %v2335 = vpop.trf.xlu0
      %v2336 = vpop.trf.xlu0
      %v2337 = vcombine.low %v2225, %v2289
      %v2338 = vcombine.high %v2225, %v2289
      %v2340 = vunpack.c.l.s4 1983009808
      %v2341 = vunpack.c.0.s8 %v2340
      %v2342 = vlaneseq
      %v2343 = vshrl.u32 %v2342, 7
      %v2344 = vsub.s32 %v2341, %v2343
      %v2345 = vrot.slane %v2337, %v2344
      %v2347 = vunpack.c.l.s4 1983009808
      %v2348 = vunpack.c.0.s8 %v2347
      %v2349 = vlaneseq
      %v2350 = vshrl.u32 %v2349, 7
      %v2351 = vsub.s32 %v2348, %v2350
      %v2352 = vrot.slane %v2338, %v2351
      %v2353 = vcombine.low %v2257, %v2321
      %v2354 = vcombine.high %v2257, %v2321
      %v2356 = vunpack.c.l.s4 1983009808
      %v2357 = vunpack.c.0.s8 %v2356
      %v2358 = vlaneseq
      %v2359 = vshrl.u32 %v2358, 7
      %v2360 = vsub.s32 %v2357, %v2359
      %v2361 = vrot.slane %v2353, %v2360
      %v2363 = vunpack.c.l.s4 1983009808
      %v2364 = vunpack.c.0.s8 %v2363
      %v2365 = vlaneseq
      %v2366 = vshrl.u32 %v2365, 7
      %v2367 = vsub.s32 %v2364, %v2366
      %v2368 = vrot.slane %v2354, %v2367
      %v2369 = vcombine.low %v2345, %v2361
      %v2370 = vcombine.high %v2345, %v2361
      %v2372 = vunpack.c.l.s4 1934713408
      %v2373 = vunpack.c.0.s8 %v2372
      %v2374 = vlaneseq
      %v2375 = vshrl.u32 %v2374, 7
      %v2376 = vsub.s32 %v2373, %v2375
      %v2377 = vrot.slane %v2369, %v2376
      %v2379 = vunpack.c.l.s4 1934713408
      %v2380 = vunpack.c.0.s8 %v2379
      %v2381 = vlaneseq
      %v2382 = vshrl.u32 %v2381, 7
      %v2383 = vsub.s32 %v2380, %v2382
      %v2384 = vrot.slane %v2370, %v2383
      %v2385 = vcombine.low %v2352, %v2368
      %v2386 = vcombine.high %v2352, %v2368
      %v2388 = vunpack.c.l.s4 1934713408
      %v2389 = vunpack.c.0.s8 %v2388
      %v2390 = vlaneseq
      %v2391 = vshrl.u32 %v2390, 7
      %v2392 = vsub.s32 %v2389, %v2391
      %v2393 = vrot.slane %v2385, %v2392
      %v2395 = vunpack.c.l.s4 1934713408
      %v2396 = vunpack.c.0.s8 %v2395
      %v2397 = vlaneseq
      %v2398 = vshrl.u32 %v2397, 7
      %v2399 = vsub.s32 %v2396, %v2398
      %v2400 = vrot.slane %v2386, %v2399
      %v2401 = vcombine.high %v2377, 0.0
      %v2402 = vcombine.high %v2384, 0.0
      %v2403 = vcombine.high %v2393, 0.0
      %v2404 = vcombine.high %v2400, 0.0
      %v2405 = vcombine.low %v2226, %v2290
      %v2406 = vcombine.high %v2226, %v2290
      %v2408 = vunpack.c.l.s4 1983009808
      %v2409 = vunpack.c.0.s8 %v2408
      %v2410 = vlaneseq
      %v2411 = vshrl.u32 %v2410, 7
      %v2412 = vsub.s32 %v2409, %v2411
      %v2413 = vrot.slane %v2405, %v2412
      %v2415 = vunpack.c.l.s4 1983009808
      %v2416 = vunpack.c.0.s8 %v2415
      %v2417 = vlaneseq
      %v2418 = vshrl.u32 %v2417, 7
      %v2419 = vsub.s32 %v2416, %v2418
      %v2420 = vrot.slane %v2406, %v2419
      %v2421 = vcombine.low %v2258, %v2322
      %v2422 = vcombine.high %v2258, %v2322
      %v2424 = vunpack.c.l.s4 1983009808
      %v2425 = vunpack.c.0.s8 %v2424
      %v2426 = vlaneseq
      %v2427 = vshrl.u32 %v2426, 7
      %v2428 = vsub.s32 %v2425, %v2427
      %v2429 = vrot.slane %v2421, %v2428
      %v2431 = vunpack.c.l.s4 1983009808
      %v2432 = vunpack.c.0.s8 %v2431
      %v2433 = vlaneseq
      %v2434 = vshrl.u32 %v2433, 7
      %v2435 = vsub.s32 %v2432, %v2434
      %v2436 = vrot.slane %v2422, %v2435
      %v2437 = vcombine.low %v2413, %v2429
      %v2438 = vcombine.high %v2413, %v2429
      %v2440 = vunpack.c.l.s4 1934713408
      %v2441 = vunpack.c.0.s8 %v2440
      %v2442 = vlaneseq
      %v2443 = vshrl.u32 %v2442, 7
      %v2444 = vsub.s32 %v2441, %v2443
      %v2445 = vrot.slane %v2437, %v2444
      %v2447 = vunpack.c.l.s4 1934713408
      %v2448 = vunpack.c.0.s8 %v2447
      %v2449 = vlaneseq
      %v2450 = vshrl.u32 %v2449, 7
      %v2451 = vsub.s32 %v2448, %v2450
      %v2452 = vrot.slane %v2438, %v2451
      %v2453 = vcombine.low %v2420, %v2436
      %v2454 = vcombine.high %v2420, %v2436
      %v2456 = vunpack.c.l.s4 1934713408
      %v2457 = vunpack.c.0.s8 %v2456
      %v2458 = vlaneseq
      %v2459 = vshrl.u32 %v2458, 7
      %v2460 = vsub.s32 %v2457, %v2459
      %v2461 = vrot.slane %v2453, %v2460
      %v2463 = vunpack.c.l.s4 1934713408
      %v2464 = vunpack.c.0.s8 %v2463
      %v2465 = vlaneseq
      %v2466 = vshrl.u32 %v2465, 7
      %v2467 = vsub.s32 %v2464, %v2466
      %v2468 = vrot.slane %v2454, %v2467
      %v2469 = vcombine.high %v2445, 0.0
      %v2470 = vcombine.high %v2452, 0.0
      %v2471 = vcombine.high %v2461, 0.0
      %v2472 = vcombine.high %v2468, 0.0
      %v2473 = vcombine.low %v2227, %v2291
      %v2474 = vcombine.high %v2227, %v2291
      %v2476 = vunpack.c.l.s4 1983009808
      %v2477 = vunpack.c.0.s8 %v2476
      %v2478 = vlaneseq
      %v2479 = vshrl.u32 %v2478, 7
      %v2480 = vsub.s32 %v2477, %v2479
      %v2481 = vrot.slane %v2473, %v2480
      %v2483 = vunpack.c.l.s4 1983009808
      %v2484 = vunpack.c.0.s8 %v2483
      %v2485 = vlaneseq
      %v2486 = vshrl.u32 %v2485, 7
      %v2487 = vsub.s32 %v2484, %v2486
      %v2488 = vrot.slane %v2474, %v2487
      %v2489 = vcombine.low %v2259, %v2323
      %v2490 = vcombine.high %v2259, %v2323
      %v2492 = vunpack.c.l.s4 1983009808
      %v2493 = vunpack.c.0.s8 %v2492
      %v2494 = vlaneseq
      %v2495 = vshrl.u32 %v2494, 7
      %v2496 = vsub.s32 %v2493, %v2495
      %v2497 = vrot.slane %v2489, %v2496
      %v2499 = vunpack.c.l.s4 1983009808
      %v2500 = vunpack.c.0.s8 %v2499
      %v2501 = vlaneseq
      %v2502 = vshrl.u32 %v2501, 7
      %v2503 = vsub.s32 %v2500, %v2502
      %v2504 = vrot.slane %v2490, %v2503
      %v2505 = vcombine.low %v2481, %v2497
      %v2506 = vcombine.high %v2481, %v2497
      %v2508 = vunpack.c.l.s4 1934713408
      %v2509 = vunpack.c.0.s8 %v2508
      %v2510 = vlaneseq
      %v2511 = vshrl.u32 %v2510, 7
      %v2512 = vsub.s32 %v2509, %v2511
      %v2513 = vrot.slane %v2505, %v2512
      %v2515 = vunpack.c.l.s4 1934713408
      %v2516 = vunpack.c.0.s8 %v2515
      %v2517 = vlaneseq
      %v2518 = vshrl.u32 %v2517, 7
      %v2519 = vsub.s32 %v2516, %v2518
      %v2520 = vrot.slane %v2506, %v2519
      %v2521 = vcombine.low %v2488, %v2504
      %v2522 = vcombine.high %v2488, %v2504
      %v2524 = vunpack.c.l.s4 1934713408
      %v2525 = vunpack.c.0.s8 %v2524
      %v2526 = vlaneseq
      %v2527 = vshrl.u32 %v2526, 7
      %v2528 = vsub.s32 %v2525, %v2527
      %v2529 = vrot.slane %v2521, %v2528
      %v2531 = vunpack.c.l.s4 1934713408
      %v2532 = vunpack.c.0.s8 %v2531
      %v2533 = vlaneseq
      %v2534 = vshrl.u32 %v2533, 7
      %v2535 = vsub.s32 %v2532, %v2534
      %v2536 = vrot.slane %v2522, %v2535
      %v2537 = vcombine.high %v2513, 0.0
      %v2538 = vcombine.high %v2520, 0.0
      %v2539 = vcombine.high %v2529, 0.0
      %v2540 = vcombine.high %v2536, 0.0
      %v2541 = vcombine.low %v2228, %v2292
      %v2542 = vcombine.high %v2228, %v2292
      %v2544 = vunpack.c.l.s4 1983009808
      %v2545 = vunpack.c.0.s8 %v2544
      %v2546 = vlaneseq
      %v2547 = vshrl.u32 %v2546, 7
      %v2548 = vsub.s32 %v2545, %v2547
      %v2549 = vrot.slane %v2541, %v2548
      %v2551 = vunpack.c.l.s4 1983009808
      %v2552 = vunpack.c.0.s8 %v2551
      %v2553 = vlaneseq
      %v2554 = vshrl.u32 %v2553, 7
      %v2555 = vsub.s32 %v2552, %v2554
      %v2556 = vrot.slane %v2542, %v2555
      %v2557 = vcombine.low %v2260, %v2324
      %v2558 = vcombine.high %v2260, %v2324
      %v2560 = vunpack.c.l.s4 1983009808
      %v2561 = vunpack.c.0.s8 %v2560
      %v2562 = vlaneseq
      %v2563 = vshrl.u32 %v2562, 7
      %v2564 = vsub.s32 %v2561, %v2563
      %v2565 = vrot.slane %v2557, %v2564
      %v2567 = vunpack.c.l.s4 1983009808
      %v2568 = vunpack.c.0.s8 %v2567
      %v2569 = vlaneseq
      %v2570 = vshrl.u32 %v2569, 7
      %v2571 = vsub.s32 %v2568, %v2570
      %v2572 = vrot.slane %v2558, %v2571
      %v2573 = vcombine.low %v2549, %v2565
      %v2574 = vcombine.high %v2549, %v2565
      %v2576 = vunpack.c.l.s4 1934713408
      %v2577 = vunpack.c.0.s8 %v2576
      %v2578 = vlaneseq
      %v2579 = vshrl.u32 %v2578, 7
      %v2580 = vsub.s32 %v2577, %v2579
      %v2581 = vrot.slane %v2573, %v2580
      %v2583 = vunpack.c.l.s4 1934713408
      %v2584 = vunpack.c.0.s8 %v2583
      %v2585 = vlaneseq
      %v2586 = vshrl.u32 %v2585, 7
      %v2587 = vsub.s32 %v2584, %v2586
      %v2588 = vrot.slane %v2574, %v2587
      %v2589 = vcombine.low %v2556, %v2572
      %v2590 = vcombine.high %v2556, %v2572
      %v2592 = vunpack.c.l.s4 1934713408
      %v2593 = vunpack.c.0.s8 %v2592
      %v2594 = vlaneseq
      %v2595 = vshrl.u32 %v2594, 7
      %v2596 = vsub.s32 %v2593, %v2595
      %v2597 = vrot.slane %v2589, %v2596
      %v2599 = vunpack.c.l.s4 1934713408
      %v2600 = vunpack.c.0.s8 %v2599
      %v2601 = vlaneseq
      %v2602 = vshrl.u32 %v2601, 7
      %v2603 = vsub.s32 %v2600, %v2602
      %v2604 = vrot.slane %v2590, %v2603
      %v2605 = vcombine.high %v2581, 0.0
      %v2606 = vcombine.high %v2588, 0.0
      %v2607 = vcombine.high %v2597, 0.0
      %v2608 = vcombine.high %v2604, 0.0
      %v2609 = vcombine.low %v2229, %v2293
      %v2610 = vcombine.high %v2229, %v2293
      %v2612 = vunpack.c.l.s4 1983009808
      %v2613 = vunpack.c.0.s8 %v2612
      %v2614 = vlaneseq
      %v2615 = vshrl.u32 %v2614, 7
      %v2616 = vsub.s32 %v2613, %v2615
      %v2617 = vrot.slane %v2609, %v2616
      %v2619 = vunpack.c.l.s4 1983009808
      %v2620 = vunpack.c.0.s8 %v2619
      %v2621 = vlaneseq
      %v2622 = vshrl.u32 %v2621, 7
      %v2623 = vsub.s32 %v2620, %v2622
      %v2624 = vrot.slane %v2610, %v2623
      %v2625 = vcombine.low %v2261, %v2325
      %v2626 = vcombine.high %v2261, %v2325
      %v2628 = vunpack.c.l.s4 1983009808
      %v2629 = vunpack.c.0.s8 %v2628
      %v2630 = vlaneseq
      %v2631 = vshrl.u32 %v2630, 7
      %v2632 = vsub.s32 %v2629, %v2631
      %v2633 = vrot.slane %v2625, %v2632
      %v2635 = vunpack.c.l.s4 1983009808
      %v2636 = vunpack.c.0.s8 %v2635
      %v2637 = vlaneseq
      %v2638 = vshrl.u32 %v2637, 7
      %v2639 = vsub.s32 %v2636, %v2638
      %v2640 = vrot.slane %v2626, %v2639
      %v2641 = vcombine.low %v2617, %v2633
      %v2642 = vcombine.high %v2617, %v2633
      %v2644 = vunpack.c.l.s4 1934713408
      %v2645 = vunpack.c.0.s8 %v2644
      %v2646 = vlaneseq
      %v2647 = vshrl.u32 %v2646, 7
      %v2648 = vsub.s32 %v2645, %v2647
      %v2649 = vrot.slane %v2641, %v2648
      %v2651 = vunpack.c.l.s4 1934713408
      %v2652 = vunpack.c.0.s8 %v2651
      %v2653 = vlaneseq
      %v2654 = vshrl.u32 %v2653, 7
      %v2655 = vsub.s32 %v2652, %v2654
      %v2656 = vrot.slane %v2642, %v2655
      %v2657 = vcombine.low %v2624, %v2640
      %v2658 = vcombine.high %v2624, %v2640
      %v2660 = vunpack.c.l.s4 1934713408
      %v2661 = vunpack.c.0.s8 %v2660
      %v2662 = vlaneseq
      %v2663 = vshrl.u32 %v2662, 7
      %v2664 = vsub.s32 %v2661, %v2663
      %v2665 = vrot.slane %v2657, %v2664
      %v2667 = vunpack.c.l.s4 1934713408
      %v2668 = vunpack.c.0.s8 %v2667
      %v2669 = vlaneseq
      %v2670 = vshrl.u32 %v2669, 7
      %v2671 = vsub.s32 %v2668, %v2670
      %v2672 = vrot.slane %v2658, %v2671
      %v2673 = vcombine.high %v2649, 0.0
      %v2674 = vcombine.high %v2656, 0.0
      %v2675 = vcombine.high %v2665, 0.0
      %v2676 = vcombine.high %v2672, 0.0
      %v2677 = vcombine.low %v2230, %v2294
      %v2678 = vcombine.high %v2230, %v2294
      %v2680 = vunpack.c.l.s4 1983009808
      %v2681 = vunpack.c.0.s8 %v2680
      %v2682 = vlaneseq
      %v2683 = vshrl.u32 %v2682, 7
      %v2684 = vsub.s32 %v2681, %v2683
      %v2685 = vrot.slane %v2677, %v2684
      %v2687 = vunpack.c.l.s4 1983009808
      %v2688 = vunpack.c.0.s8 %v2687
      %v2689 = vlaneseq
      %v2690 = vshrl.u32 %v2689, 7
      %v2691 = vsub.s32 %v2688, %v2690
      %v2692 = vrot.slane %v2678, %v2691
      %v2693 = vcombine.low %v2262, %v2326
      %v2694 = vcombine.high %v2262, %v2326
      %v2696 = vunpack.c.l.s4 1983009808
      %v2697 = vunpack.c.0.s8 %v2696
      %v2698 = vlaneseq
      %v2699 = vshrl.u32 %v2698, 7
      %v2700 = vsub.s32 %v2697, %v2699
      %v2701 = vrot.slane %v2693, %v2700
      %v2703 = vunpack.c.l.s4 1983009808
      %v2704 = vunpack.c.0.s8 %v2703
      %v2705 = vlaneseq
      %v2706 = vshrl.u32 %v2705, 7
      %v2707 = vsub.s32 %v2704, %v2706
      %v2708 = vrot.slane %v2694, %v2707
      %v2709 = vcombine.low %v2685, %v2701
      %v2710 = vcombine.high %v2685, %v2701
      %v2712 = vunpack.c.l.s4 1934713408
      %v2713 = vunpack.c.0.s8 %v2712
      %v2714 = vlaneseq
      %v2715 = vshrl.u32 %v2714, 7
      %v2716 = vsub.s32 %v2713, %v2715
      %v2717 = vrot.slane %v2709, %v2716
      %v2719 = vunpack.c.l.s4 1934713408
      %v2720 = vunpack.c.0.s8 %v2719
      %v2721 = vlaneseq
      %v2722 = vshrl.u32 %v2721, 7
      %v2723 = vsub.s32 %v2720, %v2722
      %v2724 = vrot.slane %v2710, %v2723
      %v2725 = vcombine.low %v2692, %v2708
      %v2726 = vcombine.high %v2692, %v2708
      %v2728 = vunpack.c.l.s4 1934713408
      %v2729 = vunpack.c.0.s8 %v2728
      %v2730 = vlaneseq
      %v2731 = vshrl.u32 %v2730, 7
      %v2732 = vsub.s32 %v2729, %v2731
      %v2733 = vrot.slane %v2725, %v2732
      %v2735 = vunpack.c.l.s4 1934713408
      %v2736 = vunpack.c.0.s8 %v2735
      %v2737 = vlaneseq
      %v2738 = vshrl.u32 %v2737, 7
      %v2739 = vsub.s32 %v2736, %v2738
      %v2740 = vrot.slane %v2726, %v2739
      %v2741 = vcombine.high %v2717, 0.0
      %v2742 = vcombine.high %v2724, 0.0
      %v2743 = vcombine.high %v2733, 0.0
      %v2744 = vcombine.high %v2740, 0.0
      %v2745 = vcombine.low %v2231, %v2295
      %v2746 = vcombine.high %v2231, %v2295
      %v2748 = vunpack.c.l.s4 1983009808
      %v2749 = vunpack.c.0.s8 %v2748
      %v2750 = vlaneseq
      %v2751 = vshrl.u32 %v2750, 7
      %v2752 = vsub.s32 %v2749, %v2751
      %v2753 = vrot.slane %v2745, %v2752
      %v2755 = vunpack.c.l.s4 1983009808
      %v2756 = vunpack.c.0.s8 %v2755
      %v2757 = vlaneseq
      %v2758 = vshrl.u32 %v2757, 7
      %v2759 = vsub.s32 %v2756, %v2758
      %v2760 = vrot.slane %v2746, %v2759
      %v2761 = vcombine.low %v2263, %v2327
      %v2762 = vcombine.high %v2263, %v2327
      %v2764 = vunpack.c.l.s4 1983009808
      %v2765 = vunpack.c.0.s8 %v2764
      %v2766 = vlaneseq
      %v2767 = vshrl.u32 %v2766, 7
      %v2768 = vsub.s32 %v2765, %v2767
      %v2769 = vrot.slane %v2761, %v2768
      %v2771 = vunpack.c.l.s4 1983009808
      %v2772 = vunpack.c.0.s8 %v2771
      %v2773 = vlaneseq
      %v2774 = vshrl.u32 %v2773, 7
      %v2775 = vsub.s32 %v2772, %v2774
      %v2776 = vrot.slane %v2762, %v2775
      %v2777 = vcombine.low %v2753, %v2769
      %v2778 = vcombine.high %v2753, %v2769
      %v2780 = vunpack.c.l.s4 1934713408
      %v2781 = vunpack.c.0.s8 %v2780
      %v2782 = vlaneseq
      %v2783 = vshrl.u32 %v2782, 7
      %v2784 = vsub.s32 %v2781, %v2783
      %v2785 = vrot.slane %v2777, %v2784
      %v2787 = vunpack.c.l.s4 1934713408
      %v2788 = vunpack.c.0.s8 %v2787
      %v2789 = vlaneseq
      %v2790 = vshrl.u32 %v2789, 7
      %v2791 = vsub.s32 %v2788, %v2790
      %v2792 = vrot.slane %v2778, %v2791
      %v2793 = vcombine.low %v2760, %v2776
      %v2794 = vcombine.high %v2760, %v2776
      %v2796 = vunpack.c.l.s4 1934713408
      %v2797 = vunpack.c.0.s8 %v2796
      %v2798 = vlaneseq
      %v2799 = vshrl.u32 %v2798, 7
      %v2800 = vsub.s32 %v2797, %v2799
      %v2801 = vrot.slane %v2793, %v2800
      %v2803 = vunpack.c.l.s4 1934713408
      %v2804 = vunpack.c.0.s8 %v2803
      %v2805 = vlaneseq
      %v2806 = vshrl.u32 %v2805, 7
      %v2807 = vsub.s32 %v2804, %v2806
      %v2808 = vrot.slane %v2794, %v2807
      %v2809 = vcombine.high %v2785, 0.0
      %v2810 = vcombine.high %v2792, 0.0
      %v2811 = vcombine.high %v2801, 0.0
      %v2812 = vcombine.high %v2808, 0.0
      %v2813 = vcombine.low %v2232, %v2296
      %v2814 = vcombine.high %v2232, %v2296
      %v2816 = vunpack.c.l.s4 1983009808
      %v2817 = vunpack.c.0.s8 %v2816
      %v2818 = vlaneseq
      %v2819 = vshrl.u32 %v2818, 7
      %v2820 = vsub.s32 %v2817, %v2819
      %v2821 = vrot.slane %v2813, %v2820
      %v2823 = vunpack.c.l.s4 1983009808
      %v2824 = vunpack.c.0.s8 %v2823
      %v2825 = vlaneseq
      %v2826 = vshrl.u32 %v2825, 7
      %v2827 = vsub.s32 %v2824, %v2826
      %v2828 = vrot.slane %v2814, %v2827
      %v2829 = vcombine.low %v2264, %v2328
      %v2830 = vcombine.high %v2264, %v2328
      %v2832 = vunpack.c.l.s4 1983009808
      %v2833 = vunpack.c.0.s8 %v2832
      %v2834 = vlaneseq
      %v2835 = vshrl.u32 %v2834, 7
      %v2836 = vsub.s32 %v2833, %v2835
      %v2837 = vrot.slane %v2829, %v2836
      %v2839 = vunpack.c.l.s4 1983009808
      %v2840 = vunpack.c.0.s8 %v2839
      %v2841 = vlaneseq
      %v2842 = vshrl.u32 %v2841, 7
      %v2843 = vsub.s32 %v2840, %v2842
      %v2844 = vrot.slane %v2830, %v2843
      %v2845 = vcombine.low %v2821, %v2837
      %v2846 = vcombine.high %v2821, %v2837
      %v2848 = vunpack.c.l.s4 1934713408
      %v2849 = vunpack.c.0.s8 %v2848
      %v2850 = vlaneseq
      %v2851 = vshrl.u32 %v2850, 7
      %v2852 = vsub.s32 %v2849, %v2851
      %v2853 = vrot.slane %v2845, %v2852
      %v2855 = vunpack.c.l.s4 1934713408
      %v2856 = vunpack.c.0.s8 %v2855
      %v2857 = vlaneseq
      %v2858 = vshrl.u32 %v2857, 7
      %v2859 = vsub.s32 %v2856, %v2858
      %v2860 = vrot.slane %v2846, %v2859
      %v2861 = vcombine.low %v2828, %v2844
      %v2862 = vcombine.high %v2828, %v2844
      %v2864 = vunpack.c.l.s4 1934713408
      %v2865 = vunpack.c.0.s8 %v2864
      %v2866 = vlaneseq
      %v2867 = vshrl.u32 %v2866, 7
      %v2868 = vsub.s32 %v2865, %v2867
      %v2869 = vrot.slane %v2861, %v2868
      %v2871 = vunpack.c.l.s4 1934713408
      %v2872 = vunpack.c.0.s8 %v2871
      %v2873 = vlaneseq
      %v2874 = vshrl.u32 %v2873, 7
      %v2875 = vsub.s32 %v2872, %v2874
      %v2876 = vrot.slane %v2862, %v2875
      %v2877 = vcombine.high %v2853, 0.0
      %v2878 = vcombine.high %v2860, 0.0
      %v2879 = vcombine.high %v2869, 0.0
      %v2880 = vcombine.high %v2876, 0.0
      %v2881 = vcombine.low %v2377, %v2384
      %v2883 = vunpack.c.l.s4 1983009808
      %v2884 = vunpack.c.0.s8 %v2883
      %v2885 = vlaneseq
      %v2886 = vshrl.u32 %v2885, 7
      %v2887 = vsub.s32 %v2884, %v2886
      %v2888 = vrot.slane %v2881, %v2887
      %v2889 = vcombine.low %v2401, %v2402
      %v2891 = vunpack.c.l.s4 1983009808
      %v2892 = vunpack.c.0.s8 %v2891
      %v2893 = vlaneseq
      %v2894 = vshrl.u32 %v2893, 7
      %v2895 = vsub.s32 %v2892, %v2894
      %v2896 = vrot.slane %v2889, %v2895
      %v2897 = vcombine.low %v2393, %v2400
      %v2899 = vunpack.c.l.s4 1983009808
      %v2900 = vunpack.c.0.s8 %v2899
      %v2901 = vlaneseq
      %v2902 = vshrl.u32 %v2901, 7
      %v2903 = vsub.s32 %v2900, %v2902
      %v2904 = vrot.slane %v2897, %v2903
      %v2905 = vcombine.low %v2403, %v2404
      %v2907 = vunpack.c.l.s4 1983009808
      %v2908 = vunpack.c.0.s8 %v2907
      %v2909 = vlaneseq
      %v2910 = vshrl.u32 %v2909, 7
      %v2911 = vsub.s32 %v2908, %v2910
      %v2912 = vrot.slane %v2905, %v2911
      %v2913 = vcombine.low %v2888, %v2896
      %v2914 = vcombine.high %v2888, %v2896
      %v2916 = vunpack.c.l.s4 1934713408
      %v2917 = vunpack.c.0.s8 %v2916
      %v2918 = vlaneseq
      %v2919 = vshrl.u32 %v2918, 7
      %v2920 = vsub.s32 %v2917, %v2919
      %v2921 = vrot.slane %v2913, %v2920
      %v2923 = vunpack.c.l.s4 1934713408
      %v2924 = vunpack.c.0.s8 %v2923
      %v2925 = vlaneseq
      %v2926 = vshrl.u32 %v2925, 7
      %v2927 = vsub.s32 %v2924, %v2926
      %v2928 = vrot.slane %v2914, %v2927
      %v2929 = vcombine.low %v2904, %v2912
      %v2930 = vcombine.high %v2904, %v2912
      %v2932 = vunpack.c.l.s4 1934713408
      %v2933 = vunpack.c.0.s8 %v2932
      %v2934 = vlaneseq
      %v2935 = vshrl.u32 %v2934, 7
      %v2936 = vsub.s32 %v2933, %v2935
      %v2937 = vrot.slane %v2929, %v2936
      %v2939 = vunpack.c.l.s4 1934713408
      %v2940 = vunpack.c.0.s8 %v2939
      %v2941 = vlaneseq
      %v2942 = vshrl.u32 %v2941, 7
      %v2943 = vsub.s32 %v2940, %v2942
      %v2944 = vrot.slane %v2930, %v2943
      %v2945 = vcombine.low %v2921, %v2937
      %v2946 = vcombine.high %v2921, %v2937
      %v2947 = vcombine.low %v2928, %v2944
      %v2948 = vcombine.high %v2928, %v2944
      %v2949 = vcombine.low %v2445, %v2452
      %v2951 = vunpack.c.l.s4 1983009808
      %v2952 = vunpack.c.0.s8 %v2951
      %v2953 = vlaneseq
      %v2954 = vshrl.u32 %v2953, 7
      %v2955 = vsub.s32 %v2952, %v2954
      %v2956 = vrot.slane %v2949, %v2955
      %v2957 = vcombine.low %v2469, %v2470
      %v2959 = vunpack.c.l.s4 1983009808
      %v2960 = vunpack.c.0.s8 %v2959
      %v2961 = vlaneseq
      %v2962 = vshrl.u32 %v2961, 7
      %v2963 = vsub.s32 %v2960, %v2962
      %v2964 = vrot.slane %v2957, %v2963
      %v2965 = vcombine.low %v2461, %v2468
      %v2967 = vunpack.c.l.s4 1983009808
      %v2968 = vunpack.c.0.s8 %v2967
      %v2969 = vlaneseq
      %v2970 = vshrl.u32 %v2969, 7
      %v2971 = vsub.s32 %v2968, %v2970
      %v2972 = vrot.slane %v2965, %v2971
      %v2973 = vcombine.low %v2471, %v2472
      %v2975 = vunpack.c.l.s4 1983009808
      %v2976 = vunpack.c.0.s8 %v2975
      %v2977 = vlaneseq
      %v2978 = vshrl.u32 %v2977, 7
      %v2979 = vsub.s32 %v2976, %v2978
      %v2980 = vrot.slane %v2973, %v2979
      %v2981 = vcombine.low %v2956, %v2964
      %v2982 = vcombine.high %v2956, %v2964
      %v2984 = vunpack.c.l.s4 1934713408
      %v2985 = vunpack.c.0.s8 %v2984
      %v2986 = vlaneseq
      %v2987 = vshrl.u32 %v2986, 7
      %v2988 = vsub.s32 %v2985, %v2987
      %v2989 = vrot.slane %v2981, %v2988
      %v2991 = vunpack.c.l.s4 1934713408
      %v2992 = vunpack.c.0.s8 %v2991
      %v2993 = vlaneseq
      %v2994 = vshrl.u32 %v2993, 7
      %v2995 = vsub.s32 %v2992, %v2994
      %v2996 = vrot.slane %v2982, %v2995
      %v2997 = vcombine.low %v2972, %v2980
      %v2998 = vcombine.high %v2972, %v2980
      %v3000 = vunpack.c.l.s4 1934713408
      %v3001 = vunpack.c.0.s8 %v3000
      %v3002 = vlaneseq
      %v3003 = vshrl.u32 %v3002, 7
      %v3004 = vsub.s32 %v3001, %v3003
      %v3005 = vrot.slane %v2997, %v3004
      %v3007 = vunpack.c.l.s4 1934713408
      %v3008 = vunpack.c.0.s8 %v3007
      %v3009 = vlaneseq
      %v3010 = vshrl.u32 %v3009, 7
      %v3011 = vsub.s32 %v3008, %v3010
      %v3012 = vrot.slane %v2998, %v3011
      %v3013 = vcombine.low %v2989, %v3005
      %v3014 = vcombine.high %v2989, %v3005
      %v3015 = vcombine.low %v2996, %v3012
      %v3016 = vcombine.high %v2996, %v3012
      %v3017 = vcombine.low %v2513, %v2520
      %v3019 = vunpack.c.l.s4 1983009808
      %v3020 = vunpack.c.0.s8 %v3019
      %v3021 = vlaneseq
      %v3022 = vshrl.u32 %v3021, 7
      %v3023 = vsub.s32 %v3020, %v3022
      %v3024 = vrot.slane %v3017, %v3023
      %v3025 = vcombine.low %v2537, %v2538
      %v3027 = vunpack.c.l.s4 1983009808
      %v3028 = vunpack.c.0.s8 %v3027
      %v3029 = vlaneseq
      %v3030 = vshrl.u32 %v3029, 7
      %v3031 = vsub.s32 %v3028, %v3030
      %v3032 = vrot.slane %v3025, %v3031
      %v3033 = vcombine.low %v2529, %v2536
      %v3035 = vunpack.c.l.s4 1983009808
      %v3036 = vunpack.c.0.s8 %v3035
      %v3037 = vlaneseq
      %v3038 = vshrl.u32 %v3037, 7
      %v3039 = vsub.s32 %v3036, %v3038
      %v3040 = vrot.slane %v3033, %v3039
      %v3041 = vcombine.low %v2539, %v2540
      %v3043 = vunpack.c.l.s4 1983009808
      %v3044 = vunpack.c.0.s8 %v3043
      %v3045 = vlaneseq
      %v3046 = vshrl.u32 %v3045, 7
      %v3047 = vsub.s32 %v3044, %v3046
      %v3048 = vrot.slane %v3041, %v3047
      %v3049 = vcombine.low %v3024, %v3032
      %v3050 = vcombine.high %v3024, %v3032
      %v3052 = vunpack.c.l.s4 1934713408
      %v3053 = vunpack.c.0.s8 %v3052
      %v3054 = vlaneseq
      %v3055 = vshrl.u32 %v3054, 7
      %v3056 = vsub.s32 %v3053, %v3055
      %v3057 = vrot.slane %v3049, %v3056
      %v3059 = vunpack.c.l.s4 1934713408
      %v3060 = vunpack.c.0.s8 %v3059
      %v3061 = vlaneseq
      %v3062 = vshrl.u32 %v3061, 7
      %v3063 = vsub.s32 %v3060, %v3062
      %v3064 = vrot.slane %v3050, %v3063
      %v3065 = vcombine.low %v3040, %v3048
      %v3066 = vcombine.high %v3040, %v3048
      %v3068 = vunpack.c.l.s4 1934713408
      %v3069 = vunpack.c.0.s8 %v3068
      %v3070 = vlaneseq
      %v3071 = vshrl.u32 %v3070, 7
      %v3072 = vsub.s32 %v3069, %v3071
      %v3073 = vrot.slane %v3065, %v3072
      %v3075 = vunpack.c.l.s4 1934713408
      %v3076 = vunpack.c.0.s8 %v3075
      %v3077 = vlaneseq
      %v3078 = vshrl.u32 %v3077, 7
      %v3079 = vsub.s32 %v3076, %v3078
      %v3080 = vrot.slane %v3066, %v3079
      %v3081 = vcombine.low %v3057, %v3073
      %v3082 = vcombine.high %v3057, %v3073
      %v3083 = vcombine.low %v3064, %v3080
      %v3084 = vcombine.high %v3064, %v3080
      %v3085 = vcombine.low %v2581, %v2588
      %v3087 = vunpack.c.l.s4 1983009808
      %v3088 = vunpack.c.0.s8 %v3087
      %v3089 = vlaneseq
      %v3090 = vshrl.u32 %v3089, 7
      %v3091 = vsub.s32 %v3088, %v3090
      %v3092 = vrot.slane %v3085, %v3091
      %v3093 = vcombine.low %v2605, %v2606
      %v3095 = vunpack.c.l.s4 1983009808
      %v3096 = vunpack.c.0.s8 %v3095
      %v3097 = vlaneseq
      %v3098 = vshrl.u32 %v3097, 7
      %v3099 = vsub.s32 %v3096, %v3098
      %v3100 = vrot.slane %v3093, %v3099
      %v3101 = vcombine.low %v2597, %v2604
      %v3103 = vunpack.c.l.s4 1983009808
      %v3104 = vunpack.c.0.s8 %v3103
      %v3105 = vlaneseq
      %v3106 = vshrl.u32 %v3105, 7
      %v3107 = vsub.s32 %v3104, %v3106
      %v3108 = vrot.slane %v3101, %v3107
      %v3109 = vcombine.low %v2607, %v2608
      %v3111 = vunpack.c.l.s4 1983009808
      %v3112 = vunpack.c.0.s8 %v3111
      %v3113 = vlaneseq
      %v3114 = vshrl.u32 %v3113, 7
      %v3115 = vsub.s32 %v3112, %v3114
      %v3116 = vrot.slane %v3109, %v3115
      %v3117 = vcombine.low %v3092, %v3100
      %v3118 = vcombine.high %v3092, %v3100
      %v3120 = vunpack.c.l.s4 1934713408
      %v3121 = vunpack.c.0.s8 %v3120
      %v3122 = vlaneseq
      %v3123 = vshrl.u32 %v3122, 7
      %v3124 = vsub.s32 %v3121, %v3123
      %v3125 = vrot.slane %v3117, %v3124
      %v3127 = vunpack.c.l.s4 1934713408
      %v3128 = vunpack.c.0.s8 %v3127
      %v3129 = vlaneseq
      %v3130 = vshrl.u32 %v3129, 7
      %v3131 = vsub.s32 %v3128, %v3130
      %v3132 = vrot.slane %v3118, %v3131
      %v3133 = vcombine.low %v3108, %v3116
      %v3134 = vcombine.high %v3108, %v3116
      %v3136 = vunpack.c.l.s4 1934713408
      %v3137 = vunpack.c.0.s8 %v3136
      %v3138 = vlaneseq
      %v3139 = vshrl.u32 %v3138, 7
      %v3140 = vsub.s32 %v3137, %v3139
      %v3141 = vrot.slane %v3133, %v3140
      %v3143 = vunpack.c.l.s4 1934713408
      %v3144 = vunpack.c.0.s8 %v3143
      %v3145 = vlaneseq
      %v3146 = vshrl.u32 %v3145, 7
      %v3147 = vsub.s32 %v3144, %v3146
      %v3148 = vrot.slane %v3134, %v3147
      %v3149 = vcombine.low %v3125, %v3141
      %v3150 = vcombine.high %v3125, %v3141
      %v3151 = vcombine.low %v3132, %v3148
      %v3152 = vcombine.high %v3132, %v3148
      %v3153 = vcombine.low %v2649, %v2656
      %v3155 = vunpack.c.l.s4 1983009808
      %v3156 = vunpack.c.0.s8 %v3155
      %v3157 = vlaneseq
      %v3158 = vshrl.u32 %v3157, 7
      %v3159 = vsub.s32 %v3156, %v3158
      %v3160 = vrot.slane %v3153, %v3159
      %v3161 = vcombine.low %v2673, %v2674
      %v3163 = vunpack.c.l.s4 1983009808
      %v3164 = vunpack.c.0.s8 %v3163
      %v3165 = vlaneseq
      %v3166 = vshrl.u32 %v3165, 7
      %v3167 = vsub.s32 %v3164, %v3166
      %v3168 = vrot.slane %v3161, %v3167
      %v3169 = vcombine.low %v2665, %v2672
      %v3171 = vunpack.c.l.s4 1983009808
      %v3172 = vunpack.c.0.s8 %v3171
      %v3173 = vlaneseq
      %v3174 = vshrl.u32 %v3173, 7
      %v3175 = vsub.s32 %v3172, %v3174
      %v3176 = vrot.slane %v3169, %v3175
      %v3177 = vcombine.low %v2675, %v2676
      %v3179 = vunpack.c.l.s4 1983009808
      %v3180 = vunpack.c.0.s8 %v3179
      %v3181 = vlaneseq
      %v3182 = vshrl.u32 %v3181, 7
      %v3183 = vsub.s32 %v3180, %v3182
      %v3184 = vrot.slane %v3177, %v3183
      %v3185 = vcombine.low %v3160, %v3168
      %v3186 = vcombine.high %v3160, %v3168
      %v3188 = vunpack.c.l.s4 1934713408
      %v3189 = vunpack.c.0.s8 %v3188
      %v3190 = vlaneseq
      %v3191 = vshrl.u32 %v3190, 7
      %v3192 = vsub.s32 %v3189, %v3191
      %v3193 = vrot.slane %v3185, %v3192
      %v3195 = vunpack.c.l.s4 1934713408
      %v3196 = vunpack.c.0.s8 %v3195
      %v3197 = vlaneseq
      %v3198 = vshrl.u32 %v3197, 7
      %v3199 = vsub.s32 %v3196, %v3198
      %v3200 = vrot.slane %v3186, %v3199
      %v3201 = vcombine.low %v3176, %v3184
      %v3202 = vcombine.high %v3176, %v3184
      %v3204 = vunpack.c.l.s4 1934713408
      %v3205 = vunpack.c.0.s8 %v3204
      %v3206 = vlaneseq
      %v3207 = vshrl.u32 %v3206, 7
      %v3208 = vsub.s32 %v3205, %v3207
      %v3209 = vrot.slane %v3201, %v3208
      %v3211 = vunpack.c.l.s4 1934713408
      %v3212 = vunpack.c.0.s8 %v3211
      %v3213 = vlaneseq
      %v3214 = vshrl.u32 %v3213, 7
      %v3215 = vsub.s32 %v3212, %v3214
      %v3216 = vrot.slane %v3202, %v3215
      %v3217 = vcombine.low %v3193, %v3209
      %v3218 = vcombine.high %v3193, %v3209
      %v3219 = vcombine.low %v3200, %v3216
      %v3220 = vcombine.high %v3200, %v3216
      %v3221 = vcombine.low %v2717, %v2724
      %v3223 = vunpack.c.l.s4 1983009808
      %v3224 = vunpack.c.0.s8 %v3223
      %v3225 = vlaneseq
      %v3226 = vshrl.u32 %v3225, 7
      %v3227 = vsub.s32 %v3224, %v3226
      %v3228 = vrot.slane %v3221, %v3227
      %v3229 = vcombine.low %v2741, %v2742
      %v3231 = vunpack.c.l.s4 1983009808
      %v3232 = vunpack.c.0.s8 %v3231
      %v3233 = vlaneseq
      %v3234 = vshrl.u32 %v3233, 7
      %v3235 = vsub.s32 %v3232, %v3234
      %v3236 = vrot.slane %v3229, %v3235
      %v3237 = vcombine.low %v2733, %v2740
      %v3239 = vunpack.c.l.s4 1983009808
      %v3240 = vunpack.c.0.s8 %v3239
      %v3241 = vlaneseq
      %v3242 = vshrl.u32 %v3241, 7
      %v3243 = vsub.s32 %v3240, %v3242
      %v3244 = vrot.slane %v3237, %v3243
      %v3245 = vcombine.low %v2743, %v2744
      %v3247 = vunpack.c.l.s4 1983009808
      %v3248 = vunpack.c.0.s8 %v3247
      %v3249 = vlaneseq
      %v3250 = vshrl.u32 %v3249, 7
      %v3251 = vsub.s32 %v3248, %v3250
      %v3252 = vrot.slane %v3245, %v3251
      %v3253 = vcombine.low %v3228, %v3236
      %v3254 = vcombine.high %v3228, %v3236
      %v3256 = vunpack.c.l.s4 1934713408
      %v3257 = vunpack.c.0.s8 %v3256
      %v3258 = vlaneseq
      %v3259 = vshrl.u32 %v3258, 7
      %v3260 = vsub.s32 %v3257, %v3259
      %v3261 = vrot.slane %v3253, %v3260
      %v3263 = vunpack.c.l.s4 1934713408
      %v3264 = vunpack.c.0.s8 %v3263
      %v3265 = vlaneseq
      %v3266 = vshrl.u32 %v3265, 7
      %v3267 = vsub.s32 %v3264, %v3266
      %v3268 = vrot.slane %v3254, %v3267
      %v3269 = vcombine.low %v3244, %v3252
      %v3270 = vcombine.high %v3244, %v3252
      %v3272 = vunpack.c.l.s4 1934713408
      %v3273 = vunpack.c.0.s8 %v3272
      %v3274 = vlaneseq
      %v3275 = vshrl.u32 %v3274, 7
      %v3276 = vsub.s32 %v3273, %v3275
      %v3277 = vrot.slane %v3269, %v3276
      %v3279 = vunpack.c.l.s4 1934713408
      %v3280 = vunpack.c.0.s8 %v3279
      %v3281 = vlaneseq
      %v3282 = vshrl.u32 %v3281, 7
      %v3283 = vsub.s32 %v3280, %v3282
      %v3284 = vrot.slane %v3270, %v3283
      %v3285 = vcombine.low %v3261, %v3277
      %v3286 = vcombine.high %v3261, %v3277
      %v3287 = vcombine.low %v3268, %v3284
      %v3288 = vcombine.high %v3268, %v3284
      %v3289 = vcombine.low %v2785, %v2792
      %v3291 = vunpack.c.l.s4 1983009808
      %v3292 = vunpack.c.0.s8 %v3291
      %v3293 = vlaneseq
      %v3294 = vshrl.u32 %v3293, 7
      %v3295 = vsub.s32 %v3292, %v3294
      %v3296 = vrot.slane %v3289, %v3295
      %v3297 = vcombine.low %v2809, %v2810
      %v3299 = vunpack.c.l.s4 1983009808
      %v3300 = vunpack.c.0.s8 %v3299
      %v3301 = vlaneseq
      %v3302 = vshrl.u32 %v3301, 7
      %v3303 = vsub.s32 %v3300, %v3302
      %v3304 = vrot.slane %v3297, %v3303
      %v3305 = vcombine.low %v2801, %v2808
      %v3307 = vunpack.c.l.s4 1983009808
      %v3308 = vunpack.c.0.s8 %v3307
      %v3309 = vlaneseq
      %v3310 = vshrl.u32 %v3309, 7
      %v3311 = vsub.s32 %v3308, %v3310
      %v3312 = vrot.slane %v3305, %v3311
      %v3313 = vcombine.low %v2811, %v2812
      %v3315 = vunpack.c.l.s4 1983009808
      %v3316 = vunpack.c.0.s8 %v3315
      %v3317 = vlaneseq
      %v3318 = vshrl.u32 %v3317, 7
      %v3319 = vsub.s32 %v3316, %v3318
      %v3320 = vrot.slane %v3313, %v3319
      %v3321 = vcombine.low %v3296, %v3304
      %v3322 = vcombine.high %v3296, %v3304
      %v3324 = vunpack.c.l.s4 1934713408
      %v3325 = vunpack.c.0.s8 %v3324
      %v3326 = vlaneseq
      %v3327 = vshrl.u32 %v3326, 7
      %v3328 = vsub.s32 %v3325, %v3327
      %v3329 = vrot.slane %v3321, %v3328
      %v3331 = vunpack.c.l.s4 1934713408
      %v3332 = vunpack.c.0.s8 %v3331
      %v3333 = vlaneseq
      %v3334 = vshrl.u32 %v3333, 7
      %v3335 = vsub.s32 %v3332, %v3334
      %v3336 = vrot.slane %v3322, %v3335
      %v3337 = vcombine.low %v3312, %v3320
      %v3338 = vcombine.high %v3312, %v3320
      %v3340 = vunpack.c.l.s4 1934713408
      %v3341 = vunpack.c.0.s8 %v3340
      %v3342 = vlaneseq
      %v3343 = vshrl.u32 %v3342, 7
      %v3344 = vsub.s32 %v3341, %v3343
      %v3345 = vrot.slane %v3337, %v3344
      %v3347 = vunpack.c.l.s4 1934713408
      %v3348 = vunpack.c.0.s8 %v3347
      %v3349 = vlaneseq
      %v3350 = vshrl.u32 %v3349, 7
      %v3351 = vsub.s32 %v3348, %v3350
      %v3352 = vrot.slane %v3338, %v3351
      %v3353 = vcombine.low %v3329, %v3345
      %v3354 = vcombine.high %v3329, %v3345
      %v3355 = vcombine.low %v3336, %v3352
      %v3356 = vcombine.high %v3336, %v3352
      %v3357 = vcombine.low %v2853, %v2860
      %v3359 = vunpack.c.l.s4 1983009808
      %v3360 = vunpack.c.0.s8 %v3359
      %v3361 = vlaneseq
      %v3362 = vshrl.u32 %v3361, 7
      %v3363 = vsub.s32 %v3360, %v3362
      %v3364 = vrot.slane %v3357, %v3363
      %v3365 = vcombine.low %v2877, %v2878
      %v3367 = vunpack.c.l.s4 1983009808
      %v3368 = vunpack.c.0.s8 %v3367
      %v3369 = vlaneseq
      %v3370 = vshrl.u32 %v3369, 7
      %v3371 = vsub.s32 %v3368, %v3370
      %v3372 = vrot.slane %v3365, %v3371
      %v3373 = vcombine.low %v2869, %v2876
      %v3375 = vunpack.c.l.s4 1983009808
      %v3376 = vunpack.c.0.s8 %v3375
      %v3377 = vlaneseq
      %v3378 = vshrl.u32 %v3377, 7
      %v3379 = vsub.s32 %v3376, %v3378
      %v3380 = vrot.slane %v3373, %v3379
      %v3381 = vcombine.low %v2879, %v2880
      %v3383 = vunpack.c.l.s4 1983009808
      %v3384 = vunpack.c.0.s8 %v3383
      %v3385 = vlaneseq
      %v3386 = vshrl.u32 %v3385, 7
      %v3387 = vsub.s32 %v3384, %v3386
      %v3388 = vrot.slane %v3381, %v3387
      %v3389 = vcombine.low %v3364, %v3372
      %v3390 = vcombine.high %v3364, %v3372
      %v3392 = vunpack.c.l.s4 1934713408
      %v3393 = vunpack.c.0.s8 %v3392
      %v3394 = vlaneseq
      %v3395 = vshrl.u32 %v3394, 7
      %v3396 = vsub.s32 %v3393, %v3395
      %v3397 = vrot.slane %v3389, %v3396
      %v3399 = vunpack.c.l.s4 1934713408
      %v3400 = vunpack.c.0.s8 %v3399
      %v3401 = vlaneseq
      %v3402 = vshrl.u32 %v3401, 7
      %v3403 = vsub.s32 %v3400, %v3402
      %v3404 = vrot.slane %v3390, %v3403
      %v3405 = vcombine.low %v3380, %v3388
      %v3406 = vcombine.high %v3380, %v3388
      %v3408 = vunpack.c.l.s4 1934713408
      %v3409 = vunpack.c.0.s8 %v3408
      %v3410 = vlaneseq
      %v3411 = vshrl.u32 %v3410, 7
      %v3412 = vsub.s32 %v3409, %v3411
      %v3413 = vrot.slane %v3405, %v3412
      %v3415 = vunpack.c.l.s4 1934713408
      %v3416 = vunpack.c.0.s8 %v3415
      %v3417 = vlaneseq
      %v3418 = vshrl.u32 %v3417, 7
      %v3419 = vsub.s32 %v3416, %v3418
      %v3420 = vrot.slane %v3406, %v3419
      %v3421 = vcombine.low %v3397, %v3413
      %v3422 = vcombine.high %v3397, %v3413
      %v3423 = vcombine.low %v3404, %v3420
      %v3424 = vcombine.high %v3404, %v3420
      %3433 = vrot.lane.b32.xlu0 %v2946, 8
      %v3434 = vpop.permute.xlu0 %3433
      %3435 = vrot.lane.b32.xlu0 %v3014, 8
      %v3436 = vpop.permute.xlu0 %3435
      %3437 = vrot.lane.b32.xlu0 %v3082, 8
      %v3438 = vpop.permute.xlu0 %3437
      %3439 = vrot.lane.b32.xlu0 %v3150, 8
      %v3440 = vpop.permute.xlu0 %3439
      %3441 = vrot.lane.b32.xlu0 %v3218, 8
      %v3442 = vpop.permute.xlu0 %3441
      %3443 = vrot.lane.b32.xlu0 %v3286, 8
      %v3444 = vpop.permute.xlu0 %3443
      %3445 = vrot.lane.b32.xlu0 %v3354, 8
      %v3446 = vpop.permute.xlu0 %3445
      %3447 = vrot.lane.b32.xlu0 %v3422, 8
      %v3448 = vpop.permute.xlu0 %3447
      %3465 = vrot.lane.b32.xlu0 %v2947, 16
      %v3466 = vpop.permute.xlu0 %3465
      %3467 = vrot.lane.b32.xlu0 %v3015, 16
      %v3468 = vpop.permute.xlu0 %3467
      %3469 = vrot.lane.b32.xlu0 %v3083, 16
      %v3470 = vpop.permute.xlu0 %3469
      %3471 = vrot.lane.b32.xlu0 %v3151, 16
      %v3472 = vpop.permute.xlu0 %3471
      %3473 = vrot.lane.b32.xlu0 %v3219, 16
      %v3474 = vpop.permute.xlu0 %3473
      %3475 = vrot.lane.b32.xlu0 %v3287, 16
      %v3476 = vpop.permute.xlu0 %3475
      %3477 = vrot.lane.b32.xlu0 %v3355, 16
      %v3478 = vpop.permute.xlu0 %3477
      %3479 = vrot.lane.b32.xlu0 %v3423, 16
      %v3480 = vpop.permute.xlu0 %3479
      %3497 = vrot.lane.b32.xlu0 %v2948, 24
      %v3498 = vpop.permute.xlu0 %3497
      %3499 = vrot.lane.b32.xlu0 %v3016, 24
      %v3500 = vpop.permute.xlu0 %3499
      %3501 = vrot.lane.b32.xlu0 %v3084, 24
      %v3502 = vpop.permute.xlu0 %3501
      %3503 = vrot.lane.b32.xlu0 %v3152, 24
      %v3504 = vpop.permute.xlu0 %3503
      %3505 = vrot.lane.b32.xlu0 %v3220, 24
      %v3506 = vpop.permute.xlu0 %3505
      %3507 = vrot.lane.b32.xlu0 %v3288, 24
      %v3508 = vpop.permute.xlu0 %3507
      %3509 = vrot.lane.b32.xlu0 %v3356, 24
      %v3510 = vpop.permute.xlu0 %3509
      %3511 = vrot.lane.b32.xlu0 %v3424, 24
      %v3512 = vpop.permute.xlu0 %3511
      %v3521 = vsel %vm759, %v2945, %v3434
      %v3522 = vsel %vm759, %v3013, %v3436
      %v3523 = vsel %vm759, %v3081, %v3438
      %v3524 = vsel %vm759, %v3149, %v3440
      %v3525 = vsel %vm759, %v3217, %v3442
      %v3526 = vsel %vm759, %v3285, %v3444
      %v3527 = vsel %vm759, %v3353, %v3446
      %v3528 = vsel %vm759, %v3421, %v3448
      %vm3529 = vcmask 130048
      %v3530 = vsel %vm3529, %v3521, %v3466
      %v3531 = vsel %vm3529, %v3522, %v3468
      %v3532 = vsel %vm3529, %v3523, %v3470
      %v3533 = vsel %vm3529, %v3524, %v3472
      %v3534 = vsel %vm3529, %v3525, %v3474
      %v3535 = vsel %vm3529, %v3526, %v3476
      %v3536 = vsel %vm3529, %v3527, %v3478
      %v3537 = vsel %vm3529, %v3528, %v3480
      %vm3538 = vcmask 195584
      %v3539 = vsel %vm3538, %v3530, %v3498
      %v3540 = vsel %vm3538, %v3531, %v3500
      %v3541 = vsel %vm3538, %v3532, %v3502
      %v3542 = vsel %vm3538, %v3533, %v3504
      %v3543 = vsel %vm3538, %v3534, %v3506
      %v3544 = vsel %vm3538, %v3535, %v3508
      %v3545 = vsel %vm3538, %v3536, %v3510
      %v3546 = vsel %vm3538, %v3537, %v3512
      %v3547 = vld [vmem:[%s3] sm:$0xff]
      %v3548 = vld [vmem:[%s3 + $0x8] sm:$0xff]
      %v3549 = vld [vmem:[%s3 + $0x10] sm:$0xff]
      %v3550 = vld [vmem:[%s3 + $0x18] sm:$0xff]
      %v3551 = vld [vmem:[%s4] sm:$0x1]
      %v3553 = vlaneseq
      %v3554 = vshrl.u32 %v3553, 7
      %v3555 = vsub.s32 0, %v3554
      %v3556 = vrot.slane %v3551, %v3555
      %v3559 = vsel %vm233, %v3539, 0
      %v3562 = vsel %vm233, %v3540, 0
      %v3565 = vsel %vm233, %v3541, 0
      %v3568 = vsel %vm233, %v3542, 0
      %v3571 = vsel %vm233, %v3543, 0
      %v3574 = vsel %vm233, %v3544, 0
      %v3577 = vsel %vm233, %v3545, 0
      %v3580 = vsel %vm233, %v3546, 0
      %3582 = vmatprep.subr.mxu0 0.0
      %3583 = vmatpush1.msra.mxu0 0.0
      %3584 = vmatprep.subr.mxu0 0.0
      %3585 = vmatpush1.msra.mxu0 0.0
      %3586 = vmatprep.subr.mxu0 0.0
      %3587 = vmatpush1.msra.mxu0 0.0
      %3588 = vmatprep.subr.mxu0 0.0
      %3589 = vmatpush1.msra.mxu0 0.0
      %3590 = vmatprep.subr.mxu0 0.0
      %3591 = vmatpush1.msra.mxu0 0.0
      %3592 = vmatprep.subr.mxu0 0.0
      %3593 = vmatpush1.msra.mxu0 0.0
      %3594 = vmatprep.subr.mxu0 0.0
      %3595 = vmatpush1.msra.mxu0 0.0
      %3596 = vmatprep.subr.mxu0 0.0
      %3597 = vmatpush1.msra.mxu0 0.0
      %3598 = vmatprep.subr.mxu0 0.0
      %3599 = vmatpush1.msra.mxu0 0.0
      %3600 = vmatprep.subr.mxu0 0.0
      %3601 = vmatpush1.msra.mxu0 0.0
      %3602 = vmatprep.subr.mxu0 0.0
      %3603 = vmatpush1.msra.mxu0 0.0
      %3604 = vmatprep.subr.mxu0 0.0
      %3605 = vmatpush1.msra.mxu0 0.0
      %3606 = vmatprep.subr.mxu0 0.0
      %3607 = vmatpush1.msra.mxu0 %v3550
      %3608 = vmatprep.subr.mxu0 0.0
      %3609 = vmatpush1.msra.mxu0 %v3549
      %3610 = vmatprep.subr.mxu0 0.0
      %3611 = vmatpush1.msra.mxu0 %v3548
      %3612 = vmatprep.subr.mxu0 0.0
      %3613 = vmatpush1.msra.mxu0 %v3547
      %3614 = vmatprep.subr.mxu0 0.0
      %3615 = vmatpush2.msra.mxu0 0.0
      %3616 = vmatprep.subr.mxu0 0.0
      %3617 = vmatpush2.msra.mxu0 0.0
      %3618 = vmatprep.subr.mxu0 0.0
      %3619 = vmatpush2.msra.mxu0 0.0
      %3620 = vmatprep.subr.mxu0 0.0
      %3621 = vmatpush2.msra.mxu0 0.0
      %3622 = vmatprep.subr.mxu0 0.0
      %3623 = vmatpush2.msra.mxu0 0.0
      %3624 = vmatprep.subr.mxu0 0.0
      %3625 = vmatpush2.msra.mxu0 0.0
      %3626 = vmatprep.subr.mxu0 0.0
      %3627 = vmatpush2.msra.mxu0 0.0
      %3628 = vmatprep.subr.mxu0 0.0
      %3629 = vmatpush2.msra.mxu0 0.0
      %3630 = vmatprep.subr.mxu0 0.0
      %3631 = vmatpush2.msra.mxu0 0.0
      %3632 = vmatprep.subr.mxu0 0.0
      %3633 = vmatpush2.msra.mxu0 0.0
      %3634 = vmatprep.subr.mxu0 0.0
      %3635 = vmatpush2.msra.mxu0 0.0
      %3636 = vmatprep.subr.mxu0 0.0
      %3637 = vmatpush2.msra.mxu0 0.0
      %3638 = vmatprep.subr.mxu0 0.0
      %3639 = vmatpush2.msra.mxu0 0.0
      %3640 = vmatprep.subr.mxu0 0.0
      %3641 = vmatpush2.msra.mxu0 0.0
      %3642 = vmatprep.subr.mxu0 0.0
      %3643 = vmatpush2.msra.mxu0 0.0
      %3644 = vmatprep.subr.mxu0 0.0
      %3645 = vmatpush2.msra.mxu0 0.0
      %3646 = vmatprep.mubr.f32.mxu0 0.0
      %3647 = vmatmul.mubr.f32.gmra.mxu0 %v3559
      %v3648 = vpop.f32.mrf.mxu0
      %v3649 = vadd.f32 %v3556, %v3648
      %v3650 = vpop.f32.mrf.mxu0
      %3651 = vmatprep.mubr.f32.mxu0 0.0
      %3652 = vmatmul.mubr.f32.gmra.mxu0 %v3562
      %v3653 = vpop.f32.mrf.mxu0
      %v3654 = vadd.f32 %v3556, %v3653
      %v3655 = vpop.f32.mrf.mxu0
      %3656 = vmatprep.mubr.f32.mxu0 0.0
      %3657 = vmatmul.mubr.f32.gmra.mxu0 %v3565
      %v3658 = vpop.f32.mrf.mxu0
      %v3659 = vadd.f32 %v3556, %v3658
      %v3660 = vpop.f32.mrf.mxu0
      %3661 = vmatprep.mubr.f32.mxu0 0.0
      %3662 = vmatmul.mubr.f32.gmra.mxu0 %v3568
      %v3663 = vpop.f32.mrf.mxu0
      %v3664 = vadd.f32 %v3556, %v3663
      %v3665 = vpop.f32.mrf.mxu0
      %3666 = vmatprep.mubr.f32.mxu0 0.0
      %3667 = vmatmul.mubr.f32.gmra.mxu0 %v3571
      %v3668 = vpop.f32.mrf.mxu0
      %v3669 = vadd.f32 %v3556, %v3668
      %v3670 = vpop.f32.mrf.mxu0
      %3671 = vmatprep.mubr.f32.mxu0 0.0
      %3672 = vmatmul.mubr.f32.gmra.mxu0 %v3574
      %v3673 = vpop.f32.mrf.mxu0
      %v3674 = vadd.f32 %v3556, %v3673
      %v3675 = vpop.f32.mrf.mxu0
      %3676 = vmatprep.mubr.f32.mxu0 0.0
      %3677 = vmatmul.mubr.f32.gmra.mxu0 %v3577
      %v3678 = vpop.f32.mrf.mxu0
      %v3679 = vadd.f32 %v3556, %v3678
      %v3680 = vpop.f32.mrf.mxu0
      %3681 = vmatprep.mubr.f32.mxu0 0.0
      %3682 = vmatmul.mubr.f32.gmra.mxu0 %v3580
      %v3683 = vpop.f32.mrf.mxu0
      %v3684 = vadd.f32 %v3556, %v3683
      %v3685 = vpop.f32.mrf.mxu0
      %3686 = vdwg.mxu0
      %3687 = vst.msk [vmem:[%s224] sm:$0xff] %vm233, %v3649
      %3688 = vst.msk [vmem:[%s224 + $0x8] sm:$0xff] %vm233, %v3654
      %3689 = vst.msk [vmem:[%s224 + $0x10] sm:$0xff] %vm233, %v3659
      %3690 = vst.msk [vmem:[%s224 + $0x18] sm:$0xff] %vm233, %v3664
      %3691 = vst.msk [vmem:[%s224 + $0x20] sm:$0xff] %vm233, %v3669
      %3692 = vst.msk [vmem:[%s224 + $0x28] sm:$0xff] %vm233, %v3674
      %3693 = vst.msk [vmem:[%s224 + $0x30] sm:$0xff] %vm233, %v3679
      %3694 = vst.msk [vmem:[%s224 + $0x38] sm:$0xff] %vm233, %v3684
      %p3695 = scmp.lt.s32.totalorder %s16, 1
      %s3696 = scalar_select %p3695, %s16, 1
      %s3697 = smul.addr %s3696, 8
      %s3698 = smul.addr %s3697, 8
      %s3699 = scalar_lea.vmem %s5, %s3698
      // Predicated region
      $region41: #{tpu_custom_call.1} parent=39 // pred_check
        %p3700 = pneg %p144
      $region42: #{tpu_custom_call.1} parent=39 // pred_check_branch
        %3702 = sbr.rel (%p3700) target = $region44
      $region43: #{tpu_custom_call.1} parent=39 // pred_region
        _
      $region44: #{tpu_custom_call.1} parent=39 // pred_fallthru
        _
    $region40: #{tpu_custom_call.1} parent=5 // pred_fallthru
      _
    %p3703 = scmp.le.s32.totalorder 2, %s11
    // Predicated region
    $region45: #{tpu_custom_call.1} parent=5 // pred_check
      %p3704 = pneg %p3703
    $region46: #{tpu_custom_call.1} parent=5 // pred_check_branch
      %3706 = sbr.rel (%p3704) target = $region48
    $region47: #{tpu_custom_call.1} parent=5 // pred_region
      %s3707 = ssub.s32 %s11, 2
      // Predicated region
      $region49: #{tpu_custom_call.1} parent=47 // pred_check
        %p3708 = pneg %p150
      $region50: #{tpu_custom_call.1} parent=47 // pred_check_branch
        %3710 = sbr.rel (%p3708) target = $region52
      $region51: #{tpu_custom_call.1} parent=47 // pred_region
        %p3711 = scmp.lt.s32.totalorder %s17, 1
        %s3712 = scalar_select %p3711, %s17, 1
        %s3713 = smul.addr %s3712, 8
        %s3714 = smul.addr %s3713, 8
        %s3715 = scalar_lea.vmem %s5, %s3714
      $region52: #{tpu_custom_call.1} parent=47 // pred_fallthru
        _
    $region48: #{tpu_custom_call.1} parent=5 // pred_fallthru
      _
  $region6: #{tpu_custom_call.1} parent=0 // loop_footer
    %s15 = sadd.s32 1, %s11
  $region7: #{tpu_custom_call.1} parent=0 // loop_footer_branch
    %10 = sbr.rel target = $region3
  $region8: #{tpu_custom_call.1} parent=0 // loop_exit
    _

</llo_original>
